<compile_context>
chip_gen: v6e
topology: v6e:2x2x1
jax: 0.10.0
libtpu: 0.0.40
codegen_flags: <defaults>
</compile_context>

<pallas_src>
import functools

import jax
import jax.numpy as jnp
from jax.experimental import pallas as pl
from jax.experimental.pallas import tpu as pltpu

_EPS = 1e-12              # torch F.normalize default eps
_EPS_SQ = _EPS * _EPS     # x * rsqrt(max(s, eps^2)) == x / max(sqrt(s), eps)
_NEG_BIG = -9e15          # DAEGC masking constant

_LANE = 128
_SLAB_W = 4 * _LANE                                   # packed head-output slab width
_Z_OFF, _PRE_OFF, _OUT_OFF, _Q_OFF = 0, _LANE, 2 * _LANE, 3 * _LANE

_VMEM = pl.BlockSpec(memory_space=pltpu.MemorySpace.VMEM)


# ----------------------------------------------------------------------------- kernel

def _stagam_kernel(x_ref, adj_ref, m_ref,
                   w1_ref, a_self1_ref, a_neigh1_ref,
                   w2_ref, a_self2_ref, a_neigh2_ref,
                   wl_ref, bl_ref, clusters_ref, c_sq_ref,
                   a_pred_ref, slab_ref,
                   *, alpha, v, r, d, k):
    """Fused STAGAM forward: GAT x2 -> normalize -> decode -> LinTrans -> modularity."""
    adj = adj_ref[...]          # [N, N] (loaded once, shared by both GAT layers)
    mmat = m_ref[...]           # [N, N]

    def gat_layer(h_in, w_ref, a_self_ref, a_neigh_ref):
        # h = x W
        h = jnp.dot(h_in, w_ref[...], preferred_element_type=jnp.float32)      # [N, F]
        # h @ a_self as a VPU multiply + cross-lane reduce (no skinny [F,1] MXU pass).
        attn_self = jnp.sum(h * a_self_ref[...], axis=1, keepdims=True)        # [N, 1]
        # (h @ a_neigh)^T via a single [1,F]x[N,F] contraction -> [1, N] row directly
        # (no in-kernel transpose).
        attn_neigh = jax.lax.dot_general(
            a_neigh_ref[...], h, (((1,), (1,)), ((), ())),
            preferred_element_type=jnp.float32)                                # [1, N]
        attn = (attn_self + attn_neigh) * mmat                                 # [N, N]
        attn = jnp.where(attn > 0, attn, alpha * attn)                         # LeakyReLU
        e = jnp.where(adj > 0, attn, _NEG_BIG)
        e = e - jnp.max(e, axis=1, keepdims=True)
        p = jnp.exp(e)
        attention = p * pl.reciprocal(jnp.sum(p, axis=1, keepdims=True), approx=True)
        h_prime = jnp.dot(attention, h, preferred_element_type=jnp.float32)    # [N, F]
        # ELU; exp of min(., 0) avoids overflow/inf in the discarded positive branch.
        return jnp.where(h_prime > 0, h_prime,
                         jnp.exp(jnp.minimum(h_prime, 0.0)) - 1.0)

    h1 = gat_layer(x_ref[...], w1_ref, a_self1_ref, a_neigh1_ref)
    h2 = gat_layer(h1, w2_ref, a_self2_ref, a_neigh2_ref)

    # GATE tail: z = F.normalize(h2, p=2, dim=1); A_pred = sigmoid(z z^T)
    z = h2 * jax.lax.rsqrt(
        jnp.maximum(jnp.sum(h2 * h2, axis=1, keepdims=True), _EPS_SQ))
    zzt = jax.lax.dot_general(z, z, (((1,), (1,)), ((), ())),
                              preferred_element_type=jnp.float32)              # [N, N]
    a_pred_ref[...] = jax.nn.sigmoid(zzt)

    # LinTrans: pre = z Wl + b ; out = L2normalize(row-minmax-scale(pre))
    pre = jnp.dot(z, wl_ref[...], preferred_element_type=jnp.float32) + bl_ref[...]
    zmax = jnp.max(pre, axis=1, keepdims=True)
    zmin = jnp.min(pre, axis=1, keepdims=True)
    denom = zmax - zmin
    z_std = (pre - zmin) / jnp.where(denom > 0, denom, 1.0)   # guard constant rows (0/0)
    out = z_std * jax.lax.rsqrt(
        jnp.maximum(jnp.sum(z_std * z_std, axis=1, keepdims=True), _EPS_SQ))

    # modularity: dist[i,k] = ||out_i - c_k||^2 ; Student-t soft assignment.
    oc = jax.lax.dot_general(out, clusters_ref[...], (((1,), (1,)), ((), ())),
                             preferred_element_type=jnp.float32)               # [N, K]
    out_sq = jnp.sum(out * out, axis=1, keepdims=True)                         # [N, 1]
    dist = jnp.maximum(out_sq - 2.0 * oc + c_sq_ref[...], 0.0)                 # [N, K]
    exponent = (v + 1.0) / 2.0
    base = 1.0 + dist / v
    if exponent == 1.0:            # default v=1: pow is the identity, skip it entirely
        q = 1.0 / base
    else:
        # Exactly as the given PyTorch source (exponent applied twice):
        #   q = 1.0 / (1.0 + dist / v) ** ((v+1)/2) ;  q = q.pow((v+1)/2)
        q = 1.0 / base ** exponent
        q = q ** exponent
    q = q / jnp.sum(q, axis=1, keepdims=True)

    # Pack the narrow outputs into one lane-dense slab; every piece sits at a
    # 128-aligned lane offset so stores need no lane rotation.
    slab_ref[...] = jnp.zeros_like(slab_ref)
    slab_ref[:, _Z_OFF:_Z_OFF + r] = z
    slab_ref[:, _PRE_OFF:_PRE_OFF + d] = pre
    slab_ref[:, _OUT_OFF:_OUT_OFF + d] = out
    slab_ref[:, _Q_OFF:_Q_OFF + k] = q


# ----------------------------------------------------------------------------- wrapper

def _round_up(n, m):
    return ((n + m - 1) // m) * m


def stagam_forward(params, x, adj, m, xind, yind, *, alpha, v):
    """STAGAM.forward: returns (A_pred, z_embedding, q, out, pre)."""
    n = x.shape[0]
    r = params["W2"].shape[1]
    d = params["Wl"].shape[1]
    k = params["cluster_layer"].shape[0]
    assert r <= _LANE and d <= _LANE and k <= _LANE

    # Pad the node dimension to a multiple of 128 so [N,N] work fills full vregs.
    n_pad = max(_round_up(n, _LANE), _LANE)
    pad = n_pad - n
    x_p = jnp.pad(x, ((0, pad), (0, 0))) if pad else x
    adj_p = jnp.pad(adj, ((0, pad), (0, pad))) if pad else adj
    m_p = jnp.pad(m, ((0, pad), (0, pad))) if pad else m

    c = params["cluster_layer"]
    c_sq_row = jnp.sum(c * c, axis=1)[None, :]        # [1, K]; loop-invariant, wrapper-side

    kernel = functools.partial(_stagam_kernel, alpha=float(alpha), v=float(v),
                               r=r, d=d, k=k)
    a_pred_p, slab = pl.pallas_call(
        kernel,
        out_shape=(jax.ShapeDtypeStruct((n_pad, n_pad), jnp.float32),   # A_pred
                   jax.ShapeDtypeStruct((n_pad, _SLAB_W), jnp.float32)),  # packed slab
        in_specs=[_VMEM] * 13,
        out_specs=(_VMEM, _VMEM),
        compiler_params=pltpu.CompilerParams(vmem_limit_bytes=64 * 1024 * 1024),
    )(x_p, adj_p, m_p,
      params["W1"], params["a_self1_row"], params["a_neigh1_row"],
      params["W2"], params["a_self2_row"], params["a_neigh2_row"],
      params["Wl"], params["bl_row"], c, c_sq_row)

    a_pred = a_pred_p[:n, :n]
    z_emb = slab[:n, _Z_OFF:_Z_OFF + r]
    pre = slab[:n, _PRE_OFF:_PRE_OFF + d]
    out = slab[:n, _OUT_OFF:_OUT_OFF + d]
    q = slab[:n, _Q_OFF:_Q_OFF + k]

    # torch.index_select results are computed but unused in the reference forward.
    _ = jnp.take(z_emb, xind, axis=0)
    _ = jnp.take(z_emb, yind, axis=0)
    return a_pred, z_emb, q, out, pre


# ----------------------------------------------------------------------------- params

def _xavier_uniform(key, shape, gain):
    fan_in, fan_out = shape[0], shape[1]
    bound = gain * (6.0 / (fan_in + fan_out)) ** 0.5
    return jax.random.uniform(key, shape, jnp.float32, -bound, bound)


def _xavier_normal(key, shape):
    fan_in, fan_out = shape[0], shape[1]
    std = (2.0 / (fan_in + fan_out)) ** 0.5
    return jax.random.normal(key, shape, jnp.float32) * std


def init_params(key, num_features, middle_size, representation_size, clusters_number, dims):
    ks = jax.random.split(key, 10)
    gain = 1.414
    lin_bound = 1.0 / (dims[0] ** 0.5)
    return {
        "W1": _xavier_uniform(ks[0], (num_features, middle_size), gain),
        "a_self1_row": _xavier_uniform(ks[1], (middle_size, 1), gain).T,          # [1, H]
        "a_neigh1_row": _xavier_uniform(ks[3], (middle_size, 1), gain).T,         # [1, H]
        "W2": _xavier_uniform(ks[2], (middle_size, representation_size), gain),
        "a_self2_row": _xavier_uniform(ks[4], (representation_size, 1), gain).T,  # [1, R]
        "a_neigh2_row": _xavier_uniform(ks[5], (representation_size, 1), gain).T, # [1, R]
        "Wl": jax.random.uniform(ks[6], (dims[0], dims[1]), jnp.float32,
                                 -lin_bound, lin_bound),
        "bl_row": jax.random.uniform(ks[7], (1, dims[1]), jnp.float32,
                                     -lin_bound, lin_bound),
        "cluster_layer": _xavier_normal(ks[8], (clusters_number, dims[1])),
    }


# ----------------------------------------------------------------------------- main

if __name__ == "__main__":
    N = 64                      # number of graph nodes (padded to 128 internally)
    num_features = 32
    middle_size = 32
    representation_size = 16
    clusters_number = 4
    dims = (representation_size, 8)
    alpha = 0.2
    v = 1.0

    key = jax.random.PRNGKey(0)
    k_par, k_x, k_adj, k_m, k_xi, k_yi = jax.random.split(key, 6)

    params = init_params(k_par, num_features, middle_size, representation_size,
                         clusters_number, dims)

    x = jax.random.normal(k_x, (N, num_features), jnp.float32)
    # symmetric 0/1 adjacency with self loops (self loops guarantee exact padding masking)
    a = (jax.random.uniform(k_adj, (N, N)) < 0.15).astype(jnp.float32)
    adj = jnp.clip(a + a.T + jnp.eye(N, dtype=jnp.float32), 0.0, 1.0)
    m = jax.random.uniform(k_m, (N, N), jnp.float32, 0.0, 1.0)
    xind = jax.random.randint(k_xi, (10,), 0, N, jnp.int32)
    yind = jax.random.randint(k_yi, (10,), 0, N, jnp.int32)

    fwd = jax.jit(functools.partial(stagam_forward, alpha=alpha, v=v))
    a_pred, z_emb, q, out, pre = fwd(params, x, adj, m, xind, yind)
    jax.block_until_ready((a_pred, z_emb, q, out, pre))

    assert a_pred.shape == (N, N)
    assert z_emb.shape == (N, representation_size)
    assert q.shape == (N, clusters_number)
    assert out.shape == (N, dims[1]) and pre.shape == (N, dims[1])
    assert bool(jnp.isfinite(a_pred).all()) and bool(jnp.isfinite(q).all())
    assert bool(jnp.isfinite(out).all()) and bool(jnp.isfinite(pre).all())
    print("KERNEL_OK")
</pallas_src>

<mosaic_0001>
module attributes {stable_mosaic.version = 11 : i64} {
  func.func @_stagam_kernel(%arg0: memref<128x32xf32, #tpu.memory_space<vmem>>, %arg1: memref<128x128xf32, #tpu.memory_space<vmem>>, %arg2: memref<128x128xf32, #tpu.memory_space<vmem>>, %arg3: memref<32x32xf32, #tpu.memory_space<vmem>>, %arg4: memref<1x32xf32, #tpu.memory_space<vmem>>, %arg5: memref<1x32xf32, #tpu.memory_space<vmem>>, %arg6: memref<32x16xf32, #tpu.memory_space<vmem>>, %arg7: memref<1x16xf32, #tpu.memory_space<vmem>>, %arg8: memref<1x16xf32, #tpu.memory_space<vmem>>, %arg9: memref<16x8xf32, #tpu.memory_space<vmem>>, %arg10: memref<1x8xf32, #tpu.memory_space<vmem>>, %arg11: memref<4x8xf32, #tpu.memory_space<vmem>>, %arg12: memref<1x4xf32, #tpu.memory_space<vmem>>, %arg13: memref<128x128xf32, #tpu.memory_space<vmem>>, %arg14: memref<128x512xf32, #tpu.memory_space<vmem>>) attributes {dimension_semantics = [], scalar_prefetch = 0 : i64, scratch_operands = 0 : i64, tpu.core_type = #tpu.core_type<tc>} {
    %c0 = arith.constant 0 : index
    %c0_0 = arith.constant 0 : index
    %0 = vector.load %arg1[%c0, %c0_0] : memref<128x128xf32, #tpu.memory_space<vmem>>, vector<128x128xf32>
    %c0_1 = arith.constant 0 : index
    %c0_2 = arith.constant 0 : index
    %1 = vector.load %arg2[%c0_1, %c0_2] : memref<128x128xf32, #tpu.memory_space<vmem>>, vector<128x128xf32>
    %c0_3 = arith.constant 0 : index
    %c0_4 = arith.constant 0 : index
    %2 = vector.load %arg0[%c0_3, %c0_4] : memref<128x32xf32, #tpu.memory_space<vmem>>, vector<128x32xf32>
    %c0_5 = arith.constant 0 : index
    %c0_6 = arith.constant 0 : index
    %3 = vector.load %arg3[%c0_5, %c0_6] : memref<32x32xf32, #tpu.memory_space<vmem>>, vector<32x32xf32>
    %cst = arith.constant dense<0.000000e+00> : vector<128x32xf32>
    %4 = tpu.matmul %2, %3, %cst {dimension_numbers = #tpu.dot_dimension_numbers<[1], [0], [0], [1], [0, 0, 1, 1], [], []>} : vector<128x32xf32>, vector<32x32xf32>, vector<128x32xf32> -> vector<128x32xf32>
    %c0_7 = arith.constant 0 : index
    %c0_8 = arith.constant 0 : index
    %5 = vector.load %arg4[%c0_7, %c0_8] : memref<1x32xf32, #tpu.memory_space<vmem>>, vector<1x32xf32>
    %6 = vector.broadcast %5 : vector<1x32xf32> to vector<128x32xf32>
    %7 = arith.mulf %4, %6 : vector<128x32xf32>
    %cst_9 = arith.constant dense<0.000000e+00> : vector<128xf32>
    %8 = vector.multi_reduction <add>, %7, %cst_9 [1] : vector<128x32xf32> to vector<128xf32>
    %9 = vector.shape_cast %8 : vector<128xf32> to vector<128x1xf32>
    %c0_10 = arith.constant 0 : index
    %c0_11 = arith.constant 0 : index
    %10 = vector.load %arg5[%c0_10, %c0_11] : memref<1x32xf32, #tpu.memory_space<vmem>>, vector<1x32xf32>
    %cst_12 = arith.constant dense<0.000000e+00> : vector<1x128xf32>
    %11 = tpu.matmul %10, %4, %cst_12 {dimension_numbers = #tpu.dot_dimension_numbers<[1], [1], [0], [0], [0, 0, 1, 0], [], []>} : vector<1x32xf32>, vector<128x32xf32>, vector<1x128xf32> -> vector<1x128xf32>
    %12 = vector.broadcast %9 : vector<128x1xf32> to vector<128x128xf32>
    %13 = vector.broadcast %11 : vector<1x128xf32> to vector<128x128xf32>
    %14 = arith.addf %12, %13 : vector<128x128xf32>
    %15 = arith.mulf %14, %1 : vector<128x128xf32>
    %cst_13 = arith.constant 0.000000e+00 : f32
    %16 = vector.broadcast %cst_13 : f32 to vector<128x128xf32>
    %17 = arith.cmpf ogt, %15, %16 : vector<128x128xf32>
    %cst_14 = arith.constant 2.000000e-01 : f32
    %18 = vector.broadcast %cst_14 : f32 to vector<128x128xf32>
    %19 = arith.mulf %18, %15 : vector<128x128xf32>
    %20 = arith.select %17, %15, %19 : vector<128x128xi1>, vector<128x128xf32>
    %cst_15 = arith.constant 0.000000e+00 : f32
    %21 = vector.broadcast %cst_15 : f32 to vector<128x128xf32>
    %22 = arith.cmpf ogt, %0, %21 : vector<128x128xf32>
    %cst_16 = arith.constant -9.000000e+15 : f32
    %23 = vector.broadcast %cst_16 : f32 to vector<128x128xf32>
    %24 = arith.select %22, %20, %23 : vector<128x128xi1>, vector<128x128xf32>
    %cst_17 = arith.constant dense<0xFF800000> : vector<128xf32>
    %25 = vector.multi_reduction <maximumf>, %24, %cst_17 [1] : vector<128x128xf32> to vector<128xf32>
    %26 = vector.shape_cast %25 : vector<128xf32> to vector<128x1xf32>
    %27 = vector.broadcast %26 : vector<128x1xf32> to vector<128x128xf32>
    %28 = arith.subf %24, %27 : vector<128x128xf32>
    %29 = math.exp %28 : vector<128x128xf32>
    %cst_18 = arith.constant dense<0.000000e+00> : vector<128xf32>
    %30 = vector.multi_reduction <add>, %29, %cst_18 [1] : vector<128x128xf32> to vector<128xf32>
    %31 = vector.shape_cast %30 : vector<128xf32> to vector<128x1xf32>
    %32 = tpu.reciprocal %31 {approx = true} : vector<128x1xf32> -> vector<128x1xf32>
    %33 = vector.broadcast %32 : vector<128x1xf32> to vector<128x128xf32>
    %34 = arith.mulf %29, %33 : vector<128x128xf32>
    %cst_19 = arith.constant dense<0.000000e+00> : vector<128x32xf32>
    %35 = tpu.matmul %34, %4, %cst_19 {dimension_numbers = #tpu.dot_dimension_numbers<[1], [0], [0], [1], [0, 0, 1, 1], [], []>} : vector<128x128xf32>, vector<128x32xf32>, vector<128x32xf32> -> vector<128x32xf32>
    %cst_20 = arith.constant 0.000000e+00 : f32
    %36 = vector.broadcast %cst_20 : f32 to vector<128x32xf32>
    %37 = arith.cmpf ogt, %35, %36 : vector<128x32xf32>
    %cst_21 = arith.constant 0.000000e+00 : f32
    %38 = vector.broadcast %cst_21 : f32 to vector<128x32xf32>
    %39 = arith.minimumf %35, %38 : vector<128x32xf32>
    %40 = math.exp %39 : vector<128x32xf32>
    %cst_22 = arith.constant 1.000000e+00 : f32
    %41 = vector.broadcast %cst_22 : f32 to vector<128x32xf32>
    %42 = arith.subf %40, %41 : vector<128x32xf32>
    %43 = arith.select %37, %35, %42 : vector<128x32xi1>, vector<128x32xf32>
    %c0_23 = arith.constant 0 : index
    %c0_24 = arith.constant 0 : index
    %44 = vector.load %arg6[%c0_23, %c0_24] : memref<32x16xf32, #tpu.memory_space<vmem>>, vector<32x16xf32>
    %cst_25 = arith.constant dense<0.000000e+00> : vector<128x16xf32>
    %45 = tpu.matmul %43, %44, %cst_25 {dimension_numbers = #tpu.dot_dimension_numbers<[1], [0], [0], [1], [0, 0, 1, 1], [], []>} : vector<128x32xf32>, vector<32x16xf32>, vector<128x16xf32> -> vector<128x16xf32>
    %c0_26 = arith.constant 0 : index
    %c0_27 = arith.constant 0 : index
    %46 = vector.load %arg7[%c0_26, %c0_27] : memref<1x16xf32, #tpu.memory_space<vmem>>, vector<1x16xf32>
    %47 = vector.broadcast %46 : vector<1x16xf32> to vector<128x16xf32>
    %48 = arith.mulf %45, %47 : vector<128x16xf32>
    %cst_28 = arith.constant dense<0.000000e+00> : vector<128xf32>
    %49 = vector.multi_reduction <add>, %48, %cst_28 [1] : vector<128x16xf32> to vector<128xf32>
    %50 = vector.shape_cast %49 : vector<128xf32> to vector<128x1xf32>
    %c0_29 = arith.constant 0 : index
    %c0_30 = arith.constant 0 : index
    %51 = vector.load %arg8[%c0_29, %c0_30] : memref<1x16xf32, #tpu.memory_space<vmem>>, vector<1x16xf32>
    %cst_31 = arith.constant dense<0.000000e+00> : vector<1x128xf32>
    %52 = tpu.matmul %51, %45, %cst_31 {dimension_numbers = #tpu.dot_dimension_numbers<[1], [1], [0], [0], [0, 0, 1, 0], [], []>} : vector<1x16xf32>, vector<128x16xf32>, vector<1x128xf32> -> vector<1x128xf32>
    %53 = vector.broadcast %50 : vector<128x1xf32> to vector<128x128xf32>
    %54 = vector.broadcast %52 : vector<1x128xf32> to vector<128x128xf32>
    %55 = arith.addf %53, %54 : vector<128x128xf32>
    %56 = arith.mulf %55, %1 : vector<128x128xf32>
    %cst_32 = arith.constant 0.000000e+00 : f32
    %57 = vector.broadcast %cst_32 : f32 to vector<128x128xf32>
    %58 = arith.cmpf ogt, %56, %57 : vector<128x128xf32>
    %cst_33 = arith.constant 2.000000e-01 : f32
    %59 = vector.broadcast %cst_33 : f32 to vector<128x128xf32>
    %60 = arith.mulf %59, %56 : vector<128x128xf32>
    %61 = arith.select %58, %56, %60 : vector<128x128xi1>, vector<128x128xf32>
    %cst_34 = arith.constant 0.000000e+00 : f32
    %62 = vector.broadcast %cst_34 : f32 to vector<128x128xf32>
    %63 = arith.cmpf ogt, %0, %62 : vector<128x128xf32>
    %cst_35 = arith.constant -9.000000e+15 : f32
    %64 = vector.broadcast %cst_35 : f32 to vector<128x128xf32>
    %65 = arith.select %63, %61, %64 : vector<128x128xi1>, vector<128x128xf32>
    %cst_36 = arith.constant dense<0xFF800000> : vector<128xf32>
    %66 = vector.multi_reduction <maximumf>, %65, %cst_36 [1] : vector<128x128xf32> to vector<128xf32>
    %67 = vector.shape_cast %66 : vector<128xf32> to vector<128x1xf32>
    %68 = vector.broadcast %67 : vector<128x1xf32> to vector<128x128xf32>
    %69 = arith.subf %65, %68 : vector<128x128xf32>
    %70 = math.exp %69 : vector<128x128xf32>
    %cst_37 = arith.constant dense<0.000000e+00> : vector<128xf32>
    %71 = vector.multi_reduction <add>, %70, %cst_37 [1] : vector<128x128xf32> to vector<128xf32>
    %72 = vector.shape_cast %71 : vector<128xf32> to vector<128x1xf32>
    %73 = tpu.reciprocal %72 {approx = true} : vector<128x1xf32> -> vector<128x1xf32>
    %74 = vector.broadcast %73 : vector<128x1xf32> to vector<128x128xf32>
    %75 = arith.mulf %70, %74 : vector<128x128xf32>
    %cst_38 = arith.constant dense<0.000000e+00> : vector<128x16xf32>
    %76 = tpu.matmul %75, %45, %cst_38 {dimension_numbers = #tpu.dot_dimension_numbers<[1], [0], [0], [1], [0, 0, 1, 1], [], []>} : vector<128x128xf32>, vector<128x16xf32>, vector<128x16xf32> -> vector<128x16xf32>
    %cst_39 = arith.constant 0.000000e+00 : f32
    %77 = vector.broadcast %cst_39 : f32 to vector<128x16xf32>
    %78 = arith.cmpf ogt, %76, %77 : vector<128x16xf32>
    %cst_40 = arith.constant 0.000000e+00 : f32
    %79 = vector.broadcast %cst_40 : f32 to vector<128x16xf32>
    %80 = arith.minimumf %76, %79 : vector<128x16xf32>
    %81 = math.exp %80 : vector<128x16xf32>
    %cst_41 = arith.constant 1.000000e+00 : f32
    %82 = vector.broadcast %cst_41 : f32 to vector<128x16xf32>
    %83 = arith.subf %81, %82 : vector<128x16xf32>
    %84 = arith.select %78, %76, %83 : vector<128x16xi1>, vector<128x16xf32>
    %85 = arith.mulf %84, %84 : vector<128x16xf32>
    %cst_42 = arith.constant dense<0.000000e+00> : vector<128xf32>
    %86 = vector.multi_reduction <add>, %85, %cst_42 [1] : vector<128x16xf32> to vector<128xf32>
    %87 = vector.shape_cast %86 : vector<128xf32> to vector<128x1xf32>
    %cst_43 = arith.constant 1.000000e-24 : f32
    %88 = vector.broadcast %cst_43 : f32 to vector<128x1xf32>
    %89 = arith.maximumf %87, %88 : vector<128x1xf32>
    %90 = math.rsqrt %89 : vector<128x1xf32>
    %91 = vector.broadcast %90 : vector<128x1xf32> to vector<128x16xf32>
    %92 = arith.mulf %84, %91 : vector<128x16xf32>
    %cst_44 = arith.constant dense<0.000000e+00> : vector<128x128xf32>
    %93 = tpu.matmul %92, %92, %cst_44 {dimension_numbers = #tpu.dot_dimension_numbers<[1], [1], [0], [0], [0, 0, 1, 0], [], []>} : vector<128x16xf32>, vector<128x16xf32>, vector<128x128xf32> -> vector<128x128xf32>
    %94 = arith.negf %93 : vector<128x128xf32>
    %95 = math.exp %94 : vector<128x128xf32>
    %cst_45 = arith.constant 1.000000e+00 : f32
    %96 = vector.broadcast %cst_45 : f32 to vector<128x128xf32>
    %97 = arith.addf %96, %95 : vector<128x128xf32>
    %98 = arith.divf %96, %97 : vector<128x128xf32>
    %c0_46 = arith.constant 0 : index
    %c0_47 = arith.constant 0 : index
    %99 = vector.load %arg13[%c0_46, %c0_47] : memref<128x128xf32, #tpu.memory_space<vmem>>, vector<128x128xf32>
    tpu.vector_store %arg13[%c0_46, %c0_47], %98 {strides = array<i32>} : memref<128x128xf32, #tpu.memory_space<vmem>>, vector<128x128xf32>,
    %c0_48 = arith.constant 0 : index
    %c0_49 = arith.constant 0 : index
    %100 = vector.load %arg9[%c0_48, %c0_49] : memref<16x8xf32, #tpu.memory_space<vmem>>, vector<16x8xf32>
    %cst_50 = arith.constant dense<0.000000e+00> : vector<128x8xf32>
    %101 = tpu.matmul %92, %100, %cst_50 {dimension_numbers = #tpu.dot_dimension_numbers<[1], [0], [0], [1], [0, 0, 1, 1], [], []>} : vector<128x16xf32>, vector<16x8xf32>, vector<128x8xf32> -> vector<128x8xf32>
    %c0_51 = arith.constant 0 : index
    %c0_52 = arith.constant 0 : index
    %102 = vector.load %arg10[%c0_51, %c0_52] : memref<1x8xf32, #tpu.memory_space<vmem>>, vector<1x8xf32>
    %103 = vector.broadcast %102 : vector<1x8xf32> to vector<128x8xf32>
    %104 = arith.addf %101, %103 : vector<128x8xf32>
    %cst_53 = arith.constant dense<0xFF800000> : vector<128xf32>
    %105 = vector.multi_reduction <maximumf>, %104, %cst_53 [1] : vector<128x8xf32> to vector<128xf32>
    %106 = vector.shape_cast %105 : vector<128xf32> to vector<128x1xf32>
    %cst_54 = arith.constant dense<0x7F800000> : vector<128xf32>
    %107 = vector.multi_reduction <minimumf>, %104, %cst_54 [1] : vector<128x8xf32> to vector<128xf32>
    %108 = vector.shape_cast %107 : vector<128xf32> to vector<128x1xf32>
    %109 = arith.subf %106, %108 : vector<128x1xf32>
    %110 = vector.broadcast %108 : vector<128x1xf32> to vector<128x8xf32>
    %111 = arith.subf %104, %110 : vector<128x8xf32>
    %cst_55 = arith.constant 0.000000e+00 : f32
    %112 = vector.broadcast %cst_55 : f32 to vector<128x1xf32>
    %113 = arith.cmpf ogt, %109, %112 : vector<128x1xf32>
    %cst_56 = arith.constant 1.000000e+00 : f32
    %114 = vector.broadcast %cst_56 : f32 to vector<128x1xf32>
    %115 = arith.select %113, %109, %114 : vector<128x1xi1>, vector<128x1xf32>
    %116 = vector.broadcast %115 : vector<128x1xf32> to vector<128x8xf32>
    %117 = arith.divf %111, %116 : vector<128x8xf32>
    %118 = arith.mulf %117, %117 : vector<128x8xf32>
    %cst_57 = arith.constant dense<0.000000e+00> : vector<128xf32>
    %119 = vector.multi_reduction <add>, %118, %cst_57 [1] : vector<128x8xf32> to vector<128xf32>
    %120 = vector.shape_cast %119 : vector<128xf32> to vector<128x1xf32>
    %cst_58 = arith.constant 1.000000e-24 : f32
    %121 = vector.broadcast %cst_58 : f32 to vector<128x1xf32>
    %122 = arith.maximumf %120, %121 : vector<128x1xf32>
    %123 = math.rsqrt %122 : vector<128x1xf32>
    %124 = vector.broadcast %123 : vector<128x1xf32> to vector<128x8xf32>
    %125 = arith.mulf %117, %124 : vector<128x8xf32>
    %c0_59 = arith.constant 0 : index
    %c0_60 = arith.constant 0 : index
    %126 = vector.load %arg11[%c0_59, %c0_60] : memref<4x8xf32, #tpu.memory_space<vmem>>, vector<4x8xf32>
    %cst_61 = arith.constant dense<0.000000e+00> : vector<128x4xf32>
    %127 = tpu.matmul %125, %126, %cst_61 {dimension_numbers = #tpu.dot_dimension_numbers<[1], [1], [0], [0], [0, 0, 1, 0], [], []>} : vector<128x8xf32>, vector<4x8xf32>, vector<128x4xf32> -> vector<128x4xf32>
    %128 = arith.mulf %125, %125 : vector<128x8xf32>
    %cst_62 = arith.constant dense<0.000000e+00> : vector<128xf32>
    %129 = vector.multi_reduction <add>, %128, %cst_62 [1] : vector<128x8xf32> to vector<128xf32>
    %130 = vector.shape_cast %129 : vector<128xf32> to vector<128x1xf32>
    %cst_63 = arith.constant 2.000000e+00 : f32
    %131 = vector.broadcast %cst_63 : f32 to vector<128x4xf32>
    %132 = arith.mulf %131, %127 : vector<128x4xf32>
    %133 = vector.broadcast %130 : vector<128x1xf32> to vector<128x4xf32>
    %134 = arith.subf %133, %132 : vector<128x4xf32>
    %c0_64 = arith.constant 0 : index
    %c0_65 = arith.constant 0 : index
    %135 = vector.load %arg12[%c0_64, %c0_65] : memref<1x4xf32, #tpu.memory_space<vmem>>, vector<1x4xf32>
    %136 = vector.broadcast %135 : vector<1x4xf32> to vector<128x4xf32>
    %137 = arith.addf %134, %136 : vector<128x4xf32>
    %cst_66 = arith.constant 0.000000e+00 : f32
    %138 = vector.broadcast %cst_66 : f32 to vector<128x4xf32>
    %139 = arith.maximumf %137, %138 : vector<128x4xf32>
    %cst_67 = arith.constant 1.000000e+00 : f32
    %140 = vector.broadcast %cst_67 : f32 to vector<128x4xf32>
    %141 = arith.divf %139, %140 : vector<128x4xf32>
    %cst_68 = arith.constant 1.000000e+00 : f32
    %142 = vector.broadcast %cst_68 : f32 to vector<128x4xf32>
    %143 = arith.addf %142, %141 : vector<128x4xf32>
    %cst_69 = arith.constant 1.000000e+00 : f32
    %144 = vector.broadcast %cst_69 : f32 to vector<128x4xf32>
    %145 = arith.divf %144, %143 : vector<128x4xf32>
    %cst_70 = arith.constant dense<0.000000e+00> : vector<128xf32>
    %146 = vector.multi_reduction <add>, %145, %cst_70 [1] : vector<128x4xf32> to vector<128xf32>
    %147 = vector.shape_cast %146 : vector<128xf32> to vector<128x1xf32>
    %148 = vector.broadcast %147 : vector<128x1xf32> to vector<128x4xf32>
    %149 = arith.divf %145, %148 : vector<128x4xf32>
    %cst_71 = arith.constant 0.000000e+00 : f32
    %150 = vector.broadcast %cst_71 : f32 to vector<128x512xf32>
    %c0_72 = arith.constant 0 : index
    %c0_73 = arith.constant 0 : index
    %151 = vector.load %arg14[%c0_72, %c0_73] : memref<128x512xf32, #tpu.memory_space<vmem>>, vector<128x512xf32>
    tpu.vector_store %arg14[%c0_72, %c0_73], %150 {strides = array<i32>} : memref<128x512xf32, #tpu.memory_space<vmem>>, vector<128x512xf32>,
    %c0_74 = arith.constant 0 : index
    %c0_75 = arith.constant 0 : index
    %152 = vector.load %arg14[%c0_74, %c0_75] : memref<128x512xf32, #tpu.memory_space<vmem>>, vector<128x16xf32>
    tpu.vector_store %arg14[%c0_74, %c0_75], %92 {strides = array<i32>} : memref<128x512xf32, #tpu.memory_space<vmem>>, vector<128x16xf32>,
    %c0_76 = arith.constant 0 : index
    %c128 = arith.constant 128 : index
    %153 = vector.load %arg14[%c0_76, %c128] : memref<128x512xf32, #tpu.memory_space<vmem>>, vector<128x8xf32>
    tpu.vector_store %arg14[%c0_76, %c128], %104 {strides = array<i32>} : memref<128x512xf32, #tpu.memory_space<vmem>>, vector<128x8xf32>,
    %c0_77 = arith.constant 0 : index
    %c256 = arith.constant 256 : index
    %154 = vector.load %arg14[%c0_77, %c256] : memref<128x512xf32, #tpu.memory_space<vmem>>, vector<128x8xf32>
    tpu.vector_store %arg14[%c0_77, %c256], %125 {strides = array<i32>} : memref<128x512xf32, #tpu.memory_space<vmem>>, vector<128x8xf32>,
    %c0_78 = arith.constant 0 : index
    %c384 = arith.constant 384 : index
    %155 = vector.load %arg14[%c0_78, %c384] : memref<128x512xf32, #tpu.memory_space<vmem>>, vector<128x4xf32>
    tpu.vector_store %arg14[%c0_78, %c384], %149 {strides = array<i32>} : memref<128x512xf32, #tpu.memory_space<vmem>>, vector<128x4xf32>,
    return
  }
}

</mosaic_0001>

<llo_original>
// kernel: stagam_forward.1
$region0: #{stagam_forward.1}
  #allocation0 [shape = 'u32[]', space=smem, size = 0x4, offset = 0x4, fixed_abs, tag = 'smem constant byte address 0x4 - core index']
  #allocation1 [shape = 'u32[144,128]{1,0:T(1,128)}', space=vmem, size = 0x12000, scoped, tag = 'internal scratch']
  %s0 = inlined_call_operand.vmem [shape: f32[128,32], index: 0, kind: input, shape index: {}]
  %s1 = inlined_call_operand.vmem [shape: f32[128,128], index: 1, kind: input, shape index: {}]
  %s2 = inlined_call_operand.vmem [shape: f32[128,128], index: 2, kind: input, shape index: {}]
  %s3 = inlined_call_operand.vmem [shape: f32[32,32], index: 3, kind: input, shape index: {}]
  %s4 = inlined_call_operand.vmem [shape: f32[1,32], index: 4, kind: input, shape index: {}]
  %s5 = inlined_call_operand.vmem [shape: f32[1,32], index: 5, kind: input, shape index: {}]
  %s6 = inlined_call_operand.vmem [shape: f32[32,16], index: 6, kind: input, shape index: {}]
  %s7 = inlined_call_operand.vmem [shape: f32[1,16], index: 7, kind: input, shape index: {}]
  %s8 = inlined_call_operand.vmem [shape: f32[1,16], index: 8, kind: input, shape index: {}]
  %s9 = inlined_call_operand.vmem [shape: f32[16,8], index: 9, kind: input, shape index: {}]
  %s10 = inlined_call_operand.vmem [shape: f32[1,8], index: 10, kind: input, shape index: {}]
  %s11 = inlined_call_operand.vmem [shape: f32[4,8], index: 11, kind: input, shape index: {}]
  %s12 = inlined_call_operand.vmem [shape: f32[1,4], index: 12, kind: input, shape index: {}]
  %s13 = inlined_call_operand.vmem [shape: f32[128,128], index: 13, kind: output, shape index: {0}]
  %s14 = inlined_call_operand.vmem [shape: f32[128,512], index: 14, kind: output, shape index: {1}]
  %15 = xla_tuple %s13, %s14
  %s16 = sld [smem:[#allocation0]]
  $region70: #{stagam_forward.1} parent=0
    _
  %s18 = ssub.s32 1, %s16
  %s19 = scalar_select 0, %s18, %s16
  // Predicated region
  $region2: #{stagam_forward.1} parent=0 // pred_check
    _
  $region3: #{stagam_forward.1} parent=0 // pred_check_branch
    %21 = sbr.rel (0) target = $region5
  $region4: #{stagam_forward.1} parent=0 // pred_region
    _
  $region5: #{stagam_forward.1} parent=0 // pred_fallthru
    _
  // Predicated region
  $region6: #{stagam_forward.1} parent=0 // pred_check
    _
  $region7: #{stagam_forward.1} parent=0 // pred_check_branch
    %23 = sbr.rel (0) target = $region9
  $region8: #{stagam_forward.1} parent=0 // pred_region
    _
  $region9: #{stagam_forward.1} parent=0 // pred_fallthru
    _
  // Predicated region
  $region10: #{stagam_forward.1} parent=0 // pred_check
    _
  $region11: #{stagam_forward.1} parent=0 // pred_check_branch
    %25 = sbr.rel (0) target = $region13
  $region12: #{stagam_forward.1} parent=0 // pred_region
    _
  $region13: #{stagam_forward.1} parent=0 // pred_fallthru
    _
  // Predicated region
  $region14: #{stagam_forward.1} parent=0 // pred_check
    _
  $region15: #{stagam_forward.1} parent=0 // pred_check_branch
    %27 = sbr.rel (0) target = $region17
  $region16: #{stagam_forward.1} parent=0 // pred_region
    _
  $region17: #{stagam_forward.1} parent=0 // pred_fallthru
    _
  // Predicated region
  $region18: #{stagam_forward.1} parent=0 // pred_check
    _
  $region19: #{stagam_forward.1} parent=0 // pred_check_branch
    %29 = sbr.rel (0) target = $region21
  $region20: #{stagam_forward.1} parent=0 // pred_region
    _
  $region21: #{stagam_forward.1} parent=0 // pred_fallthru
    _
  // Predicated region
  $region22: #{stagam_forward.1} parent=0 // pred_check
    _
  $region23: #{stagam_forward.1} parent=0 // pred_check_branch
    %31 = sbr.rel (0) target = $region25
  $region24: #{stagam_forward.1} parent=0 // pred_region
    _
  $region25: #{stagam_forward.1} parent=0 // pred_fallthru
    _
  // Predicated region
  $region26: #{stagam_forward.1} parent=0 // pred_check
    _
  $region27: #{stagam_forward.1} parent=0 // pred_check_branch
    %33 = sbr.rel (0) target = $region29
  $region28: #{stagam_forward.1} parent=0 // pred_region
    _
  $region29: #{stagam_forward.1} parent=0 // pred_fallthru
    _
  // Predicated region
  $region30: #{stagam_forward.1} parent=0 // pred_check
    _
  $region31: #{stagam_forward.1} parent=0 // pred_check_branch
    %35 = sbr.rel (0) target = $region33
  $region32: #{stagam_forward.1} parent=0 // pred_region
    _
  $region33: #{stagam_forward.1} parent=0 // pred_fallthru
    _
  // Predicated region
  $region34: #{stagam_forward.1} parent=0 // pred_check
    _
  $region35: #{stagam_forward.1} parent=0 // pred_check_branch
    %37 = sbr.rel (0) target = $region37
  $region36: #{stagam_forward.1} parent=0 // pred_region
    _
  $region37: #{stagam_forward.1} parent=0 // pred_fallthru
    _
  // Predicated region
  $region38: #{stagam_forward.1} parent=0 // pred_check
    _
  $region39: #{stagam_forward.1} parent=0 // pred_check_branch
    %39 = sbr.rel (0) target = $region41
  $region40: #{stagam_forward.1} parent=0 // pred_region
    _
  $region41: #{stagam_forward.1} parent=0 // pred_fallthru
    _
  // Predicated region
  $region42: #{stagam_forward.1} parent=0 // pred_check
    _
  $region43: #{stagam_forward.1} parent=0 // pred_check_branch
    %41 = sbr.rel (0) target = $region45
  $region44: #{stagam_forward.1} parent=0 // pred_region
    _
  $region45: #{stagam_forward.1} parent=0 // pred_fallthru
    _
  // Predicated region
  $region46: #{stagam_forward.1} parent=0 // pred_check
    _
  $region47: #{stagam_forward.1} parent=0 // pred_check_branch
    %43 = sbr.rel (0) target = $region49
  $region48: #{stagam_forward.1} parent=0 // pred_region
    _
  $region49: #{stagam_forward.1} parent=0 // pred_fallthru
    _
  // Predicated region
  $region50: #{stagam_forward.1} parent=0 // pred_check
    _
  $region51: #{stagam_forward.1} parent=0 // pred_check_branch
    %45 = sbr.rel (0) target = $region53
  $region52: #{stagam_forward.1} parent=0 // pred_region
    _
  $region53: #{stagam_forward.1} parent=0 // pred_fallthru
    _
  %v46 = vld [vmem:[%s1] sm:$0xff]
  %v47 = vld [vmem:[%s1 + $0x8] sm:$0xff]
  %v48 = vld [vmem:[%s1 + $0x10] sm:$0xff]
  %v49 = vld [vmem:[%s1 + $0x18] sm:$0xff]
  %v50 = vld [vmem:[%s1 + $0x20] sm:$0xff]
  %v51 = vld [vmem:[%s1 + $0x28] sm:$0xff]
  %v52 = vld [vmem:[%s1 + $0x30] sm:$0xff]
  %v53 = vld [vmem:[%s1 + $0x38] sm:$0xff]
  %v54 = vld [vmem:[%s1 + $0x40] sm:$0xff]
  %v55 = vld [vmem:[%s1 + $0x48] sm:$0xff]
  %v56 = vld [vmem:[%s1 + $0x50] sm:$0xff]
  %v57 = vld [vmem:[%s1 + $0x58] sm:$0xff]
  %v58 = vld [vmem:[%s1 + $0x60] sm:$0xff]
  %v59 = vld [vmem:[%s1 + $0x68] sm:$0xff]
  %v60 = vld [vmem:[%s1 + $0x70] sm:$0xff]
  %v61 = vld [vmem:[%s1 + $0x78] sm:$0xff]
  %v62 = vld [vmem:[%s2] sm:$0xff]
  %v63 = vld [vmem:[%s2 + $0x8] sm:$0xff]
  %v64 = vld [vmem:[%s2 + $0x10] sm:$0xff]
  %v65 = vld [vmem:[%s2 + $0x18] sm:$0xff]
  %v66 = vld [vmem:[%s2 + $0x20] sm:$0xff]
  %v67 = vld [vmem:[%s2 + $0x28] sm:$0xff]
  %v68 = vld [vmem:[%s2 + $0x30] sm:$0xff]
  %v69 = vld [vmem:[%s2 + $0x38] sm:$0xff]
  %v70 = vld [vmem:[%s2 + $0x40] sm:$0xff]
  %v71 = vld [vmem:[%s2 + $0x48] sm:$0xff]
  %v72 = vld [vmem:[%s2 + $0x50] sm:$0xff]
  %v73 = vld [vmem:[%s2 + $0x58] sm:$0xff]
  %v74 = vld [vmem:[%s2 + $0x60] sm:$0xff]
  %v75 = vld [vmem:[%s2 + $0x68] sm:$0xff]
  %v76 = vld [vmem:[%s2 + $0x70] sm:$0xff]
  %v77 = vld [vmem:[%s2 + $0x78] sm:$0xff]
  %v78 = vld [vmem:[%s0] sm:$0xff]
  %v79 = vld [vmem:[%s0 + $0x8] sm:$0xff]
  %v80 = vld [vmem:[%s0 + $0x10] sm:$0xff]
  %v81 = vld [vmem:[%s0 + $0x18] sm:$0xff]
  %v82 = vld [vmem:[%s0 + $0x20] sm:$0xff]
  %v83 = vld [vmem:[%s0 + $0x28] sm:$0xff]
  %v84 = vld [vmem:[%s0 + $0x30] sm:$0xff]
  %v85 = vld [vmem:[%s0 + $0x38] sm:$0xff]
  %v86 = vld [vmem:[%s0 + $0x40] sm:$0xff]
  %v87 = vld [vmem:[%s0 + $0x48] sm:$0xff]
  %v88 = vld [vmem:[%s0 + $0x50] sm:$0xff]
  %v89 = vld [vmem:[%s0 + $0x58] sm:$0xff]
  %v90 = vld [vmem:[%s0 + $0x60] sm:$0xff]
  %v91 = vld [vmem:[%s0 + $0x68] sm:$0xff]
  %v92 = vld [vmem:[%s0 + $0x70] sm:$0xff]
  %v93 = vld [vmem:[%s0 + $0x78] sm:$0xff]
  %v94 = vld [vmem:[%s3] sm:$0xff]
  %v95 = vld [vmem:[%s3 + $0x8] sm:$0xff]
  %v96 = vld [vmem:[%s3 + $0x10] sm:$0xff]
  %v97 = vld [vmem:[%s3 + $0x18] sm:$0xff]
  %vm98 = vcmask 261120
  %v100 = vsel %vm98, %v78, 0
  %v103 = vsel %vm98, %v79, 0
  %v106 = vsel %vm98, %v80, 0
  %v109 = vsel %vm98, %v81, 0
  %v112 = vsel %vm98, %v82, 0
  %v115 = vsel %vm98, %v83, 0
  %v118 = vsel %vm98, %v84, 0
  %v121 = vsel %vm98, %v85, 0
  %v124 = vsel %vm98, %v86, 0
  %v127 = vsel %vm98, %v87, 0
  %v130 = vsel %vm98, %v88, 0
  %v133 = vsel %vm98, %v89, 0
  %v136 = vsel %vm98, %v90, 0
  %v139 = vsel %vm98, %v91, 0
  %v142 = vsel %vm98, %v92, 0
  %v145 = vsel %vm98, %v93, 0
  %147 = vmatprep.subr.mxu0 0.0
  %148 = vmatpush1.msra.mxu0 0.0
  %149 = vmatprep.subr.mxu0 0.0
  %150 = vmatpush1.msra.mxu0 0.0
  %151 = vmatprep.subr.mxu0 0.0
  %152 = vmatpush1.msra.mxu0 0.0
  %153 = vmatprep.subr.mxu0 0.0
  %154 = vmatpush1.msra.mxu0 0.0
  %155 = vmatprep.subr.mxu0 0.0
  %156 = vmatpush1.msra.mxu0 0.0
  %157 = vmatprep.subr.mxu0 0.0
  %158 = vmatpush1.msra.mxu0 0.0
  %159 = vmatprep.subr.mxu0 0.0
  %160 = vmatpush1.msra.mxu0 0.0
  %161 = vmatprep.subr.mxu0 0.0
  %162 = vmatpush1.msra.mxu0 0.0
  %163 = vmatprep.subr.mxu0 0.0
  %164 = vmatpush1.msra.mxu0 0.0
  %165 = vmatprep.subr.mxu0 0.0
  %166 = vmatpush1.msra.mxu0 0.0
  %167 = vmatprep.subr.mxu0 0.0
  %168 = vmatpush1.msra.mxu0 0.0
  %169 = vmatprep.subr.mxu0 0.0
  %170 = vmatpush1.msra.mxu0 0.0
  %171 = vmatprep.subr.mxu0 0.0
  %172 = vmatpush1.msra.mxu0 %v97
  %173 = vmatprep.subr.mxu0 0.0
  %174 = vmatpush1.msra.mxu0 %v96
  %175 = vmatprep.subr.mxu0 0.0
  %176 = vmatpush1.msra.mxu0 %v95
  %177 = vmatprep.subr.mxu0 0.0
  %178 = vmatpush1.msra.mxu0 %v94
  %179 = vmatprep.subr.mxu0 0.0
  %180 = vmatpush2.msra.mxu0 0.0
  %181 = vmatprep.subr.mxu0 0.0
  %182 = vmatpush2.msra.mxu0 0.0
  %183 = vmatprep.subr.mxu0 0.0
  %184 = vmatpush2.msra.mxu0 0.0
  %185 = vmatprep.subr.mxu0 0.0
  %186 = vmatpush2.msra.mxu0 0.0
  %187 = vmatprep.subr.mxu0 0.0
  %188 = vmatpush2.msra.mxu0 0.0
  %189 = vmatprep.subr.mxu0 0.0
  %190 = vmatpush2.msra.mxu0 0.0
  %191 = vmatprep.subr.mxu0 0.0
  %192 = vmatpush2.msra.mxu0 0.0
  %193 = vmatprep.subr.mxu0 0.0
  %194 = vmatpush2.msra.mxu0 0.0
  %195 = vmatprep.subr.mxu0 0.0
  %196 = vmatpush2.msra.mxu0 0.0
  %197 = vmatprep.subr.mxu0 0.0
  %198 = vmatpush2.msra.mxu0 0.0
  %199 = vmatprep.subr.mxu0 0.0
  %200 = vmatpush2.msra.mxu0 0.0
  %201 = vmatprep.subr.mxu0 0.0
  %202 = vmatpush2.msra.mxu0 0.0
  %203 = vmatprep.subr.mxu0 0.0
  %204 = vmatpush2.msra.mxu0 0.0
  %205 = vmatprep.subr.mxu0 0.0
  %206 = vmatpush2.msra.mxu0 0.0
  %207 = vmatprep.subr.mxu0 0.0
  %208 = vmatpush2.msra.mxu0 0.0
  %209 = vmatprep.subr.mxu0 0.0
  %210 = vmatpush2.msra.mxu0 0.0
  %211 = vmatprep.mubr.f32.mxu0 0.0
  %212 = vmatmul.mubr.f32.gmra.mxu0 %v100
  %v213 = vpop.f32.mrf.mxu0
  %v214 = vadd.f32 0.0, %v213
  %v215 = vpop.f32.mrf.mxu0
  %216 = vmatprep.mubr.f32.mxu0 0.0
  %217 = vmatmul.mubr.f32.gmra.mxu0 %v103
  %v218 = vpop.f32.mrf.mxu0
  %v219 = vadd.f32 0.0, %v218
  %v220 = vpop.f32.mrf.mxu0
  %221 = vmatprep.mubr.f32.mxu0 0.0
  %222 = vmatmul.mubr.f32.gmra.mxu0 %v106
  %v223 = vpop.f32.mrf.mxu0
  %v224 = vadd.f32 0.0, %v223
  %v225 = vpop.f32.mrf.mxu0
  %226 = vmatprep.mubr.f32.mxu0 0.0
  %227 = vmatmul.mubr.f32.gmra.mxu0 %v109
  %v228 = vpop.f32.mrf.mxu0
  %v229 = vadd.f32 0.0, %v228
  %v230 = vpop.f32.mrf.mxu0
  %231 = vmatprep.mubr.f32.mxu0 0.0
  %232 = vmatmul.mubr.f32.gmra.mxu0 %v112
  %v233 = vpop.f32.mrf.mxu0
  %v234 = vadd.f32 0.0, %v233
  %v235 = vpop.f32.mrf.mxu0
  %236 = vmatprep.mubr.f32.mxu0 0.0
  %237 = vmatmul.mubr.f32.gmra.mxu0 %v115
  %v238 = vpop.f32.mrf.mxu0
  %v239 = vadd.f32 0.0, %v238
  %v240 = vpop.f32.mrf.mxu0
  %241 = vmatprep.mubr.f32.mxu0 0.0
  %242 = vmatmul.mubr.f32.gmra.mxu0 %v118
  %v243 = vpop.f32.mrf.mxu0
  %v244 = vadd.f32 0.0, %v243
  %v245 = vpop.f32.mrf.mxu0
  %246 = vmatprep.mubr.f32.mxu0 0.0
  %247 = vmatmul.mubr.f32.gmra.mxu0 %v121
  %v248 = vpop.f32.mrf.mxu0
  %v249 = vadd.f32 0.0, %v248
  %v250 = vpop.f32.mrf.mxu0
  %251 = vmatprep.mubr.f32.mxu0 0.0
  %252 = vmatmul.mubr.f32.gmra.mxu0 %v124
  %v253 = vpop.f32.mrf.mxu0
  %v254 = vadd.f32 0.0, %v253
  %v255 = vpop.f32.mrf.mxu0
  %256 = vmatprep.mubr.f32.mxu0 0.0
  %257 = vmatmul.mubr.f32.gmra.mxu0 %v127
  %v258 = vpop.f32.mrf.mxu0
  %v259 = vadd.f32 0.0, %v258
  %v260 = vpop.f32.mrf.mxu0
  %261 = vmatprep.mubr.f32.mxu0 0.0
  %262 = vmatmul.mubr.f32.gmra.mxu0 %v130
  %v263 = vpop.f32.mrf.mxu0
  %v264 = vadd.f32 0.0, %v263
  %v265 = vpop.f32.mrf.mxu0
  %266 = vmatprep.mubr.f32.mxu0 0.0
  %267 = vmatmul.mubr.f32.gmra.mxu0 %v133
  %v268 = vpop.f32.mrf.mxu0
  %v269 = vadd.f32 0.0, %v268
  %v270 = vpop.f32.mrf.mxu0
  %271 = vmatprep.mubr.f32.mxu0 0.0
  %272 = vmatmul.mubr.f32.gmra.mxu0 %v136
  %v273 = vpop.f32.mrf.mxu0
  %v274 = vadd.f32 0.0, %v273
  %v275 = vpop.f32.mrf.mxu0
  %276 = vmatprep.mubr.f32.mxu0 0.0
  %277 = vmatmul.mubr.f32.gmra.mxu0 %v139
  %v278 = vpop.f32.mrf.mxu0
  %v279 = vadd.f32 0.0, %v278
  %v280 = vpop.f32.mrf.mxu0
  %281 = vmatprep.mubr.f32.mxu0 0.0
  %282 = vmatmul.mubr.f32.gmra.mxu0 %v142
  %v283 = vpop.f32.mrf.mxu0
  %v284 = vadd.f32 0.0, %v283
  %v285 = vpop.f32.mrf.mxu0
  %286 = vmatprep.mubr.f32.mxu0 0.0
  %287 = vmatmul.mubr.f32.gmra.mxu0 %v145
  %v288 = vpop.f32.mrf.mxu0
  %v289 = vadd.f32 0.0, %v288
  %v290 = vpop.f32.mrf.mxu0
  %291 = vdwg.mxu0
  %v292 = vld [vmem:[%s4] sm:$0x1]
  %v294 = vlaneseq
  %v295 = vshrl.u32 %v294, 7
  %v296 = vsub.s32 0, %v295
  %v297 = vrot.slane %v292, %v296
  %v299 = vmul.f32 %v214, %v297
  %v300 = vmul.f32 %v219, %v297
  %v301 = vmul.f32 %v224, %v297
  %v302 = vmul.f32 %v229, %v297
  %v303 = vmul.f32 %v234, %v297
  %v304 = vmul.f32 %v239, %v297
  %v305 = vmul.f32 %v244, %v297
  %v306 = vmul.f32 %v249, %v297
  %v307 = vmul.f32 %v254, %v297
  %v308 = vmul.f32 %v259, %v297
  %v309 = vmul.f32 %v264, %v297
  %v310 = vmul.f32 %v269, %v297
  %v311 = vmul.f32 %v274, %v297
  %v312 = vmul.f32 %v279, %v297
  %v313 = vmul.f32 %v284, %v297
  %v314 = vmul.f32 %v289, %v297
  %v315 = vsel %vm98, %v299, 0.0
  %316 = vadd.xlane.f32.xlu0 %v315
  %v317 = vpop.xlane.xlu0 %316
  %v318 = vsel %vm98, %v300, 0.0
  %319 = vadd.xlane.f32.xlu0 %v318
  %v320 = vpop.xlane.xlu0 %319
  %v321 = vsel %vm98, %v301, 0.0
  %322 = vadd.xlane.f32.xlu0 %v321
  %v323 = vpop.xlane.xlu0 %322
  %v324 = vsel %vm98, %v302, 0.0
  %325 = vadd.xlane.f32.xlu0 %v324
  %v326 = vpop.xlane.xlu0 %325
  %v327 = vsel %vm98, %v303, 0.0
  %328 = vadd.xlane.f32.xlu0 %v327
  %v329 = vpop.xlane.xlu0 %328
  %v330 = vsel %vm98, %v304, 0.0
  %331 = vadd.xlane.f32.xlu0 %v330
  %v332 = vpop.xlane.xlu0 %331
  %v333 = vsel %vm98, %v305, 0.0
  %334 = vadd.xlane.f32.xlu0 %v333
  %v335 = vpop.xlane.xlu0 %334
  %v336 = vsel %vm98, %v306, 0.0
  %337 = vadd.xlane.f32.xlu0 %v336
  %v338 = vpop.xlane.xlu0 %337
  %v339 = vsel %vm98, %v307, 0.0
  %340 = vadd.xlane.f32.xlu0 %v339
  %v341 = vpop.xlane.xlu0 %340
  %v342 = vsel %vm98, %v308, 0.0
  %343 = vadd.xlane.f32.xlu0 %v342
  %v344 = vpop.xlane.xlu0 %343
  %v345 = vsel %vm98, %v309, 0.0
  %346 = vadd.xlane.f32.xlu0 %v345
  %v347 = vpop.xlane.xlu0 %346
  %v348 = vsel %vm98, %v310, 0.0
  %349 = vadd.xlane.f32.xlu0 %v348
  %v350 = vpop.xlane.xlu0 %349
  %v351 = vsel %vm98, %v311, 0.0
  %352 = vadd.xlane.f32.xlu0 %v351
  %v353 = vpop.xlane.xlu0 %352
  %v354 = vsel %vm98, %v312, 0.0
  %355 = vadd.xlane.f32.xlu0 %v354
  %v356 = vpop.xlane.xlu0 %355
  %v357 = vsel %vm98, %v313, 0.0
  %358 = vadd.xlane.f32.xlu0 %v357
  %v359 = vpop.xlane.xlu0 %358
  %v360 = vsel %vm98, %v314, 0.0
  %361 = vadd.xlane.f32.xlu0 %v360
  %v362 = vpop.xlane.xlu0 %361
  %v363 = vld [vmem:[%s5] sm:$0x1]
  %v365 = vsel %vm98, %v363, 0
  %v368 = vsel %vm98, %v214, 0
  %v371 = vsel %vm98, %v219, 0
  %v374 = vsel %vm98, %v224, 0
  %v377 = vsel %vm98, %v229, 0
  %v380 = vsel %vm98, %v234, 0
  %v383 = vsel %vm98, %v239, 0
  %v386 = vsel %vm98, %v244, 0
  %v389 = vsel %vm98, %v249, 0
  %v392 = vsel %vm98, %v254, 0
  %v395 = vsel %vm98, %v259, 0
  %v398 = vsel %vm98, %v264, 0
  %v401 = vsel %vm98, %v269, 0
  %v404 = vsel %vm98, %v274, 0
  %v407 = vsel %vm98, %v279, 0
  %v410 = vsel %vm98, %v284, 0
  %v413 = vsel %vm98, %v289, 0
  %415 = vmatprep.subr.mxu0 0.0
  %416 = vmatpush1.xpose.msra.mxu0 %v413
  %417 = vmatprep.subr.mxu0 0.0
  %418 = vmatpush1.xpose.msra.mxu0 %v410
  %419 = vmatprep.subr.mxu0 0.0
  %420 = vmatpush1.xpose.msra.mxu0 %v407
  %421 = vmatprep.subr.mxu0 0.0
  %422 = vmatpush1.xpose.msra.mxu0 %v404
  %423 = vmatprep.subr.mxu0 0.0
  %424 = vmatpush1.xpose.msra.mxu0 %v401
  %425 = vmatprep.subr.mxu0 0.0
  %426 = vmatpush1.xpose.msra.mxu0 %v398
  %427 = vmatprep.subr.mxu0 0.0
  %428 = vmatpush1.xpose.msra.mxu0 %v395
  %429 = vmatprep.subr.mxu0 0.0
  %430 = vmatpush1.xpose.msra.mxu0 %v392
  %431 = vmatprep.subr.mxu0 0.0
  %432 = vmatpush1.xpose.msra.mxu0 %v389
  %433 = vmatprep.subr.mxu0 0.0
  %434 = vmatpush1.xpose.msra.mxu0 %v386
  %435 = vmatprep.subr.mxu0 0.0
  %436 = vmatpush1.xpose.msra.mxu0 %v383
  %437 = vmatprep.subr.mxu0 0.0
  %438 = vmatpush1.xpose.msra.mxu0 %v380
  %439 = vmatprep.subr.mxu0 0.0
  %440 = vmatpush1.xpose.msra.mxu0 %v377
  %441 = vmatprep.subr.mxu0 0.0
  %442 = vmatpush1.xpose.msra.mxu0 %v374
  %443 = vmatprep.subr.mxu0 0.0
  %444 = vmatpush1.xpose.msra.mxu0 %v371
  %445 = vmatprep.subr.mxu0 0.0
  %446 = vmatpush1.xpose.msra.mxu0 %v368
  %447 = vmatprep.subr.mxu0 0.0
  %448 = vmatpush2.xpose.msra.mxu0 0.0
  %449 = vmatprep.subr.mxu0 0.0
  %450 = vmatpush2.xpose.msra.mxu0 0.0
  %451 = vmatprep.subr.mxu0 0.0
  %452 = vmatpush2.xpose.msra.mxu0 0.0
  %453 = vmatprep.subr.mxu0 0.0
  %454 = vmatpush2.xpose.msra.mxu0 0.0
  %455 = vmatprep.subr.mxu0 0.0
  %456 = vmatpush2.xpose.msra.mxu0 0.0
  %457 = vmatprep.subr.mxu0 0.0
  %458 = vmatpush2.xpose.msra.mxu0 0.0
  %459 = vmatprep.subr.mxu0 0.0
  %460 = vmatpush2.xpose.msra.mxu0 0.0
  %461 = vmatprep.subr.mxu0 0.0
  %462 = vmatpush2.xpose.msra.mxu0 0.0
  %463 = vmatprep.subr.mxu0 0.0
  %464 = vmatpush2.xpose.msra.mxu0 0.0
  %465 = vmatprep.subr.mxu0 0.0
  %466 = vmatpush2.xpose.msra.mxu0 0.0
  %467 = vmatprep.subr.mxu0 0.0
  %468 = vmatpush2.xpose.msra.mxu0 0.0
  %469 = vmatprep.subr.mxu0 0.0
  %470 = vmatpush2.xpose.msra.mxu0 0.0
  %471 = vmatprep.subr.mxu0 0.0
  %472 = vmatpush2.xpose.msra.mxu0 0.0
  %473 = vmatprep.subr.mxu0 0.0
  %474 = vmatpush2.xpose.msra.mxu0 0.0
  %475 = vmatprep.subr.mxu0 0.0
  %476 = vmatpush2.xpose.msra.mxu0 0.0
  %477 = vmatprep.subr.mxu0 0.0
  %478 = vmatpush2.xpose.msra.mxu0 0.0
  %479 = vmatprep.mubr.f32.mxu0 0.0
  %480 = vmatmul.mubr.f32.gmra.mxu0 %v365
  %v481 = vpop.f32.mrf.mxu0
  %v482 = vadd.f32 0.0, %v481
  %v483 = vpop.f32.mrf.mxu0
  %484 = vdwg.mxu0
  %v485 = vlaneseq
  %v486 = vshrl.u32 %v485, 7
  %v487 = vsub.s32 0, %v486
  %v488 = vrot.slane %v482, %v487
  %v489 = vadd.f32 %v317, %v488
  %v490 = vadd.f32 %v320, %v488
  %v491 = vadd.f32 %v323, %v488
  %v492 = vadd.f32 %v326, %v488
  %v493 = vadd.f32 %v329, %v488
  %v494 = vadd.f32 %v332, %v488
  %v495 = vadd.f32 %v335, %v488
  %v496 = vadd.f32 %v338, %v488
  %v497 = vadd.f32 %v341, %v488
  %v498 = vadd.f32 %v344, %v488
  %v499 = vadd.f32 %v347, %v488
  %v500 = vadd.f32 %v350, %v488
  %v501 = vadd.f32 %v353, %v488
  %v502 = vadd.f32 %v356, %v488
  %v503 = vadd.f32 %v359, %v488
  %v504 = vadd.f32 %v362, %v488
  %v505 = vmul.f32 %v489, %v62
  %v506 = vmul.f32 %v490, %v63
  %v507 = vmul.f32 %v491, %v64
  %v508 = vmul.f32 %v492, %v65
  %v509 = vmul.f32 %v493, %v66
  %v510 = vmul.f32 %v494, %v67
  %v511 = vmul.f32 %v495, %v68
  %v512 = vmul.f32 %v496, %v69
  %v513 = vmul.f32 %v497, %v70
  %v514 = vmul.f32 %v498, %v71
  %v515 = vmul.f32 %v499, %v72
  %v516 = vmul.f32 %v500, %v73
  %v517 = vmul.f32 %v501, %v74
  %v518 = vmul.f32 %v502, %v75
  %v519 = vmul.f32 %v503, %v76
  %v520 = vmul.f32 %v504, %v77
  %vm521 = vcmp.gt.f32.partialorder %v505, 0.0
  %vm522 = vcmp.gt.f32.partialorder %v506, 0.0
  %vm523 = vcmp.gt.f32.partialorder %v507, 0.0
  %vm524 = vcmp.gt.f32.partialorder %v508, 0.0
  %vm525 = vcmp.gt.f32.partialorder %v509, 0.0
  %vm526 = vcmp.gt.f32.partialorder %v510, 0.0
  %vm527 = vcmp.gt.f32.partialorder %v511, 0.0
  %vm528 = vcmp.gt.f32.partialorder %v512, 0.0
  %vm529 = vcmp.gt.f32.partialorder %v513, 0.0
  %vm530 = vcmp.gt.f32.partialorder %v514, 0.0
  %vm531 = vcmp.gt.f32.partialorder %v515, 0.0
  %vm532 = vcmp.gt.f32.partialorder %v516, 0.0
  %vm533 = vcmp.gt.f32.partialorder %v517, 0.0
  %vm534 = vcmp.gt.f32.partialorder %v518, 0.0
  %vm535 = vcmp.gt.f32.partialorder %v519, 0.0
  %vm536 = vcmp.gt.f32.partialorder %v520, 0.0
  %v537 = vmul.f32 %v505, 0.2
  %v538 = vmul.f32 %v506, 0.2
  %v539 = vmul.f32 %v507, 0.2
  %v540 = vmul.f32 %v508, 0.2
  %v541 = vmul.f32 %v509, 0.2
  %v542 = vmul.f32 %v510, 0.2
  %v543 = vmul.f32 %v511, 0.2
  %v544 = vmul.f32 %v512, 0.2
  %v545 = vmul.f32 %v513, 0.2
  %v546 = vmul.f32 %v514, 0.2
  %v547 = vmul.f32 %v515, 0.2
  %v548 = vmul.f32 %v516, 0.2
  %v549 = vmul.f32 %v517, 0.2
  %v550 = vmul.f32 %v518, 0.2
  %v551 = vmul.f32 %v519, 0.2
  %v552 = vmul.f32 %v520, 0.2
  %v553 = vsel %vm521, %v505, %v537
  %v554 = vsel %vm522, %v506, %v538
  %v555 = vsel %vm523, %v507, %v539
  %v556 = vsel %vm524, %v508, %v540
  %v557 = vsel %vm525, %v509, %v541
  %v558 = vsel %vm526, %v510, %v542
  %v559 = vsel %vm527, %v511, %v543
  %v560 = vsel %vm528, %v512, %v544
  %v561 = vsel %vm529, %v513, %v545
  %v562 = vsel %vm530, %v514, %v546
  %v563 = vsel %vm531, %v515, %v547
  %v564 = vsel %vm532, %v516, %v548
  %v565 = vsel %vm533, %v517, %v549
  %v566 = vsel %vm534, %v518, %v550
  %v567 = vsel %vm535, %v519, %v551
  %v568 = vsel %vm536, %v520, %v552
  %vm569 = vcmp.gt.f32.partialorder %v46, 0.0
  %vm570 = vcmp.gt.f32.partialorder %v47, 0.0
  %vm571 = vcmp.gt.f32.partialorder %v48, 0.0
  %vm572 = vcmp.gt.f32.partialorder %v49, 0.0
  %vm573 = vcmp.gt.f32.partialorder %v50, 0.0
  %vm574 = vcmp.gt.f32.partialorder %v51, 0.0
  %vm575 = vcmp.gt.f32.partialorder %v52, 0.0
  %vm576 = vcmp.gt.f32.partialorder %v53, 0.0
  %vm577 = vcmp.gt.f32.partialorder %v54, 0.0
  %vm578 = vcmp.gt.f32.partialorder %v55, 0.0
  %vm579 = vcmp.gt.f32.partialorder %v56, 0.0
  %vm580 = vcmp.gt.f32.partialorder %v57, 0.0
  %vm581 = vcmp.gt.f32.partialorder %v58, 0.0
  %vm582 = vcmp.gt.f32.partialorder %v59, 0.0
  %vm583 = vcmp.gt.f32.partialorder %v60, 0.0
  %vm584 = vcmp.gt.f32.partialorder %v61, 0.0
  %v585 = vsel %vm569, %v553, -9e+15
  %v586 = vsel %vm570, %v554, -9e+15
  %v587 = vsel %vm571, %v555, -9e+15
  %v588 = vsel %vm572, %v556, -9e+15
  %v589 = vsel %vm573, %v557, -9e+15
  %v590 = vsel %vm574, %v558, -9e+15
  %v591 = vsel %vm575, %v559, -9e+15
  %v592 = vsel %vm576, %v560, -9e+15
  %v593 = vsel %vm577, %v561, -9e+15
  %v594 = vsel %vm578, %v562, -9e+15
  %v595 = vsel %vm579, %v563, -9e+15
  %v596 = vsel %vm580, %v564, -9e+15
  %v597 = vsel %vm581, %v565, -9e+15
  %v598 = vsel %vm582, %v566, -9e+15
  %v599 = vsel %vm583, %v567, -9e+15
  %v600 = vsel %vm584, %v568, -9e+15
  %601 = vmax.xlane.f32.xlu0 %v585
  %v602 = vpop.xlane.xlu0 %601
  %603 = vmax.xlane.f32.xlu0 %v586
  %v604 = vpop.xlane.xlu0 %603
  %605 = vmax.xlane.f32.xlu0 %v587
  %v606 = vpop.xlane.xlu0 %605
  %607 = vmax.xlane.f32.xlu0 %v588
  %v608 = vpop.xlane.xlu0 %607
  %609 = vmax.xlane.f32.xlu0 %v589
  %v610 = vpop.xlane.xlu0 %609
  %611 = vmax.xlane.f32.xlu0 %v590
  %v612 = vpop.xlane.xlu0 %611
  %613 = vmax.xlane.f32.xlu0 %v591
  %v614 = vpop.xlane.xlu0 %613
  %615 = vmax.xlane.f32.xlu0 %v592
  %v616 = vpop.xlane.xlu0 %615
  %617 = vmax.xlane.f32.xlu0 %v593
  %v618 = vpop.xlane.xlu0 %617
  %619 = vmax.xlane.f32.xlu0 %v594
  %v620 = vpop.xlane.xlu0 %619
  %621 = vmax.xlane.f32.xlu0 %v595
  %v622 = vpop.xlane.xlu0 %621
  %623 = vmax.xlane.f32.xlu0 %v596
  %v624 = vpop.xlane.xlu0 %623
  %625 = vmax.xlane.f32.xlu0 %v597
  %v626 = vpop.xlane.xlu0 %625
  %627 = vmax.xlane.f32.xlu0 %v598
  %v628 = vpop.xlane.xlu0 %627
  %629 = vmax.xlane.f32.xlu0 %v599
  %v630 = vpop.xlane.xlu0 %629
  %631 = vmax.xlane.f32.xlu0 %v600
  %v632 = vpop.xlane.xlu0 %631
  %v633 = vsub.f32 %v585, %v602
  %v634 = vsub.f32 %v586, %v604
  %v635 = vsub.f32 %v587, %v606
  %v636 = vsub.f32 %v588, %v608
  %v637 = vsub.f32 %v589, %v610
  %v638 = vsub.f32 %v590, %v612
  %v639 = vsub.f32 %v591, %v614
  %v640 = vsub.f32 %v592, %v616
  %v641 = vsub.f32 %v593, %v618
  %v642 = vsub.f32 %v594, %v620
  %v643 = vsub.f32 %v595, %v622
  %v644 = vsub.f32 %v596, %v624
  %v645 = vsub.f32 %v597, %v626
  %v646 = vsub.f32 %v598, %v628
  %v647 = vsub.f32 %v599, %v630
  %v648 = vsub.f32 %v600, %v632
  %v649 = vmul.f32 %v633, 1.442695
  %v650 = vpow.pop %v649
  %v651 = vmul.f32 %v634, 1.442695
  %v652 = vpow.pop %v651
  %v653 = vmul.f32 %v635, 1.442695
  %v654 = vpow.pop %v653
  %v655 = vmul.f32 %v636, 1.442695
  %v656 = vpow.pop %v655
  %v657 = vmul.f32 %v637, 1.442695
  %v658 = vpow.pop %v657
  %v659 = vmul.f32 %v638, 1.442695
  %v660 = vpow.pop %v659
  %v661 = vmul.f32 %v639, 1.442695
  %v662 = vpow.pop %v661
  %v663 = vmul.f32 %v640, 1.442695
  %v664 = vpow.pop %v663
  %v665 = vmul.f32 %v641, 1.442695
  %v666 = vpow.pop %v665
  %v667 = vmul.f32 %v642, 1.442695
  %v668 = vpow.pop %v667
  %v669 = vmul.f32 %v643, 1.442695
  %v670 = vpow.pop %v669
  %v671 = vmul.f32 %v644, 1.442695
  %v672 = vpow.pop %v671
  %v673 = vmul.f32 %v645, 1.442695
  %v674 = vpow.pop %v673
  %v675 = vmul.f32 %v646, 1.442695
  %v676 = vpow.pop %v675
  %v677 = vmul.f32 %v647, 1.442695
  %v678 = vpow.pop %v677
  %v679 = vmul.f32 %v648, 1.442695
  %v680 = vpow.pop %v679
  %681 = vadd.xlane.f32.xlu0 %v650
  %v682 = vpop.xlane.xlu0 %681
  %683 = vadd.xlane.f32.xlu0 %v652
  %v684 = vpop.xlane.xlu0 %683
  %685 = vadd.xlane.f32.xlu0 %v654
  %v686 = vpop.xlane.xlu0 %685
  %687 = vadd.xlane.f32.xlu0 %v656
  %v688 = vpop.xlane.xlu0 %687
  %689 = vadd.xlane.f32.xlu0 %v658
  %v690 = vpop.xlane.xlu0 %689
  %691 = vadd.xlane.f32.xlu0 %v660
  %v692 = vpop.xlane.xlu0 %691
  %693 = vadd.xlane.f32.xlu0 %v662
  %v694 = vpop.xlane.xlu0 %693
  %695 = vadd.xlane.f32.xlu0 %v664
  %v696 = vpop.xlane.xlu0 %695
  %697 = vadd.xlane.f32.xlu0 %v666
  %v698 = vpop.xlane.xlu0 %697
  %699 = vadd.xlane.f32.xlu0 %v668
  %v700 = vpop.xlane.xlu0 %699
  %701 = vadd.xlane.f32.xlu0 %v670
  %v702 = vpop.xlane.xlu0 %701
  %703 = vadd.xlane.f32.xlu0 %v672
  %v704 = vpop.xlane.xlu0 %703
  %705 = vadd.xlane.f32.xlu0 %v674
  %v706 = vpop.xlane.xlu0 %705
  %707 = vadd.xlane.f32.xlu0 %v676
  %v708 = vpop.xlane.xlu0 %707
  %709 = vadd.xlane.f32.xlu0 %v678
  %v710 = vpop.xlane.xlu0 %709
  %711 = vadd.xlane.f32.xlu0 %v680
  %v712 = vpop.xlane.xlu0 %711
  %v713 = vrcp.pop %v682
  %v714 = vrcp.pop %v684
  %v715 = vrcp.pop %v686
  %v716 = vrcp.pop %v688
  %v717 = vrcp.pop %v690
  %v718 = vrcp.pop %v692
  %v719 = vrcp.pop %v694
  %v720 = vrcp.pop %v696
  %v721 = vrcp.pop %v698
  %v722 = vrcp.pop %v700
  %v723 = vrcp.pop %v702
  %v724 = vrcp.pop %v704
  %v725 = vrcp.pop %v706
  %v726 = vrcp.pop %v708
  %v727 = vrcp.pop %v710
  %v728 = vrcp.pop %v712
  %v729 = vmul.f32 %v650, %v713
  %v730 = vmul.f32 %v652, %v714
  %v731 = vmul.f32 %v654, %v715
  %v732 = vmul.f32 %v656, %v716
  %v733 = vmul.f32 %v658, %v717
  %v734 = vmul.f32 %v660, %v718
  %v735 = vmul.f32 %v662, %v719
  %v736 = vmul.f32 %v664, %v720
  %v737 = vmul.f32 %v666, %v721
  %v738 = vmul.f32 %v668, %v722
  %v739 = vmul.f32 %v670, %v723
  %v740 = vmul.f32 %v672, %v724
  %v741 = vmul.f32 %v674, %v725
  %v742 = vmul.f32 %v676, %v726
  %v743 = vmul.f32 %v678, %v727
  %v744 = vmul.f32 %v680, %v728
  %745 = vmatprep.subr.mxu0 0.0
  %746 = vmatpush1.msra.mxu0 %v289
  %747 = vmatprep.subr.mxu0 0.0
  %748 = vmatpush1.msra.mxu0 %v284
  %749 = vmatprep.subr.mxu0 0.0
  %750 = vmatpush1.msra.mxu0 %v279
  %751 = vmatprep.subr.mxu0 0.0
  %752 = vmatpush1.msra.mxu0 %v274
  %753 = vmatprep.subr.mxu0 0.0
  %754 = vmatpush1.msra.mxu0 %v269
  %755 = vmatprep.subr.mxu0 0.0
  %756 = vmatpush1.msra.mxu0 %v264
  %757 = vmatprep.subr.mxu0 0.0
  %758 = vmatpush1.msra.mxu0 %v259
  %759 = vmatprep.subr.mxu0 0.0
  %760 = vmatpush1.msra.mxu0 %v254
  %761 = vmatprep.subr.mxu0 0.0
  %762 = vmatpush1.msra.mxu0 %v249
  %763 = vmatprep.subr.mxu0 0.0
  %764 = vmatpush1.msra.mxu0 %v244
  %765 = vmatprep.subr.mxu0 0.0
  %766 = vmatpush1.msra.mxu0 %v239
  %767 = vmatprep.subr.mxu0 0.0
  %768 = vmatpush1.msra.mxu0 %v234
  %769 = vmatprep.subr.mxu0 0.0
  %770 = vmatpush1.msra.mxu0 %v229
  %771 = vmatprep.subr.mxu0 0.0
  %772 = vmatpush1.msra.mxu0 %v224
  %773 = vmatprep.subr.mxu0 0.0
  %774 = vmatpush1.msra.mxu0 %v219
  %775 = vmatprep.subr.mxu0 0.0
  %776 = vmatpush1.msra.mxu0 %v214
  %777 = vmatprep.subr.mxu0 0.0
  %778 = vmatpush2.msra.mxu0 0.0
  %779 = vmatprep.subr.mxu0 0.0
  %780 = vmatpush2.msra.mxu0 0.0
  %781 = vmatprep.subr.mxu0 0.0
  %782 = vmatpush2.msra.mxu0 0.0
  %783 = vmatprep.subr.mxu0 0.0
  %784 = vmatpush2.msra.mxu0 0.0
  %785 = vmatprep.subr.mxu0 0.0
  %786 = vmatpush2.msra.mxu0 0.0
  %787 = vmatprep.subr.mxu0 0.0
  %788 = vmatpush2.msra.mxu0 0.0
  %789 = vmatprep.subr.mxu0 0.0
  %790 = vmatpush2.msra.mxu0 0.0
  %791 = vmatprep.subr.mxu0 0.0
  %792 = vmatpush2.msra.mxu0 0.0
  %793 = vmatprep.subr.mxu0 0.0
  %794 = vmatpush2.msra.mxu0 0.0
  %795 = vmatprep.subr.mxu0 0.0
  %796 = vmatpush2.msra.mxu0 0.0
  %797 = vmatprep.subr.mxu0 0.0
  %798 = vmatpush2.msra.mxu0 0.0
  %799 = vmatprep.subr.mxu0 0.0
  %800 = vmatpush2.msra.mxu0 0.0
  %801 = vmatprep.subr.mxu0 0.0
  %802 = vmatpush2.msra.mxu0 0.0
  %803 = vmatprep.subr.mxu0 0.0
  %804 = vmatpush2.msra.mxu0 0.0
  %805 = vmatprep.subr.mxu0 0.0
  %806 = vmatpush2.msra.mxu0 0.0
  %807 = vmatprep.subr.mxu0 0.0
  %808 = vmatpush2.msra.mxu0 0.0
  %809 = vmatprep.mubr.f32.mxu0 0.0
  %810 = vmatmul.mubr.f32.gmra.mxu0 %v729
  %v811 = vpop.f32.mrf.mxu0
  %v812 = vadd.f32 0.0, %v811
  %v813 = vpop.f32.mrf.mxu0
  %814 = vmatprep.mubr.f32.mxu0 0.0
  %815 = vmatmul.mubr.f32.gmra.mxu0 %v730
  %v816 = vpop.f32.mrf.mxu0
  %v817 = vadd.f32 0.0, %v816
  %v818 = vpop.f32.mrf.mxu0
  %819 = vmatprep.mubr.f32.mxu0 0.0
  %820 = vmatmul.mubr.f32.gmra.mxu0 %v731
  %v821 = vpop.f32.mrf.mxu0
  %v822 = vadd.f32 0.0, %v821
  %v823 = vpop.f32.mrf.mxu0
  %824 = vmatprep.mubr.f32.mxu0 0.0
  %825 = vmatmul.mubr.f32.gmra.mxu0 %v732
  %v826 = vpop.f32.mrf.mxu0
  %v827 = vadd.f32 0.0, %v826
  %v828 = vpop.f32.mrf.mxu0
  %829 = vmatprep.mubr.f32.mxu0 0.0
  %830 = vmatmul.mubr.f32.gmra.mxu0 %v733
  %v831 = vpop.f32.mrf.mxu0
  %v832 = vadd.f32 0.0, %v831
  %v833 = vpop.f32.mrf.mxu0
  %834 = vmatprep.mubr.f32.mxu0 0.0
  %835 = vmatmul.mubr.f32.gmra.mxu0 %v734
  %v836 = vpop.f32.mrf.mxu0
  %v837 = vadd.f32 0.0, %v836
  %v838 = vpop.f32.mrf.mxu0
  %839 = vmatprep.mubr.f32.mxu0 0.0
  %840 = vmatmul.mubr.f32.gmra.mxu0 %v735
  %v841 = vpop.f32.mrf.mxu0
  %v842 = vadd.f32 0.0, %v841
  %v843 = vpop.f32.mrf.mxu0
  %844 = vmatprep.mubr.f32.mxu0 0.0
  %845 = vmatmul.mubr.f32.gmra.mxu0 %v736
  %v846 = vpop.f32.mrf.mxu0
  %v847 = vadd.f32 0.0, %v846
  %v848 = vpop.f32.mrf.mxu0
  %849 = vmatprep.mubr.f32.mxu0 0.0
  %850 = vmatmul.mubr.f32.gmra.mxu0 %v737
  %v851 = vpop.f32.mrf.mxu0
  %v852 = vadd.f32 0.0, %v851
  %v853 = vpop.f32.mrf.mxu0
  %854 = vmatprep.mubr.f32.mxu0 0.0
  %855 = vmatmul.mubr.f32.gmra.mxu0 %v738
  %v856 = vpop.f32.mrf.mxu0
  %v857 = vadd.f32 0.0, %v856
  %v858 = vpop.f32.mrf.mxu0
  %859 = vmatprep.mubr.f32.mxu0 0.0
  %860 = vmatmul.mubr.f32.gmra.mxu0 %v739
  %v861 = vpop.f32.mrf.mxu0
  %v862 = vadd.f32 0.0, %v861
  %v863 = vpop.f32.mrf.mxu0
  %864 = vmatprep.mubr.f32.mxu0 0.0
  %865 = vmatmul.mubr.f32.gmra.mxu0 %v740
  %v866 = vpop.f32.mrf.mxu0
  %v867 = vadd.f32 0.0, %v866
  %v868 = vpop.f32.mrf.mxu0
  %869 = vmatprep.mubr.f32.mxu0 0.0
  %870 = vmatmul.mubr.f32.gmra.mxu0 %v741
  %v871 = vpop.f32.mrf.mxu0
  %v872 = vadd.f32 0.0, %v871
  %v873 = vpop.f32.mrf.mxu0
  %874 = vmatprep.mubr.f32.mxu0 0.0
  %875 = vmatmul.mubr.f32.gmra.mxu0 %v742
  %v876 = vpop.f32.mrf.mxu0
  %v877 = vadd.f32 0.0, %v876
  %v878 = vpop.f32.mrf.mxu0
  %879 = vmatprep.mubr.f32.mxu0 0.0
  %880 = vmatmul.mubr.f32.gmra.mxu0 %v743
  %v881 = vpop.f32.mrf.mxu0
  %v882 = vadd.f32 0.0, %v881
  %v883 = vpop.f32.mrf.mxu0
  %884 = vmatprep.mubr.f32.mxu0 0.0
  %885 = vmatmul.mubr.f32.gmra.mxu0 %v744
  %v886 = vpop.f32.mrf.mxu0
  %v887 = vadd.f32 0.0, %v886
  %v888 = vpop.f32.mrf.mxu0
  %889 = vdwg.mxu0
  %vm890 = vcmp.gt.f32.partialorder %v812, 0.0
  %vm891 = vcmp.gt.f32.partialorder %v817, 0.0
  %vm892 = vcmp.gt.f32.partialorder %v822, 0.0
  %vm893 = vcmp.gt.f32.partialorder %v827, 0.0
  %vm894 = vcmp.gt.f32.partialorder %v832, 0.0
  %vm895 = vcmp.gt.f32.partialorder %v837, 0.0
  %vm896 = vcmp.gt.f32.partialorder %v842, 0.0
  %vm897 = vcmp.gt.f32.partialorder %v847, 0.0
  %vm898 = vcmp.gt.f32.partialorder %v852, 0.0
  %vm899 = vcmp.gt.f32.partialorder %v857, 0.0
  %vm900 = vcmp.gt.f32.partialorder %v862, 0.0
  %vm901 = vcmp.gt.f32.partialorder %v867, 0.0
  %vm902 = vcmp.gt.f32.partialorder %v872, 0.0
  %vm903 = vcmp.gt.f32.partialorder %v877, 0.0
  %vm904 = vcmp.gt.f32.partialorder %v882, 0.0
  %vm905 = vcmp.gt.f32.partialorder %v887, 0.0
  %v906 = vmin.f32 %v812, 0.0
  %v907 = vmin.f32 %v817, 0.0
  %v908 = vmin.f32 %v822, 0.0
  %v909 = vmin.f32 %v827, 0.0
  %v910 = vmin.f32 %v832, 0.0
  %v911 = vmin.f32 %v837, 0.0
  %v912 = vmin.f32 %v842, 0.0
  %v913 = vmin.f32 %v847, 0.0
  %v914 = vmin.f32 %v852, 0.0
  %v915 = vmin.f32 %v857, 0.0
  %v916 = vmin.f32 %v862, 0.0
  %v917 = vmin.f32 %v867, 0.0
  %v918 = vmin.f32 %v872, 0.0
  %v919 = vmin.f32 %v877, 0.0
  %v920 = vmin.f32 %v882, 0.0
  %v921 = vmin.f32 %v887, 0.0
  %v922 = vmul.f32 %v906, 1.442695
  %v923 = vpow.pop %v922
  %v924 = vmul.f32 %v907, 1.442695
  %v925 = vpow.pop %v924
  %v926 = vmul.f32 %v908, 1.442695
  %v927 = vpow.pop %v926
  %v928 = vmul.f32 %v909, 1.442695
  %v929 = vpow.pop %v928
  %v930 = vmul.f32 %v910, 1.442695
  %v931 = vpow.pop %v930
  %v932 = vmul.f32 %v911, 1.442695
  %v933 = vpow.pop %v932
  %v934 = vmul.f32 %v912, 1.442695
  %v935 = vpow.pop %v934
  %v936 = vmul.f32 %v913, 1.442695
  %v937 = vpow.pop %v936
  %v938 = vmul.f32 %v914, 1.442695
  %v939 = vpow.pop %v938
  %v940 = vmul.f32 %v915, 1.442695
  %v941 = vpow.pop %v940
  %v942 = vmul.f32 %v916, 1.442695
  %v943 = vpow.pop %v942
  %v944 = vmul.f32 %v917, 1.442695
  %v945 = vpow.pop %v944
  %v946 = vmul.f32 %v918, 1.442695
  %v947 = vpow.pop %v946
  %v948 = vmul.f32 %v919, 1.442695
  %v949 = vpow.pop %v948
  %v950 = vmul.f32 %v920, 1.442695
  %v951 = vpow.pop %v950
  %v952 = vmul.f32 %v921, 1.442695
  %v953 = vpow.pop %v952
  %v954 = vsub.f32 %v923, 1.0
  %v955 = vsub.f32 %v925, 1.0
  %v956 = vsub.f32 %v927, 1.0
  %v957 = vsub.f32 %v929, 1.0
  %v958 = vsub.f32 %v931, 1.0
  %v959 = vsub.f32 %v933, 1.0
  %v960 = vsub.f32 %v935, 1.0
  %v961 = vsub.f32 %v937, 1.0
  %v962 = vsub.f32 %v939, 1.0
  %v963 = vsub.f32 %v941, 1.0
  %v964 = vsub.f32 %v943, 1.0
  %v965 = vsub.f32 %v945, 1.0
  %v966 = vsub.f32 %v947, 1.0
  %v967 = vsub.f32 %v949, 1.0
  %v968 = vsub.f32 %v951, 1.0
  %v969 = vsub.f32 %v953, 1.0
  %v970 = vsel %vm890, %v812, %v954
  %v971 = vsel %vm891, %v817, %v955
  %v972 = vsel %vm892, %v822, %v956
  %v973 = vsel %vm893, %v827, %v957
  %v974 = vsel %vm894, %v832, %v958
  %v975 = vsel %vm895, %v837, %v959
  %v976 = vsel %vm896, %v842, %v960
  %v977 = vsel %vm897, %v847, %v961
  %v978 = vsel %vm898, %v852, %v962
  %v979 = vsel %vm899, %v857, %v963
  %v980 = vsel %vm900, %v862, %v964
  %v981 = vsel %vm901, %v867, %v965
  %v982 = vsel %vm902, %v872, %v966
  %v983 = vsel %vm903, %v877, %v967
  %v984 = vsel %vm904, %v882, %v968
  %v985 = vsel %vm905, %v887, %v969
  %v986 = vld [vmem:[%s6] sm:$0xff]
  %v987 = vld [vmem:[%s6 + $0x8] sm:$0xff]
  %v988 = vld [vmem:[%s6 + $0x10] sm:$0xff]
  %v989 = vld [vmem:[%s6 + $0x18] sm:$0xff]
  %v991 = vsel %vm98, %v970, 0
  %v994 = vsel %vm98, %v971, 0
  %v997 = vsel %vm98, %v972, 0
  %v1000 = vsel %vm98, %v973, 0
  %v1003 = vsel %vm98, %v974, 0
  %v1006 = vsel %vm98, %v975, 0
  %v1009 = vsel %vm98, %v976, 0
  %v1012 = vsel %vm98, %v977, 0
  %v1015 = vsel %vm98, %v978, 0
  %v1018 = vsel %vm98, %v979, 0
  %v1021 = vsel %vm98, %v980, 0
  %v1024 = vsel %vm98, %v981, 0
  %v1027 = vsel %vm98, %v982, 0
  %v1030 = vsel %vm98, %v983, 0
  %v1033 = vsel %vm98, %v984, 0
  %v1036 = vsel %vm98, %v985, 0
  %1038 = vmatprep.subr.mxu0 0.0
  %1039 = vmatpush1.msra.mxu0 0.0
  %1040 = vmatprep.subr.mxu0 0.0
  %1041 = vmatpush1.msra.mxu0 0.0
  %1042 = vmatprep.subr.mxu0 0.0
  %1043 = vmatpush1.msra.mxu0 0.0
  %1044 = vmatprep.subr.mxu0 0.0
  %1045 = vmatpush1.msra.mxu0 0.0
  %1046 = vmatprep.subr.mxu0 0.0
  %1047 = vmatpush1.msra.mxu0 0.0
  %1048 = vmatprep.subr.mxu0 0.0
  %1049 = vmatpush1.msra.mxu0 0.0
  %1050 = vmatprep.subr.mxu0 0.0
  %1051 = vmatpush1.msra.mxu0 0.0
  %1052 = vmatprep.subr.mxu0 0.0
  %1053 = vmatpush1.msra.mxu0 0.0
  %1054 = vmatprep.subr.mxu0 0.0
  %1055 = vmatpush1.msra.mxu0 0.0
  %1056 = vmatprep.subr.mxu0 0.0
  %1057 = vmatpush1.msra.mxu0 0.0
  %1058 = vmatprep.subr.mxu0 0.0
  %1059 = vmatpush1.msra.mxu0 0.0
  %1060 = vmatprep.subr.mxu0 0.0
  %1061 = vmatpush1.msra.mxu0 0.0
  %1062 = vmatprep.subr.mxu0 0.0
  %1063 = vmatpush1.msra.mxu0 %v989
  %1064 = vmatprep.subr.mxu0 0.0
  %1065 = vmatpush1.msra.mxu0 %v988
  %1066 = vmatprep.subr.mxu0 0.0
  %1067 = vmatpush1.msra.mxu0 %v987
  %1068 = vmatprep.subr.mxu0 0.0
  %1069 = vmatpush1.msra.mxu0 %v986
  %1070 = vmatprep.subr.mxu0 0.0
  %1071 = vmatpush2.msra.mxu0 0.0
  %1072 = vmatprep.subr.mxu0 0.0
  %1073 = vmatpush2.msra.mxu0 0.0
  %1074 = vmatprep.subr.mxu0 0.0
  %1075 = vmatpush2.msra.mxu0 0.0
  %1076 = vmatprep.subr.mxu0 0.0
  %1077 = vmatpush2.msra.mxu0 0.0
  %1078 = vmatprep.subr.mxu0 0.0
  %1079 = vmatpush2.msra.mxu0 0.0
  %1080 = vmatprep.subr.mxu0 0.0
  %1081 = vmatpush2.msra.mxu0 0.0
  %1082 = vmatprep.subr.mxu0 0.0
  %1083 = vmatpush2.msra.mxu0 0.0
  %1084 = vmatprep.subr.mxu0 0.0
  %1085 = vmatpush2.msra.mxu0 0.0
  %1086 = vmatprep.subr.mxu0 0.0
  %1087 = vmatpush2.msra.mxu0 0.0
  %1088 = vmatprep.subr.mxu0 0.0
  %1089 = vmatpush2.msra.mxu0 0.0
  %1090 = vmatprep.subr.mxu0 0.0
  %1091 = vmatpush2.msra.mxu0 0.0
  %1092 = vmatprep.subr.mxu0 0.0
  %1093 = vmatpush2.msra.mxu0 0.0
  %1094 = vmatprep.subr.mxu0 0.0
  %1095 = vmatpush2.msra.mxu0 0.0
  %1096 = vmatprep.subr.mxu0 0.0
  %1097 = vmatpush2.msra.mxu0 0.0
  %1098 = vmatprep.subr.mxu0 0.0
  %1099 = vmatpush2.msra.mxu0 0.0
  %1100 = vmatprep.subr.mxu0 0.0
  %1101 = vmatpush2.msra.mxu0 0.0
  %1102 = vmatprep.mubr.f32.mxu0 0.0
  %1103 = vmatmul.mubr.f32.gmra.mxu0 %v991
  %v1104 = vpop.f32.mrf.mxu0
  %v1105 = vadd.f32 0.0, %v1104
  %v1106 = vpop.f32.mrf.mxu0
  %1107 = vmatprep.mubr.f32.mxu0 0.0
  %1108 = vmatmul.mubr.f32.gmra.mxu0 %v994
  %v1109 = vpop.f32.mrf.mxu0
  %v1110 = vadd.f32 0.0, %v1109
  %v1111 = vpop.f32.mrf.mxu0
  %1112 = vmatprep.mubr.f32.mxu0 0.0
  %1113 = vmatmul.mubr.f32.gmra.mxu0 %v997
  %v1114 = vpop.f32.mrf.mxu0
  %v1115 = vadd.f32 0.0, %v1114
  %v1116 = vpop.f32.mrf.mxu0
  %1117 = vmatprep.mubr.f32.mxu0 0.0
  %1118 = vmatmul.mubr.f32.gmra.mxu0 %v1000
  %v1119 = vpop.f32.mrf.mxu0
  %v1120 = vadd.f32 0.0, %v1119
  %v1121 = vpop.f32.mrf.mxu0
  %1122 = vmatprep.mubr.f32.mxu0 0.0
  %1123 = vmatmul.mubr.f32.gmra.mxu0 %v1003
  %v1124 = vpop.f32.mrf.mxu0
  %v1125 = vadd.f32 0.0, %v1124
  %v1126 = vpop.f32.mrf.mxu0
  %1127 = vmatprep.mubr.f32.mxu0 0.0
  %1128 = vmatmul.mubr.f32.gmra.mxu0 %v1006
  %v1129 = vpop.f32.mrf.mxu0
  %v1130 = vadd.f32 0.0, %v1129
  %v1131 = vpop.f32.mrf.mxu0
  %1132 = vmatprep.mubr.f32.mxu0 0.0
  %1133 = vmatmul.mubr.f32.gmra.mxu0 %v1009
  %v1134 = vpop.f32.mrf.mxu0
  %v1135 = vadd.f32 0.0, %v1134
  %v1136 = vpop.f32.mrf.mxu0
  %1137 = vmatprep.mubr.f32.mxu0 0.0
  %1138 = vmatmul.mubr.f32.gmra.mxu0 %v1012
  %v1139 = vpop.f32.mrf.mxu0
  %v1140 = vadd.f32 0.0, %v1139
  %v1141 = vpop.f32.mrf.mxu0
  %1142 = vmatprep.mubr.f32.mxu0 0.0
  %1143 = vmatmul.mubr.f32.gmra.mxu0 %v1015
  %v1144 = vpop.f32.mrf.mxu0
  %v1145 = vadd.f32 0.0, %v1144
  %v1146 = vpop.f32.mrf.mxu0
  %1147 = vmatprep.mubr.f32.mxu0 0.0
  %1148 = vmatmul.mubr.f32.gmra.mxu0 %v1018
  %v1149 = vpop.f32.mrf.mxu0
  %v1150 = vadd.f32 0.0, %v1149
  %v1151 = vpop.f32.mrf.mxu0
  %1152 = vmatprep.mubr.f32.mxu0 0.0
  %1153 = vmatmul.mubr.f32.gmra.mxu0 %v1021
  %v1154 = vpop.f32.mrf.mxu0
  %v1155 = vadd.f32 0.0, %v1154
  %v1156 = vpop.f32.mrf.mxu0
  %1157 = vmatprep.mubr.f32.mxu0 0.0
  %1158 = vmatmul.mubr.f32.gmra.mxu0 %v1024
  %v1159 = vpop.f32.mrf.mxu0
  %v1160 = vadd.f32 0.0, %v1159
  %v1161 = vpop.f32.mrf.mxu0
  %1162 = vmatprep.mubr.f32.mxu0 0.0
  %1163 = vmatmul.mubr.f32.gmra.mxu0 %v1027
  %v1164 = vpop.f32.mrf.mxu0
  %v1165 = vadd.f32 0.0, %v1164
  %v1166 = vpop.f32.mrf.mxu0
  %1167 = vmatprep.mubr.f32.mxu0 0.0
  %1168 = vmatmul.mubr.f32.gmra.mxu0 %v1030
  %v1169 = vpop.f32.mrf.mxu0
  %v1170 = vadd.f32 0.0, %v1169
  %v1171 = vpop.f32.mrf.mxu0
  %1172 = vmatprep.mubr.f32.mxu0 0.0
  %1173 = vmatmul.mubr.f32.gmra.mxu0 %v1033
  %v1174 = vpop.f32.mrf.mxu0
  %v1175 = vadd.f32 0.0, %v1174
  %v1176 = vpop.f32.mrf.mxu0
  %1177 = vmatprep.mubr.f32.mxu0 0.0
  %1178 = vmatmul.mubr.f32.gmra.mxu0 %v1036
  %v1179 = vpop.f32.mrf.mxu0
  %v1180 = vadd.f32 0.0, %v1179
  %v1181 = vpop.f32.mrf.mxu0
  %1182 = vdwg.mxu0
  %v1183 = vld [vmem:[%s7] sm:$0x1]
  %v1185 = vlaneseq
  %v1186 = vshrl.u32 %v1185, 7
  %v1187 = vsub.s32 0, %v1186
  %v1188 = vrot.slane %v1183, %v1187
  %v1190 = vmul.f32 %v1105, %v1188
  %v1191 = vmul.f32 %v1110, %v1188
  %v1192 = vmul.f32 %v1115, %v1188
  %v1193 = vmul.f32 %v1120, %v1188
  %v1194 = vmul.f32 %v1125, %v1188
  %v1195 = vmul.f32 %v1130, %v1188
  %v1196 = vmul.f32 %v1135, %v1188
  %v1197 = vmul.f32 %v1140, %v1188
  %v1198 = vmul.f32 %v1145, %v1188
  %v1199 = vmul.f32 %v1150, %v1188
  %v1200 = vmul.f32 %v1155, %v1188
  %v1201 = vmul.f32 %v1160, %v1188
  %v1202 = vmul.f32 %v1165, %v1188
  %v1203 = vmul.f32 %v1170, %v1188
  %v1204 = vmul.f32 %v1175, %v1188
  %v1205 = vmul.f32 %v1180, %v1188
  %vm1206 = vcmask 130048
  %v1207 = vsel %vm1206, %v1190, 0.0
  %1208 = vadd.xlane.f32.xlu0 %v1207
  %v1209 = vpop.xlane.xlu0 %1208
  %v1210 = vsel %vm1206, %v1191, 0.0
  %1211 = vadd.xlane.f32.xlu0 %v1210
  %v1212 = vpop.xlane.xlu0 %1211
  %v1213 = vsel %vm1206, %v1192, 0.0
  %1214 = vadd.xlane.f32.xlu0 %v1213
  %v1215 = vpop.xlane.xlu0 %1214
  %v1216 = vsel %vm1206, %v1193, 0.0
  %1217 = vadd.xlane.f32.xlu0 %v1216
  %v1218 = vpop.xlane.xlu0 %1217
  %v1219 = vsel %vm1206, %v1194, 0.0
  %1220 = vadd.xlane.f32.xlu0 %v1219
  %v1221 = vpop.xlane.xlu0 %1220
  %v1222 = vsel %vm1206, %v1195, 0.0
  %1223 = vadd.xlane.f32.xlu0 %v1222
  %v1224 = vpop.xlane.xlu0 %1223
  %v1225 = vsel %vm1206, %v1196, 0.0
  %1226 = vadd.xlane.f32.xlu0 %v1225
  %v1227 = vpop.xlane.xlu0 %1226
  %v1228 = vsel %vm1206, %v1197, 0.0
  %1229 = vadd.xlane.f32.xlu0 %v1228
  %v1230 = vpop.xlane.xlu0 %1229
  %v1231 = vsel %vm1206, %v1198, 0.0
  %1232 = vadd.xlane.f32.xlu0 %v1231
  %v1233 = vpop.xlane.xlu0 %1232
  %v1234 = vsel %vm1206, %v1199, 0.0
  %1235 = vadd.xlane.f32.xlu0 %v1234
  %v1236 = vpop.xlane.xlu0 %1235
  %v1237 = vsel %vm1206, %v1200, 0.0
  %1238 = vadd.xlane.f32.xlu0 %v1237
  %v1239 = vpop.xlane.xlu0 %1238
  %v1240 = vsel %vm1206, %v1201, 0.0
  %1241 = vadd.xlane.f32.xlu0 %v1240
  %v1242 = vpop.xlane.xlu0 %1241
  %v1243 = vsel %vm1206, %v1202, 0.0
  %1244 = vadd.xlane.f32.xlu0 %v1243
  %v1245 = vpop.xlane.xlu0 %1244
  %v1246 = vsel %vm1206, %v1203, 0.0
  %1247 = vadd.xlane.f32.xlu0 %v1246
  %v1248 = vpop.xlane.xlu0 %1247
  %v1249 = vsel %vm1206, %v1204, 0.0
  %1250 = vadd.xlane.f32.xlu0 %v1249
  %v1251 = vpop.xlane.xlu0 %1250
  %v1252 = vsel %vm1206, %v1205, 0.0
  %1253 = vadd.xlane.f32.xlu0 %v1252
  %v1254 = vpop.xlane.xlu0 %1253
  %v1255 = vld [vmem:[%s8] sm:$0x1]
  %v1257 = vsel %vm1206, %v1255, 0
  %v1260 = vsel %vm1206, %v1105, 0
  %v1263 = vsel %vm1206, %v1110, 0
  %v1266 = vsel %vm1206, %v1115, 0
  %v1269 = vsel %vm1206, %v1120, 0
  %v1272 = vsel %vm1206, %v1125, 0
  %v1275 = vsel %vm1206, %v1130, 0
  %v1278 = vsel %vm1206, %v1135, 0
  %v1281 = vsel %vm1206, %v1140, 0
  %v1284 = vsel %vm1206, %v1145, 0
  %v1287 = vsel %vm1206, %v1150, 0
  %v1290 = vsel %vm1206, %v1155, 0
  %v1293 = vsel %vm1206, %v1160, 0
  %v1296 = vsel %vm1206, %v1165, 0
  %v1299 = vsel %vm1206, %v1170, 0
  %v1302 = vsel %vm1206, %v1175, 0
  %v1305 = vsel %vm1206, %v1180, 0
  %1307 = vmatprep.subr.mxu0 0.0
  %1308 = vmatpush1.xpose.msra.mxu0 %v1305
  %1309 = vmatprep.subr.mxu0 0.0
  %1310 = vmatpush1.xpose.msra.mxu0 %v1302
  %1311 = vmatprep.subr.mxu0 0.0
  %1312 = vmatpush1.xpose.msra.mxu0 %v1299
  %1313 = vmatprep.subr.mxu0 0.0
  %1314 = vmatpush1.xpose.msra.mxu0 %v1296
  %1315 = vmatprep.subr.mxu0 0.0
  %1316 = vmatpush1.xpose.msra.mxu0 %v1293
  %1317 = vmatprep.subr.mxu0 0.0
  %1318 = vmatpush1.xpose.msra.mxu0 %v1290
  %1319 = vmatprep.subr.mxu0 0.0
  %1320 = vmatpush1.xpose.msra.mxu0 %v1287
  %1321 = vmatprep.subr.mxu0 0.0
  %1322 = vmatpush1.xpose.msra.mxu0 %v1284
  %1323 = vmatprep.subr.mxu0 0.0
  %1324 = vmatpush1.xpose.msra.mxu0 %v1281
  %1325 = vmatprep.subr.mxu0 0.0
  %1326 = vmatpush1.xpose.msra.mxu0 %v1278
  %1327 = vmatprep.subr.mxu0 0.0
  %1328 = vmatpush1.xpose.msra.mxu0 %v1275
  %1329 = vmatprep.subr.mxu0 0.0
  %1330 = vmatpush1.xpose.msra.mxu0 %v1272
  %1331 = vmatprep.subr.mxu0 0.0
  %1332 = vmatpush1.xpose.msra.mxu0 %v1269
  %1333 = vmatprep.subr.mxu0 0.0
  %1334 = vmatpush1.xpose.msra.mxu0 %v1266
  %1335 = vmatprep.subr.mxu0 0.0
  %1336 = vmatpush1.xpose.msra.mxu0 %v1263
  %1337 = vmatprep.subr.mxu0 0.0
  %1338 = vmatpush1.xpose.msra.mxu0 %v1260
  %1339 = vmatprep.subr.mxu0 0.0
  %1340 = vmatpush2.xpose.msra.mxu0 0.0
  %1341 = vmatprep.subr.mxu0 0.0
  %1342 = vmatpush2.xpose.msra.mxu0 0.0
  %1343 = vmatprep.subr.mxu0 0.0
  %1344 = vmatpush2.xpose.msra.mxu0 0.0
  %1345 = vmatprep.subr.mxu0 0.0
  %1346 = vmatpush2.xpose.msra.mxu0 0.0
  %1347 = vmatprep.subr.mxu0 0.0
  %1348 = vmatpush2.xpose.msra.mxu0 0.0
  %1349 = vmatprep.subr.mxu0 0.0
  %1350 = vmatpush2.xpose.msra.mxu0 0.0
  %1351 = vmatprep.subr.mxu0 0.0
  %1352 = vmatpush2.xpose.msra.mxu0 0.0
  %1353 = vmatprep.subr.mxu0 0.0
  %1354 = vmatpush2.xpose.msra.mxu0 0.0
  %1355 = vmatprep.subr.mxu0 0.0
  %1356 = vmatpush2.xpose.msra.mxu0 0.0
  %1357 = vmatprep.subr.mxu0 0.0
  %1358 = vmatpush2.xpose.msra.mxu0 0.0
  %1359 = vmatprep.subr.mxu0 0.0
  %1360 = vmatpush2.xpose.msra.mxu0 0.0
  %1361 = vmatprep.subr.mxu0 0.0
  %1362 = vmatpush2.xpose.msra.mxu0 0.0
  %1363 = vmatprep.subr.mxu0 0.0
  %1364 = vmatpush2.xpose.msra.mxu0 0.0
  %1365 = vmatprep.subr.mxu0 0.0
  %1366 = vmatpush2.xpose.msra.mxu0 0.0
  %1367 = vmatprep.subr.mxu0 0.0
  %1368 = vmatpush2.xpose.msra.mxu0 0.0
  %1369 = vmatprep.subr.mxu0 0.0
  %1370 = vmatpush2.xpose.msra.mxu0 0.0
  %1371 = vmatprep.mubr.f32.mxu0 0.0
  %1372 = vmatmul.mubr.f32.gmra.mxu0 %v1257
  %v1373 = vpop.f32.mrf.mxu0
  %v1374 = vadd.f32 0.0, %v1373
  %v1375 = vpop.f32.mrf.mxu0
  %1376 = vdwg.mxu0
  %v1377 = vlaneseq
  %v1378 = vshrl.u32 %v1377, 7
  %v1379 = vsub.s32 0, %v1378
  %v1380 = vrot.slane %v1374, %v1379
  %v1381 = vadd.f32 %v1209, %v1380
  %v1382 = vadd.f32 %v1212, %v1380
  %v1383 = vadd.f32 %v1215, %v1380
  %v1384 = vadd.f32 %v1218, %v1380
  %v1385 = vadd.f32 %v1221, %v1380
  %v1386 = vadd.f32 %v1224, %v1380
  %v1387 = vadd.f32 %v1227, %v1380
  %v1388 = vadd.f32 %v1230, %v1380
  %v1389 = vadd.f32 %v1233, %v1380
  %v1390 = vadd.f32 %v1236, %v1380
  %v1391 = vadd.f32 %v1239, %v1380
  %v1392 = vadd.f32 %v1242, %v1380
  %v1393 = vadd.f32 %v1245, %v1380
  %v1394 = vadd.f32 %v1248, %v1380
  %v1395 = vadd.f32 %v1251, %v1380
  %v1396 = vadd.f32 %v1254, %v1380
  %v1397 = vmul.f32 %v1381, %v62
  %v1398 = vmul.f32 %v1382, %v63
  %v1399 = vmul.f32 %v1383, %v64
  %v1400 = vmul.f32 %v1384, %v65
  %v1401 = vmul.f32 %v1385, %v66
  %v1402 = vmul.f32 %v1386, %v67
  %v1403 = vmul.f32 %v1387, %v68
  %v1404 = vmul.f32 %v1388, %v69
  %v1405 = vmul.f32 %v1389, %v70
  %v1406 = vmul.f32 %v1390, %v71
  %v1407 = vmul.f32 %v1391, %v72
  %v1408 = vmul.f32 %v1392, %v73
  %v1409 = vmul.f32 %v1393, %v74
  %v1410 = vmul.f32 %v1394, %v75
  %v1411 = vmul.f32 %v1395, %v76
  %v1412 = vmul.f32 %v1396, %v77
  %vm1413 = vcmp.gt.f32.partialorder %v1397, 0.0
  %vm1414 = vcmp.gt.f32.partialorder %v1398, 0.0
  %vm1415 = vcmp.gt.f32.partialorder %v1399, 0.0
  %vm1416 = vcmp.gt.f32.partialorder %v1400, 0.0
  %vm1417 = vcmp.gt.f32.partialorder %v1401, 0.0
  %vm1418 = vcmp.gt.f32.partialorder %v1402, 0.0
  %vm1419 = vcmp.gt.f32.partialorder %v1403, 0.0
  %vm1420 = vcmp.gt.f32.partialorder %v1404, 0.0
  %vm1421 = vcmp.gt.f32.partialorder %v1405, 0.0
  %vm1422 = vcmp.gt.f32.partialorder %v1406, 0.0
  %vm1423 = vcmp.gt.f32.partialorder %v1407, 0.0
  %vm1424 = vcmp.gt.f32.partialorder %v1408, 0.0
  %vm1425 = vcmp.gt.f32.partialorder %v1409, 0.0
  %vm1426 = vcmp.gt.f32.partialorder %v1410, 0.0
  %vm1427 = vcmp.gt.f32.partialorder %v1411, 0.0
  %vm1428 = vcmp.gt.f32.partialorder %v1412, 0.0
  %v1429 = vmul.f32 %v1397, 0.2
  %v1430 = vmul.f32 %v1398, 0.2
  %v1431 = vmul.f32 %v1399, 0.2
  %v1432 = vmul.f32 %v1400, 0.2
  %v1433 = vmul.f32 %v1401, 0.2
  %v1434 = vmul.f32 %v1402, 0.2
  %v1435 = vmul.f32 %v1403, 0.2
  %v1436 = vmul.f32 %v1404, 0.2
  %v1437 = vmul.f32 %v1405, 0.2
  %v1438 = vmul.f32 %v1406, 0.2
  %v1439 = vmul.f32 %v1407, 0.2
  %v1440 = vmul.f32 %v1408, 0.2
  %v1441 = vmul.f32 %v1409, 0.2
  %v1442 = vmul.f32 %v1410, 0.2
  %v1443 = vmul.f32 %v1411, 0.2
  %v1444 = vmul.f32 %v1412, 0.2
  %v1445 = vsel %vm1413, %v1397, %v1429
  %v1446 = vsel %vm1414, %v1398, %v1430
  %v1447 = vsel %vm1415, %v1399, %v1431
  %v1448 = vsel %vm1416, %v1400, %v1432
  %v1449 = vsel %vm1417, %v1401, %v1433
  %v1450 = vsel %vm1418, %v1402, %v1434
  %v1451 = vsel %vm1419, %v1403, %v1435
  %v1452 = vsel %vm1420, %v1404, %v1436
  %v1453 = vsel %vm1421, %v1405, %v1437
  %v1454 = vsel %vm1422, %v1406, %v1438
  %v1455 = vsel %vm1423, %v1407, %v1439
  %v1456 = vsel %vm1424, %v1408, %v1440
  %v1457 = vsel %vm1425, %v1409, %v1441
  %v1458 = vsel %vm1426, %v1410, %v1442
  %v1459 = vsel %vm1427, %v1411, %v1443
  %v1460 = vsel %vm1428, %v1412, %v1444
  %v1461 = vsel %vm569, %v1445, -9e+15
  %v1462 = vsel %vm570, %v1446, -9e+15
  %v1463 = vsel %vm571, %v1447, -9e+15
  %v1464 = vsel %vm572, %v1448, -9e+15
  %v1465 = vsel %vm573, %v1449, -9e+15
  %v1466 = vsel %vm574, %v1450, -9e+15
  %v1467 = vsel %vm575, %v1451, -9e+15
  %v1468 = vsel %vm576, %v1452, -9e+15
  %v1469 = vsel %vm577, %v1453, -9e+15
  %v1470 = vsel %vm578, %v1454, -9e+15
  %v1471 = vsel %vm579, %v1455, -9e+15
  %v1472 = vsel %vm580, %v1456, -9e+15
  %v1473 = vsel %vm581, %v1457, -9e+15
  %v1474 = vsel %vm582, %v1458, -9e+15
  %v1475 = vsel %vm583, %v1459, -9e+15
  %v1476 = vsel %vm584, %v1460, -9e+15
  %1477 = vmax.xlane.f32.xlu0 %v1461
  %v1478 = vpop.xlane.xlu0 %1477
  %1479 = vmax.xlane.f32.xlu0 %v1462
  %v1480 = vpop.xlane.xlu0 %1479
  %1481 = vmax.xlane.f32.xlu0 %v1463
  %v1482 = vpop.xlane.xlu0 %1481
  %1483 = vmax.xlane.f32.xlu0 %v1464
  %v1484 = vpop.xlane.xlu0 %1483
  %1485 = vmax.xlane.f32.xlu0 %v1465
  %v1486 = vpop.xlane.xlu0 %1485
  %1487 = vmax.xlane.f32.xlu0 %v1466
  %v1488 = vpop.xlane.xlu0 %1487
  %1489 = vmax.xlane.f32.xlu0 %v1467
  %v1490 = vpop.xlane.xlu0 %1489
  %1491 = vmax.xlane.f32.xlu0 %v1468
  %v1492 = vpop.xlane.xlu0 %1491
  %1493 = vmax.xlane.f32.xlu0 %v1469
  %v1494 = vpop.xlane.xlu0 %1493
  %1495 = vmax.xlane.f32.xlu0 %v1470
  %v1496 = vpop.xlane.xlu0 %1495
  %1497 = vmax.xlane.f32.xlu0 %v1471
  %v1498 = vpop.xlane.xlu0 %1497
  %1499 = vmax.xlane.f32.xlu0 %v1472
  %v1500 = vpop.xlane.xlu0 %1499
  %1501 = vmax.xlane.f32.xlu0 %v1473
  %v1502 = vpop.xlane.xlu0 %1501
  %1503 = vmax.xlane.f32.xlu0 %v1474
  %v1504 = vpop.xlane.xlu0 %1503
  %1505 = vmax.xlane.f32.xlu0 %v1475
  %v1506 = vpop.xlane.xlu0 %1505
  %1507 = vmax.xlane.f32.xlu0 %v1476
  %v1508 = vpop.xlane.xlu0 %1507
  %v1509 = vsub.f32 %v1461, %v1478
  %v1510 = vsub.f32 %v1462, %v1480
  %v1511 = vsub.f32 %v1463, %v1482
  %v1512 = vsub.f32 %v1464, %v1484
  %v1513 = vsub.f32 %v1465, %v1486
  %v1514 = vsub.f32 %v1466, %v1488
  %v1515 = vsub.f32 %v1467, %v1490
  %v1516 = vsub.f32 %v1468, %v1492
  %v1517 = vsub.f32 %v1469, %v1494
  %v1518 = vsub.f32 %v1470, %v1496
  %v1519 = vsub.f32 %v1471, %v1498
  %v1520 = vsub.f32 %v1472, %v1500
  %v1521 = vsub.f32 %v1473, %v1502
  %v1522 = vsub.f32 %v1474, %v1504
  %v1523 = vsub.f32 %v1475, %v1506
  %v1524 = vsub.f32 %v1476, %v1508
  %v1525 = vmul.f32 %v1509, 1.442695
  %v1526 = vpow.pop %v1525
  %v1527 = vmul.f32 %v1510, 1.442695
  %v1528 = vpow.pop %v1527
  %v1529 = vmul.f32 %v1511, 1.442695
  %v1530 = vpow.pop %v1529
  %v1531 = vmul.f32 %v1512, 1.442695
  %v1532 = vpow.pop %v1531
  %v1533 = vmul.f32 %v1513, 1.442695
  %v1534 = vpow.pop %v1533
  %v1535 = vmul.f32 %v1514, 1.442695
  %v1536 = vpow.pop %v1535
  %v1537 = vmul.f32 %v1515, 1.442695
  %v1538 = vpow.pop %v1537
  %v1539 = vmul.f32 %v1516, 1.442695
  %v1540 = vpow.pop %v1539
  %v1541 = vmul.f32 %v1517, 1.442695
  %v1542 = vpow.pop %v1541
  %v1543 = vmul.f32 %v1518, 1.442695
  %v1544 = vpow.pop %v1543
  %v1545 = vmul.f32 %v1519, 1.442695
  %v1546 = vpow.pop %v1545
  %v1547 = vmul.f32 %v1520, 1.442695
  %v1548 = vpow.pop %v1547
  %v1549 = vmul.f32 %v1521, 1.442695
  %v1550 = vpow.pop %v1549
  %v1551 = vmul.f32 %v1522, 1.442695
  %v1552 = vpow.pop %v1551
  %v1553 = vmul.f32 %v1523, 1.442695
  %v1554 = vpow.pop %v1553
  %v1555 = vmul.f32 %v1524, 1.442695
  %v1556 = vpow.pop %v1555
  %1557 = vadd.xlane.f32.xlu0 %v1526
  %v1558 = vpop.xlane.xlu0 %1557
  %1559 = vadd.xlane.f32.xlu0 %v1528
  %v1560 = vpop.xlane.xlu0 %1559
  %1561 = vadd.xlane.f32.xlu0 %v1530
  %v1562 = vpop.xlane.xlu0 %1561
  %1563 = vadd.xlane.f32.xlu0 %v1532
  %v1564 = vpop.xlane.xlu0 %1563
  %1565 = vadd.xlane.f32.xlu0 %v1534
  %v1566 = vpop.xlane.xlu0 %1565
  %1567 = vadd.xlane.f32.xlu0 %v1536
  %v1568 = vpop.xlane.xlu0 %1567
  %1569 = vadd.xlane.f32.xlu0 %v1538
  %v1570 = vpop.xlane.xlu0 %1569
  %1571 = vadd.xlane.f32.xlu0 %v1540
  %v1572 = vpop.xlane.xlu0 %1571
  %1573 = vadd.xlane.f32.xlu0 %v1542
  %v1574 = vpop.xlane.xlu0 %1573
  %1575 = vadd.xlane.f32.xlu0 %v1544
  %v1576 = vpop.xlane.xlu0 %1575
  %1577 = vadd.xlane.f32.xlu0 %v1546
  %v1578 = vpop.xlane.xlu0 %1577
  %1579 = vadd.xlane.f32.xlu0 %v1548
  %v1580 = vpop.xlane.xlu0 %1579
  %1581 = vadd.xlane.f32.xlu0 %v1550
  %v1582 = vpop.xlane.xlu0 %1581
  %1583 = vadd.xlane.f32.xlu0 %v1552
  %v1584 = vpop.xlane.xlu0 %1583
  %1585 = vadd.xlane.f32.xlu0 %v1554
  %v1586 = vpop.xlane.xlu0 %1585
  %1587 = vadd.xlane.f32.xlu0 %v1556
  %v1588 = vpop.xlane.xlu0 %1587
  %v1589 = vrcp.pop %v1558
  %v1590 = vrcp.pop %v1560
  %v1591 = vrcp.pop %v1562
  %v1592 = vrcp.pop %v1564
  %v1593 = vrcp.pop %v1566
  %v1594 = vrcp.pop %v1568
  %v1595 = vrcp.pop %v1570
  %v1596 = vrcp.pop %v1572
  %v1597 = vrcp.pop %v1574
  %v1598 = vrcp.pop %v1576
  %v1599 = vrcp.pop %v1578
  %v1600 = vrcp.pop %v1580
  %v1601 = vrcp.pop %v1582
  %v1602 = vrcp.pop %v1584
  %v1603 = vrcp.pop %v1586
  %v1604 = vrcp.pop %v1588
  %v1605 = vmul.f32 %v1526, %v1589
  %v1606 = vmul.f32 %v1528, %v1590
  %v1607 = vmul.f32 %v1530, %v1591
  %v1608 = vmul.f32 %v1532, %v1592
  %v1609 = vmul.f32 %v1534, %v1593
  %v1610 = vmul.f32 %v1536, %v1594
  %v1611 = vmul.f32 %v1538, %v1595
  %v1612 = vmul.f32 %v1540, %v1596
  %v1613 = vmul.f32 %v1542, %v1597
  %v1614 = vmul.f32 %v1544, %v1598
  %v1615 = vmul.f32 %v1546, %v1599
  %v1616 = vmul.f32 %v1548, %v1600
  %v1617 = vmul.f32 %v1550, %v1601
  %v1618 = vmul.f32 %v1552, %v1602
  %v1619 = vmul.f32 %v1554, %v1603
  %v1620 = vmul.f32 %v1556, %v1604
  %1621 = vmatprep.subr.mxu0 0.0
  %1622 = vmatpush1.msra.mxu0 %v1180
  %1623 = vmatprep.subr.mxu0 0.0
  %1624 = vmatpush1.msra.mxu0 %v1175
  %1625 = vmatprep.subr.mxu0 0.0
  %1626 = vmatpush1.msra.mxu0 %v1170
  %1627 = vmatprep.subr.mxu0 0.0
  %1628 = vmatpush1.msra.mxu0 %v1165
  %1629 = vmatprep.subr.mxu0 0.0
  %1630 = vmatpush1.msra.mxu0 %v1160
  %1631 = vmatprep.subr.mxu0 0.0
  %1632 = vmatpush1.msra.mxu0 %v1155
  %1633 = vmatprep.subr.mxu0 0.0
  %1634 = vmatpush1.msra.mxu0 %v1150
  %1635 = vmatprep.subr.mxu0 0.0
  %1636 = vmatpush1.msra.mxu0 %v1145
  %1637 = vmatprep.subr.mxu0 0.0
  %1638 = vmatpush1.msra.mxu0 %v1140
  %1639 = vmatprep.subr.mxu0 0.0
  %1640 = vmatpush1.msra.mxu0 %v1135
  %1641 = vmatprep.subr.mxu0 0.0
  %1642 = vmatpush1.msra.mxu0 %v1130
  %1643 = vmatprep.subr.mxu0 0.0
  %1644 = vmatpush1.msra.mxu0 %v1125
  %1645 = vmatprep.subr.mxu0 0.0
  %1646 = vmatpush1.msra.mxu0 %v1120
  %1647 = vmatprep.subr.mxu0 0.0
  %1648 = vmatpush1.msra.mxu0 %v1115
  %1649 = vmatprep.subr.mxu0 0.0
  %1650 = vmatpush1.msra.mxu0 %v1110
  %1651 = vmatprep.subr.mxu0 0.0
  %1652 = vmatpush1.msra.mxu0 %v1105
  %1653 = vmatprep.subr.mxu0 0.0
  %1654 = vmatpush2.msra.mxu0 0.0
  %1655 = vmatprep.subr.mxu0 0.0
  %1656 = vmatpush2.msra.mxu0 0.0
  %1657 = vmatprep.subr.mxu0 0.0
  %1658 = vmatpush2.msra.mxu0 0.0
  %1659 = vmatprep.subr.mxu0 0.0
  %1660 = vmatpush2.msra.mxu0 0.0
  %1661 = vmatprep.subr.mxu0 0.0
  %1662 = vmatpush2.msra.mxu0 0.0
  %1663 = vmatprep.subr.mxu0 0.0
  %1664 = vmatpush2.msra.mxu0 0.0
  %1665 = vmatprep.subr.mxu0 0.0
  %1666 = vmatpush2.msra.mxu0 0.0
  %1667 = vmatprep.subr.mxu0 0.0
  %1668 = vmatpush2.msra.mxu0 0.0
  %1669 = vmatprep.subr.mxu0 0.0
  %1670 = vmatpush2.msra.mxu0 0.0
  %1671 = vmatprep.subr.mxu0 0.0
  %1672 = vmatpush2.msra.mxu0 0.0
  %1673 = vmatprep.subr.mxu0 0.0
  %1674 = vmatpush2.msra.mxu0 0.0
  %1675 = vmatprep.subr.mxu0 0.0
  %1676 = vmatpush2.msra.mxu0 0.0
  %1677 = vmatprep.subr.mxu0 0.0
  %1678 = vmatpush2.msra.mxu0 0.0
  %1679 = vmatprep.subr.mxu0 0.0
  %1680 = vmatpush2.msra.mxu0 0.0
  %1681 = vmatprep.subr.mxu0 0.0
  %1682 = vmatpush2.msra.mxu0 0.0
  %1683 = vmatprep.subr.mxu0 0.0
  %1684 = vmatpush2.msra.mxu0 0.0
  %1685 = vmatprep.mubr.f32.mxu0 0.0
  %1686 = vmatmul.mubr.f32.gmra.mxu0 %v1605
  %v1687 = vpop.f32.mrf.mxu0
  %v1688 = vadd.f32 0.0, %v1687
  %v1689 = vpop.f32.mrf.mxu0
  %1690 = vmatprep.mubr.f32.mxu0 0.0
  %1691 = vmatmul.mubr.f32.gmra.mxu0 %v1606
  %v1692 = vpop.f32.mrf.mxu0
  %v1693 = vadd.f32 0.0, %v1692
  %v1694 = vpop.f32.mrf.mxu0
  %1695 = vmatprep.mubr.f32.mxu0 0.0
  %1696 = vmatmul.mubr.f32.gmra.mxu0 %v1607
  %v1697 = vpop.f32.mrf.mxu0
  %v1698 = vadd.f32 0.0, %v1697
  %v1699 = vpop.f32.mrf.mxu0
  %1700 = vmatprep.mubr.f32.mxu0 0.0
  %1701 = vmatmul.mubr.f32.gmra.mxu0 %v1608
  %v1702 = vpop.f32.mrf.mxu0
  %v1703 = vadd.f32 0.0, %v1702
  %v1704 = vpop.f32.mrf.mxu0
  %1705 = vmatprep.mubr.f32.mxu0 0.0
  %1706 = vmatmul.mubr.f32.gmra.mxu0 %v1609
  %v1707 = vpop.f32.mrf.mxu0
  %v1708 = vadd.f32 0.0, %v1707
  %v1709 = vpop.f32.mrf.mxu0
  %1710 = vmatprep.mubr.f32.mxu0 0.0
  %1711 = vmatmul.mubr.f32.gmra.mxu0 %v1610
  %v1712 = vpop.f32.mrf.mxu0
  %v1713 = vadd.f32 0.0, %v1712
  %v1714 = vpop.f32.mrf.mxu0
  %1715 = vmatprep.mubr.f32.mxu0 0.0
  %1716 = vmatmul.mubr.f32.gmra.mxu0 %v1611
  %v1717 = vpop.f32.mrf.mxu0
  %v1718 = vadd.f32 0.0, %v1717
  %v1719 = vpop.f32.mrf.mxu0
  %1720 = vmatprep.mubr.f32.mxu0 0.0
  %1721 = vmatmul.mubr.f32.gmra.mxu0 %v1612
  %v1722 = vpop.f32.mrf.mxu0
  %v1723 = vadd.f32 0.0, %v1722
  %v1724 = vpop.f32.mrf.mxu0
  %1725 = vmatprep.mubr.f32.mxu0 0.0
  %1726 = vmatmul.mubr.f32.gmra.mxu0 %v1613
  %v1727 = vpop.f32.mrf.mxu0
  %v1728 = vadd.f32 0.0, %v1727
  %v1729 = vpop.f32.mrf.mxu0
  %1730 = vmatprep.mubr.f32.mxu0 0.0
  %1731 = vmatmul.mubr.f32.gmra.mxu0 %v1614
  %v1732 = vpop.f32.mrf.mxu0
  %v1733 = vadd.f32 0.0, %v1732
  %v1734 = vpop.f32.mrf.mxu0
  %1735 = vmatprep.mubr.f32.mxu0 0.0
  %1736 = vmatmul.mubr.f32.gmra.mxu0 %v1615
  %v1737 = vpop.f32.mrf.mxu0
  %v1738 = vadd.f32 0.0, %v1737
  %v1739 = vpop.f32.mrf.mxu0
  %1740 = vmatprep.mubr.f32.mxu0 0.0
  %1741 = vmatmul.mubr.f32.gmra.mxu0 %v1616
  %v1742 = vpop.f32.mrf.mxu0
  %v1743 = vadd.f32 0.0, %v1742
  %v1744 = vpop.f32.mrf.mxu0
  %1745 = vmatprep.mubr.f32.mxu0 0.0
  %1746 = vmatmul.mubr.f32.gmra.mxu0 %v1617
  %v1747 = vpop.f32.mrf.mxu0
  %v1748 = vadd.f32 0.0, %v1747
  %v1749 = vpop.f32.mrf.mxu0
  %1750 = vmatprep.mubr.f32.mxu0 0.0
  %1751 = vmatmul.mubr.f32.gmra.mxu0 %v1618
  %v1752 = vpop.f32.mrf.mxu0
  %v1753 = vadd.f32 0.0, %v1752
  %v1754 = vpop.f32.mrf.mxu0
  %1755 = vmatprep.mubr.f32.mxu0 0.0
  %1756 = vmatmul.mubr.f32.gmra.mxu0 %v1619
  %v1757 = vpop.f32.mrf.mxu0
  %v1758 = vadd.f32 0.0, %v1757
  %v1759 = vpop.f32.mrf.mxu0
  %1760 = vmatprep.mubr.f32.mxu0 0.0
  %1761 = vmatmul.mubr.f32.gmra.mxu0 %v1620
  %v1762 = vpop.f32.mrf.mxu0
  %v1763 = vadd.f32 0.0, %v1762
  %v1764 = vpop.f32.mrf.mxu0
  %1765 = vdwg.mxu0
  %vm1766 = vcmp.gt.f32.partialorder %v1688, 0.0
  %vm1767 = vcmp.gt.f32.partialorder %v1693, 0.0
  %vm1768 = vcmp.gt.f32.partialorder %v1698, 0.0
  %vm1769 = vcmp.gt.f32.partialorder %v1703, 0.0
  %vm1770 = vcmp.gt.f32.partialorder %v1708, 0.0
  %vm1771 = vcmp.gt.f32.partialorder %v1713, 0.0
  %vm1772 = vcmp.gt.f32.partialorder %v1718, 0.0
  %vm1773 = vcmp.gt.f32.partialorder %v1723, 0.0
  %vm1774 = vcmp.gt.f32.partialorder %v1728, 0.0
  %vm1775 = vcmp.gt.f32.partialorder %v1733, 0.0
  %vm1776 = vcmp.gt.f32.partialorder %v1738, 0.0
  %vm1777 = vcmp.gt.f32.partialorder %v1743, 0.0
  %vm1778 = vcmp.gt.f32.partialorder %v1748, 0.0
  %vm1779 = vcmp.gt.f32.partialorder %v1753, 0.0
  %vm1780 = vcmp.gt.f32.partialorder %v1758, 0.0
  %vm1781 = vcmp.gt.f32.partialorder %v1763, 0.0
  %v1782 = vmin.f32 %v1688, 0.0
  %v1783 = vmin.f32 %v1693, 0.0
  %v1784 = vmin.f32 %v1698, 0.0
  %v1785 = vmin.f32 %v1703, 0.0
  %v1786 = vmin.f32 %v1708, 0.0
  %v1787 = vmin.f32 %v1713, 0.0
  %v1788 = vmin.f32 %v1718, 0.0
  %v1789 = vmin.f32 %v1723, 0.0
  %v1790 = vmin.f32 %v1728, 0.0
  %v1791 = vmin.f32 %v1733, 0.0
  %v1792 = vmin.f32 %v1738, 0.0
  %v1793 = vmin.f32 %v1743, 0.0
  %v1794 = vmin.f32 %v1748, 0.0
  %v1795 = vmin.f32 %v1753, 0.0
  %v1796 = vmin.f32 %v1758, 0.0
  %v1797 = vmin.f32 %v1763, 0.0
  %v1798 = vmul.f32 %v1782, 1.442695
  %v1799 = vpow.pop %v1798
  %v1800 = vmul.f32 %v1783, 1.442695
  %v1801 = vpow.pop %v1800
  %v1802 = vmul.f32 %v1784, 1.442695
  %v1803 = vpow.pop %v1802
  %v1804 = vmul.f32 %v1785, 1.442695
  %v1805 = vpow.pop %v1804
  %v1806 = vmul.f32 %v1786, 1.442695
  %v1807 = vpow.pop %v1806
  %v1808 = vmul.f32 %v1787, 1.442695
  %v1809 = vpow.pop %v1808
  %v1810 = vmul.f32 %v1788, 1.442695
  %v1811 = vpow.pop %v1810
  %v1812 = vmul.f32 %v1789, 1.442695
  %v1813 = vpow.pop %v1812
  %v1814 = vmul.f32 %v1790, 1.442695
  %v1815 = vpow.pop %v1814
  %v1816 = vmul.f32 %v1791, 1.442695
  %v1817 = vpow.pop %v1816
  %v1818 = vmul.f32 %v1792, 1.442695
  %v1819 = vpow.pop %v1818
  %v1820 = vmul.f32 %v1793, 1.442695
  %v1821 = vpow.pop %v1820
  %v1822 = vmul.f32 %v1794, 1.442695
  %v1823 = vpow.pop %v1822
  %v1824 = vmul.f32 %v1795, 1.442695
  %v1825 = vpow.pop %v1824
  %v1826 = vmul.f32 %v1796, 1.442695
  %v1827 = vpow.pop %v1826
  %v1828 = vmul.f32 %v1797, 1.442695
  %v1829 = vpow.pop %v1828
  %v1830 = vsub.f32 %v1799, 1.0
  %v1831 = vsub.f32 %v1801, 1.0
  %v1832 = vsub.f32 %v1803, 1.0
  %v1833 = vsub.f32 %v1805, 1.0
  %v1834 = vsub.f32 %v1807, 1.0
  %v1835 = vsub.f32 %v1809, 1.0
  %v1836 = vsub.f32 %v1811, 1.0
  %v1837 = vsub.f32 %v1813, 1.0
  %v1838 = vsub.f32 %v1815, 1.0
  %v1839 = vsub.f32 %v1817, 1.0
  %v1840 = vsub.f32 %v1819, 1.0
  %v1841 = vsub.f32 %v1821, 1.0
  %v1842 = vsub.f32 %v1823, 1.0
  %v1843 = vsub.f32 %v1825, 1.0
  %v1844 = vsub.f32 %v1827, 1.0
  %v1845 = vsub.f32 %v1829, 1.0
  %v1846 = vsel %vm1766, %v1688, %v1830
  %v1847 = vsel %vm1767, %v1693, %v1831
  %v1848 = vsel %vm1768, %v1698, %v1832
  %v1849 = vsel %vm1769, %v1703, %v1833
  %v1850 = vsel %vm1770, %v1708, %v1834
  %v1851 = vsel %vm1771, %v1713, %v1835
  %v1852 = vsel %vm1772, %v1718, %v1836
  %v1853 = vsel %vm1773, %v1723, %v1837
  %v1854 = vsel %vm1774, %v1728, %v1838
  %v1855 = vsel %vm1775, %v1733, %v1839
  %v1856 = vsel %vm1776, %v1738, %v1840
  %v1857 = vsel %vm1777, %v1743, %v1841
  %v1858 = vsel %vm1778, %v1748, %v1842
  %v1859 = vsel %vm1779, %v1753, %v1843
  %v1860 = vsel %vm1780, %v1758, %v1844
  %v1861 = vsel %vm1781, %v1763, %v1845
  %v1862 = vmul.f32 %v1846, %v1846
  %v1863 = vmul.f32 %v1847, %v1847
  %v1864 = vmul.f32 %v1848, %v1848
  %v1865 = vmul.f32 %v1849, %v1849
  %v1866 = vmul.f32 %v1850, %v1850
  %v1867 = vmul.f32 %v1851, %v1851
  %v1868 = vmul.f32 %v1852, %v1852
  %v1869 = vmul.f32 %v1853, %v1853
  %v1870 = vmul.f32 %v1854, %v1854
  %v1871 = vmul.f32 %v1855, %v1855
  %v1872 = vmul.f32 %v1856, %v1856
  %v1873 = vmul.f32 %v1857, %v1857
  %v1874 = vmul.f32 %v1858, %v1858
  %v1875 = vmul.f32 %v1859, %v1859
  %v1876 = vmul.f32 %v1860, %v1860
  %v1877 = vmul.f32 %v1861, %v1861
  %v1878 = vsel %vm1206, %v1862, 0.0
  %1879 = vadd.xlane.f32.xlu0 %v1878
  %v1880 = vpop.xlane.xlu0 %1879
  %v1881 = vsel %vm1206, %v1863, 0.0
  %1882 = vadd.xlane.f32.xlu0 %v1881
  %v1883 = vpop.xlane.xlu0 %1882
  %v1884 = vsel %vm1206, %v1864, 0.0
  %1885 = vadd.xlane.f32.xlu0 %v1884
  %v1886 = vpop.xlane.xlu0 %1885
  %v1887 = vsel %vm1206, %v1865, 0.0
  %1888 = vadd.xlane.f32.xlu0 %v1887
  %v1889 = vpop.xlane.xlu0 %1888
  %v1890 = vsel %vm1206, %v1866, 0.0
  %1891 = vadd.xlane.f32.xlu0 %v1890
  %v1892 = vpop.xlane.xlu0 %1891
  %v1893 = vsel %vm1206, %v1867, 0.0
  %1894 = vadd.xlane.f32.xlu0 %v1893
  %v1895 = vpop.xlane.xlu0 %1894
  %v1896 = vsel %vm1206, %v1868, 0.0
  %1897 = vadd.xlane.f32.xlu0 %v1896
  %v1898 = vpop.xlane.xlu0 %1897
  %v1899 = vsel %vm1206, %v1869, 0.0
  %1900 = vadd.xlane.f32.xlu0 %v1899
  %v1901 = vpop.xlane.xlu0 %1900
  %v1902 = vsel %vm1206, %v1870, 0.0
  %1903 = vadd.xlane.f32.xlu0 %v1902
  %v1904 = vpop.xlane.xlu0 %1903
  %v1905 = vsel %vm1206, %v1871, 0.0
  %1906 = vadd.xlane.f32.xlu0 %v1905
  %v1907 = vpop.xlane.xlu0 %1906
  %v1908 = vsel %vm1206, %v1872, 0.0
  %1909 = vadd.xlane.f32.xlu0 %v1908
  %v1910 = vpop.xlane.xlu0 %1909
  %v1911 = vsel %vm1206, %v1873, 0.0
  %1912 = vadd.xlane.f32.xlu0 %v1911
  %v1913 = vpop.xlane.xlu0 %1912
  %v1914 = vsel %vm1206, %v1874, 0.0
  %1915 = vadd.xlane.f32.xlu0 %v1914
  %v1916 = vpop.xlane.xlu0 %1915
  %v1917 = vsel %vm1206, %v1875, 0.0
  %1918 = vadd.xlane.f32.xlu0 %v1917
  %v1919 = vpop.xlane.xlu0 %1918
  %v1920 = vsel %vm1206, %v1876, 0.0
  %1921 = vadd.xlane.f32.xlu0 %v1920
  %v1922 = vpop.xlane.xlu0 %1921
  %v1923 = vsel %vm1206, %v1877, 0.0
  %1924 = vadd.xlane.f32.xlu0 %v1923
  %v1925 = vpop.xlane.xlu0 %1924
  %v1926 = vmax.f32 %v1880, 1e-24
  %v1927 = vmax.f32 %v1883, 1e-24
  %v1928 = vmax.f32 %v1886, 1e-24
  %v1929 = vmax.f32 %v1889, 1e-24
  %v1930 = vmax.f32 %v1892, 1e-24
  %v1931 = vmax.f32 %v1895, 1e-24
  %v1932 = vmax.f32 %v1898, 1e-24
  %v1933 = vmax.f32 %v1901, 1e-24
  %v1934 = vmax.f32 %v1904, 1e-24
  %v1935 = vmax.f32 %v1907, 1e-24
  %v1936 = vmax.f32 %v1910, 1e-24
  %v1937 = vmax.f32 %v1913, 1e-24
  %v1938 = vmax.f32 %v1916, 1e-24
  %v1939 = vmax.f32 %v1919, 1e-24
  %v1940 = vmax.f32 %v1922, 1e-24
  %v1941 = vmax.f32 %v1925, 1e-24
  %v1942 = vrsqrt.pop %v1926
  %v1943 = vrsqrt.pop %v1927
  %v1944 = vrsqrt.pop %v1928
  %v1945 = vrsqrt.pop %v1929
  %v1946 = vrsqrt.pop %v1930
  %v1947 = vrsqrt.pop %v1931
  %v1948 = vrsqrt.pop %v1932
  %v1949 = vrsqrt.pop %v1933
  %v1950 = vrsqrt.pop %v1934
  %v1951 = vrsqrt.pop %v1935
  %v1952 = vrsqrt.pop %v1936
  %v1953 = vrsqrt.pop %v1937
  %v1954 = vrsqrt.pop %v1938
  %v1955 = vrsqrt.pop %v1939
  %v1956 = vrsqrt.pop %v1940
  %v1957 = vrsqrt.pop %v1941
  %v1958 = vmul.f32 %v1846, %v1942
  %v1959 = vmul.f32 %v1847, %v1943
  %v1960 = vmul.f32 %v1848, %v1944
  %v1961 = vmul.f32 %v1849, %v1945
  %v1962 = vmul.f32 %v1850, %v1946
  %v1963 = vmul.f32 %v1851, %v1947
  %v1964 = vmul.f32 %v1852, %v1948
  %v1965 = vmul.f32 %v1853, %v1949
  %v1966 = vmul.f32 %v1854, %v1950
  %v1967 = vmul.f32 %v1855, %v1951
  %v1968 = vmul.f32 %v1856, %v1952
  %v1969 = vmul.f32 %v1857, %v1953
  %v1970 = vmul.f32 %v1858, %v1954
  %v1971 = vmul.f32 %v1859, %v1955
  %v1972 = vmul.f32 %v1860, %v1956
  %v1973 = vmul.f32 %v1861, %v1957
  %v1975 = vsel %vm1206, %v1958, 0
  %v1978 = vsel %vm1206, %v1959, 0
  %v1981 = vsel %vm1206, %v1960, 0
  %v1984 = vsel %vm1206, %v1961, 0
  %v1987 = vsel %vm1206, %v1962, 0
  %v1990 = vsel %vm1206, %v1963, 0
  %v1993 = vsel %vm1206, %v1964, 0
  %v1996 = vsel %vm1206, %v1965, 0
  %v1999 = vsel %vm1206, %v1966, 0
  %v2002 = vsel %vm1206, %v1967, 0
  %v2005 = vsel %vm1206, %v1968, 0
  %v2008 = vsel %vm1206, %v1969, 0
  %v2011 = vsel %vm1206, %v1970, 0
  %v2014 = vsel %vm1206, %v1971, 0
  %v2017 = vsel %vm1206, %v1972, 0
  %v2020 = vsel %vm1206, %v1973, 0
  %2022 = vmatprep.subr.mxu0 0.0
  %2023 = vmatpush1.xpose.msra.mxu0 %v2020
  %2024 = vmatprep.subr.mxu0 0.0
  %2025 = vmatpush1.xpose.msra.mxu0 %v2017
  %2026 = vmatprep.subr.mxu0 0.0
  %2027 = vmatpush1.xpose.msra.mxu0 %v2014
  %2028 = vmatprep.subr.mxu0 0.0
  %2029 = vmatpush1.xpose.msra.mxu0 %v2011
  %2030 = vmatprep.subr.mxu0 0.0
  %2031 = vmatpush1.xpose.msra.mxu0 %v2008
  %2032 = vmatprep.subr.mxu0 0.0
  %2033 = vmatpush1.xpose.msra.mxu0 %v2005
  %2034 = vmatprep.subr.mxu0 0.0
  %2035 = vmatpush1.xpose.msra.mxu0 %v2002
  %2036 = vmatprep.subr.mxu0 0.0
  %2037 = vmatpush1.xpose.msra.mxu0 %v1999
  %2038 = vmatprep.subr.mxu0 0.0
  %2039 = vmatpush1.xpose.msra.mxu0 %v1996
  %2040 = vmatprep.subr.mxu0 0.0
  %2041 = vmatpush1.xpose.msra.mxu0 %v1993
  %2042 = vmatprep.subr.mxu0 0.0
  %2043 = vmatpush1.xpose.msra.mxu0 %v1990
  %2044 = vmatprep.subr.mxu0 0.0
  %2045 = vmatpush1.xpose.msra.mxu0 %v1987
  %2046 = vmatprep.subr.mxu0 0.0
  %2047 = vmatpush1.xpose.msra.mxu0 %v1984
  %2048 = vmatprep.subr.mxu0 0.0
  %2049 = vmatpush1.xpose.msra.mxu0 %v1981
  %2050 = vmatprep.subr.mxu0 0.0
  %2051 = vmatpush1.xpose.msra.mxu0 %v1978
  %2052 = vmatprep.subr.mxu0 0.0
  %2053 = vmatpush1.xpose.msra.mxu0 %v1975
  %2054 = vmatprep.subr.mxu0 0.0
  %2055 = vmatpush2.xpose.msra.mxu0 0.0
  %2056 = vmatprep.subr.mxu0 0.0
  %2057 = vmatpush2.xpose.msra.mxu0 0.0
  %2058 = vmatprep.subr.mxu0 0.0
  %2059 = vmatpush2.xpose.msra.mxu0 0.0
  %2060 = vmatprep.subr.mxu0 0.0
  %2061 = vmatpush2.xpose.msra.mxu0 0.0
  %2062 = vmatprep.subr.mxu0 0.0
  %2063 = vmatpush2.xpose.msra.mxu0 0.0
  %2064 = vmatprep.subr.mxu0 0.0
  %2065 = vmatpush2.xpose.msra.mxu0 0.0
  %2066 = vmatprep.subr.mxu0 0.0
  %2067 = vmatpush2.xpose.msra.mxu0 0.0
  %2068 = vmatprep.subr.mxu0 0.0
  %2069 = vmatpush2.xpose.msra.mxu0 0.0
  %2070 = vmatprep.subr.mxu0 0.0
  %2071 = vmatpush2.xpose.msra.mxu0 0.0
  %2072 = vmatprep.subr.mxu0 0.0
  %2073 = vmatpush2.xpose.msra.mxu0 0.0
  %2074 = vmatprep.subr.mxu0 0.0
  %2075 = vmatpush2.xpose.msra.mxu0 0.0
  %2076 = vmatprep.subr.mxu0 0.0
  %2077 = vmatpush2.xpose.msra.mxu0 0.0
  %2078 = vmatprep.subr.mxu0 0.0
  %2079 = vmatpush2.xpose.msra.mxu0 0.0
  %2080 = vmatprep.subr.mxu0 0.0
  %2081 = vmatpush2.xpose.msra.mxu0 0.0
  %2082 = vmatprep.subr.mxu0 0.0
  %2083 = vmatpush2.xpose.msra.mxu0 0.0
  %2084 = vmatprep.subr.mxu0 0.0
  %2085 = vmatpush2.xpose.msra.mxu0 0.0
  %2086 = vmatprep.mubr.f32.mxu0 0.0
  %2087 = vmatmul.mubr.f32.gmra.mxu0 %v1975
  %v2088 = vpop.f32.mrf.mxu0
  %v2089 = vadd.f32 0.0, %v2088
  %v2090 = vpop.f32.mrf.mxu0
  %2091 = vmatprep.mubr.f32.mxu0 0.0
  %2092 = vmatmul.mubr.f32.gmra.mxu0 %v1978
  %v2093 = vpop.f32.mrf.mxu0
  %v2094 = vadd.f32 0.0, %v2093
  %v2095 = vpop.f32.mrf.mxu0
  %2096 = vmatprep.mubr.f32.mxu0 0.0
  %2097 = vmatmul.mubr.f32.gmra.mxu0 %v1981
  %v2098 = vpop.f32.mrf.mxu0
  %v2099 = vadd.f32 0.0, %v2098
  %v2100 = vpop.f32.mrf.mxu0
  %2101 = vmatprep.mubr.f32.mxu0 0.0
  %2102 = vmatmul.mubr.f32.gmra.mxu0 %v1984
  %v2103 = vpop.f32.mrf.mxu0
  %v2104 = vadd.f32 0.0, %v2103
  %v2105 = vpop.f32.mrf.mxu0
  %2106 = vmatprep.mubr.f32.mxu0 0.0
  %2107 = vmatmul.mubr.f32.gmra.mxu0 %v1987
  %v2108 = vpop.f32.mrf.mxu0
  %v2109 = vadd.f32 0.0, %v2108
  %v2110 = vpop.f32.mrf.mxu0
  %2111 = vmatprep.mubr.f32.mxu0 0.0
  %2112 = vmatmul.mubr.f32.gmra.mxu0 %v1990
  %v2113 = vpop.f32.mrf.mxu0
  %v2114 = vadd.f32 0.0, %v2113
  %v2115 = vpop.f32.mrf.mxu0
  %2116 = vmatprep.mubr.f32.mxu0 0.0
  %2117 = vmatmul.mubr.f32.gmra.mxu0 %v1993
  %v2118 = vpop.f32.mrf.mxu0
  %v2119 = vadd.f32 0.0, %v2118
  %v2120 = vpop.f32.mrf.mxu0
  %2121 = vmatprep.mubr.f32.mxu0 0.0
  %2122 = vmatmul.mubr.f32.gmra.mxu0 %v1996
  %v2123 = vpop.f32.mrf.mxu0
  %v2124 = vadd.f32 0.0, %v2123
  %v2125 = vpop.f32.mrf.mxu0
  %2126 = vmatprep.mubr.f32.mxu0 0.0
  %2127 = vmatmul.mubr.f32.gmra.mxu0 %v1999
  %v2128 = vpop.f32.mrf.mxu0
  %v2129 = vadd.f32 0.0, %v2128
  %v2130 = vpop.f32.mrf.mxu0
  %2131 = vmatprep.mubr.f32.mxu0 0.0
  %2132 = vmatmul.mubr.f32.gmra.mxu0 %v2002
  %v2133 = vpop.f32.mrf.mxu0
  %v2134 = vadd.f32 0.0, %v2133
  %v2135 = vpop.f32.mrf.mxu0
  %2136 = vmatprep.mubr.f32.mxu0 0.0
  %2137 = vmatmul.mubr.f32.gmra.mxu0 %v2005
  %v2138 = vpop.f32.mrf.mxu0
  %v2139 = vadd.f32 0.0, %v2138
  %v2140 = vpop.f32.mrf.mxu0
  %2141 = vmatprep.mubr.f32.mxu0 0.0
  %2142 = vmatmul.mubr.f32.gmra.mxu0 %v2008
  %v2143 = vpop.f32.mrf.mxu0
  %v2144 = vadd.f32 0.0, %v2143
  %v2145 = vpop.f32.mrf.mxu0
  %2146 = vmatprep.mubr.f32.mxu0 0.0
  %2147 = vmatmul.mubr.f32.gmra.mxu0 %v2011
  %v2148 = vpop.f32.mrf.mxu0
  %v2149 = vadd.f32 0.0, %v2148
  %v2150 = vpop.f32.mrf.mxu0
  %2151 = vmatprep.mubr.f32.mxu0 0.0
  %2152 = vmatmul.mubr.f32.gmra.mxu0 %v2014
  %v2153 = vpop.f32.mrf.mxu0
  %v2154 = vadd.f32 0.0, %v2153
  %v2155 = vpop.f32.mrf.mxu0
  %2156 = vmatprep.mubr.f32.mxu0 0.0
  %2157 = vmatmul.mubr.f32.gmra.mxu0 %v2017
  %v2158 = vpop.f32.mrf.mxu0
  %v2159 = vadd.f32 0.0, %v2158
  %v2160 = vpop.f32.mrf.mxu0
  %2161 = vmatprep.mubr.f32.mxu0 0.0
  %2162 = vmatmul.mubr.f32.gmra.mxu0 %v2020
  %v2163 = vpop.f32.mrf.mxu0
  %v2164 = vadd.f32 0.0, %v2163
  %v2165 = vpop.f32.mrf.mxu0
  %2166 = vdwg.mxu0
  %v2167 = vxor.u32 %v2089, 2147483648
  %v2168 = vxor.u32 %v2094, 2147483648
  %v2169 = vxor.u32 %v2099, 2147483648
  %v2170 = vxor.u32 %v2104, 2147483648
  %v2171 = vxor.u32 %v2109, 2147483648
  %v2172 = vxor.u32 %v2114, 2147483648
  %v2173 = vxor.u32 %v2119, 2147483648
  %v2174 = vxor.u32 %v2124, 2147483648
  %v2175 = vxor.u32 %v2129, 2147483648
  %v2176 = vxor.u32 %v2134, 2147483648
  %v2177 = vxor.u32 %v2139, 2147483648
  %v2178 = vxor.u32 %v2144, 2147483648
  %v2179 = vxor.u32 %v2149, 2147483648
  %v2180 = vxor.u32 %v2154, 2147483648
  %v2181 = vxor.u32 %v2159, 2147483648
  %v2182 = vxor.u32 %v2164, 2147483648
  %v2183 = vmul.f32 %v2167, 1.442695
  %v2184 = vpow.pop %v2183
  %v2185 = vmul.f32 %v2168, 1.442695
  %v2186 = vpow.pop %v2185
  %v2187 = vmul.f32 %v2169, 1.442695
  %v2188 = vpow.pop %v2187
  %v2189 = vmul.f32 %v2170, 1.442695
  %v2190 = vpow.pop %v2189
  %v2191 = vmul.f32 %v2171, 1.442695
  %v2192 = vpow.pop %v2191
  %v2193 = vmul.f32 %v2172, 1.442695
  %v2194 = vpow.pop %v2193
  %v2195 = vmul.f32 %v2173, 1.442695
  %v2196 = vpow.pop %v2195
  %v2197 = vmul.f32 %v2174, 1.442695
  %v2198 = vpow.pop %v2197
  %v2199 = vmul.f32 %v2175, 1.442695
  %v2200 = vpow.pop %v2199
  %v2201 = vmul.f32 %v2176, 1.442695
  %v2202 = vpow.pop %v2201
  %v2203 = vmul.f32 %v2177, 1.442695
  %v2204 = vpow.pop %v2203
  %v2205 = vmul.f32 %v2178, 1.442695
  %v2206 = vpow.pop %v2205
  %v2207 = vmul.f32 %v2179, 1.442695
  %v2208 = vpow.pop %v2207
  %v2209 = vmul.f32 %v2180, 1.442695
  %v2210 = vpow.pop %v2209
  %v2211 = vmul.f32 %v2181, 1.442695
  %v2212 = vpow.pop %v2211
  %v2213 = vmul.f32 %v2182, 1.442695
  %v2214 = vpow.pop %v2213
  %v2215 = vadd.f32 %v2184, 1.0
  %v2216 = vadd.f32 %v2186, 1.0
  %v2217 = vadd.f32 %v2188, 1.0
  %v2218 = vadd.f32 %v2190, 1.0
  %v2219 = vadd.f32 %v2192, 1.0
  %v2220 = vadd.f32 %v2194, 1.0
  %v2221 = vadd.f32 %v2196, 1.0
  %v2222 = vadd.f32 %v2198, 1.0
  %v2223 = vadd.f32 %v2200, 1.0
  %v2224 = vadd.f32 %v2202, 1.0
  %v2225 = vadd.f32 %v2204, 1.0
  %v2226 = vadd.f32 %v2206, 1.0
  %v2227 = vadd.f32 %v2208, 1.0
  %v2228 = vadd.f32 %v2210, 1.0
  %v2229 = vadd.f32 %v2212, 1.0
  %v2230 = vadd.f32 %v2214, 1.0
  %v2231 = vrcp.pop %v2215
  %v2232 = vmul.f32 1.0, %v2231
  %v2233 = vrcp.pop %v2216
  %v2234 = vmul.f32 1.0, %v2233
  %v2235 = vrcp.pop %v2217
  %v2236 = vmul.f32 1.0, %v2235
  %v2237 = vrcp.pop %v2218
  %v2238 = vmul.f32 1.0, %v2237
  %v2239 = vrcp.pop %v2219
  %v2240 = vmul.f32 1.0, %v2239
  %v2241 = vrcp.pop %v2220
  %v2242 = vmul.f32 1.0, %v2241
  %v2243 = vrcp.pop %v2221
  %v2244 = vmul.f32 1.0, %v2243
  %v2245 = vrcp.pop %v2222
  %v2246 = vmul.f32 1.0, %v2245
  %v2247 = vrcp.pop %v2223
  %v2248 = vmul.f32 1.0, %v2247
  %v2249 = vrcp.pop %v2224
  %v2250 = vmul.f32 1.0, %v2249
  %v2251 = vrcp.pop %v2225
  %v2252 = vmul.f32 1.0, %v2251
  %v2253 = vrcp.pop %v2226
  %v2254 = vmul.f32 1.0, %v2253
  %v2255 = vrcp.pop %v2227
  %v2256 = vmul.f32 1.0, %v2255
  %v2257 = vrcp.pop %v2228
  %v2258 = vmul.f32 1.0, %v2257
  %v2259 = vrcp.pop %v2229
  %v2260 = vmul.f32 1.0, %v2259
  %v2261 = vrcp.pop %v2230
  %v2262 = vmul.f32 1.0, %v2261
  %2263 = vst [vmem:[%s13] sm:$0xff] %v2232
  %2264 = vst [vmem:[%s13 + $0x8] sm:$0xff] %v2234
  %2265 = vst [vmem:[%s13 + $0x10] sm:$0xff] %v2236
  %2266 = vst [vmem:[%s13 + $0x18] sm:$0xff] %v2238
  %2267 = vst [vmem:[%s13 + $0x20] sm:$0xff] %v2240
  %2268 = vst [vmem:[%s13 + $0x28] sm:$0xff] %v2242
  %2269 = vst [vmem:[%s13 + $0x30] sm:$0xff] %v2244
  %2270 = vst [vmem:[%s13 + $0x38] sm:$0xff] %v2246
  %2271 = vst [vmem:[%s13 + $0x40] sm:$0xff] %v2248
  %2272 = vst [vmem:[%s13 + $0x48] sm:$0xff] %v2250
  %2273 = vst [vmem:[%s13 + $0x50] sm:$0xff] %v2252
  %2274 = vst [vmem:[%s13 + $0x58] sm:$0xff] %v2254
  %2275 = vst [vmem:[%s13 + $0x60] sm:$0xff] %v2256
  %2276 = vst [vmem:[%s13 + $0x68] sm:$0xff] %v2258
  %2277 = vst [vmem:[%s13 + $0x70] sm:$0xff] %v2260
  %2278 = vst [vmem:[%s13 + $0x78] sm:$0xff] %v2262
  %v2279 = vld [vmem:[%s9] sm:$0xff]
  %v2280 = vld [vmem:[%s9 + $0x8] sm:$0xff]
  %v2281 = vld [vmem:[%s10] sm:$0x1]
  %v2283 = vlaneseq
  %v2284 = vshrl.u32 %v2283, 7
  %v2285 = vsub.s32 0, %v2284
  %v2286 = vrot.slane %v2281, %v2285
  %2288 = vmatprep.subr.mxu0 0.0
  %2289 = vmatpush1.msra.mxu0 0.0
  %2290 = vmatprep.subr.mxu0 0.0
  %2291 = vmatpush1.msra.mxu0 0.0
  %2292 = vmatprep.subr.mxu0 0.0
  %2293 = vmatpush1.msra.mxu0 0.0
  %2294 = vmatprep.subr.mxu0 0.0
  %2295 = vmatpush1.msra.mxu0 0.0
  %2296 = vmatprep.subr.mxu0 0.0
  %2297 = vmatpush1.msra.mxu0 0.0
  %2298 = vmatprep.subr.mxu0 0.0
  %2299 = vmatpush1.msra.mxu0 0.0
  %2300 = vmatprep.subr.mxu0 0.0
  %2301 = vmatpush1.msra.mxu0 0.0
  %2302 = vmatprep.subr.mxu0 0.0
  %2303 = vmatpush1.msra.mxu0 0.0
  %2304 = vmatprep.subr.mxu0 0.0
  %2305 = vmatpush1.msra.mxu0 0.0
  %2306 = vmatprep.subr.mxu0 0.0
  %2307 = vmatpush1.msra.mxu0 0.0
  %2308 = vmatprep.subr.mxu0 0.0
  %2309 = vmatpush1.msra.mxu0 0.0
  %2310 = vmatprep.subr.mxu0 0.0
  %2311 = vmatpush1.msra.mxu0 0.0
  %2312 = vmatprep.subr.mxu0 0.0
  %2313 = vmatpush1.msra.mxu0 0.0
  %2314 = vmatprep.subr.mxu0 0.0
  %2315 = vmatpush1.msra.mxu0 0.0
  %2316 = vmatprep.subr.mxu0 0.0
  %2317 = vmatpush1.msra.mxu0 %v2280
  %2318 = vmatprep.subr.mxu0 0.0
  %2319 = vmatpush1.msra.mxu0 %v2279
  %2320 = vmatprep.subr.mxu0 0.0
  %2321 = vmatpush2.msra.mxu0 0.0
  %2322 = vmatprep.subr.mxu0 0.0
  %2323 = vmatpush2.msra.mxu0 0.0
  %2324 = vmatprep.subr.mxu0 0.0
  %2325 = vmatpush2.msra.mxu0 0.0
  %2326 = vmatprep.subr.mxu0 0.0
  %2327 = vmatpush2.msra.mxu0 0.0
  %2328 = vmatprep.subr.mxu0 0.0
  %2329 = vmatpush2.msra.mxu0 0.0
  %2330 = vmatprep.subr.mxu0 0.0
  %2331 = vmatpush2.msra.mxu0 0.0
  %2332 = vmatprep.subr.mxu0 0.0
  %2333 = vmatpush2.msra.mxu0 0.0
  %2334 = vmatprep.subr.mxu0 0.0
  %2335 = vmatpush2.msra.mxu0 0.0
  %2336 = vmatprep.subr.mxu0 0.0
  %2337 = vmatpush2.msra.mxu0 0.0
  %2338 = vmatprep.subr.mxu0 0.0
  %2339 = vmatpush2.msra.mxu0 0.0
  %2340 = vmatprep.subr.mxu0 0.0
  %2341 = vmatpush2.msra.mxu0 0.0
  %2342 = vmatprep.subr.mxu0 0.0
  %2343 = vmatpush2.msra.mxu0 0.0
  %2344 = vmatprep.subr.mxu0 0.0
  %2345 = vmatpush2.msra.mxu0 0.0
  %2346 = vmatprep.subr.mxu0 0.0
  %2347 = vmatpush2.msra.mxu0 0.0
  %2348 = vmatprep.subr.mxu0 0.0
  %2349 = vmatpush2.msra.mxu0 0.0
  %2350 = vmatprep.subr.mxu0 0.0
  %2351 = vmatpush2.msra.mxu0 0.0
  %2352 = vmatprep.mubr.f32.mxu0 0.0
  %2353 = vmatmul.mubr.f32.gmra.mxu0 %v1975
  %v2354 = vpop.f32.mrf.mxu0
  %v2355 = vadd.f32 %v2286, %v2354
  %v2356 = vpop.f32.mrf.mxu0
  %2357 = vmatprep.mubr.f32.mxu0 0.0
  %2358 = vmatmul.mubr.f32.gmra.mxu0 %v1978
  %v2359 = vpop.f32.mrf.mxu0
  %v2360 = vadd.f32 %v2286, %v2359
  %v2361 = vpop.f32.mrf.mxu0
  %2362 = vmatprep.mubr.f32.mxu0 0.0
  %2363 = vmatmul.mubr.f32.gmra.mxu0 %v1981
  %v2364 = vpop.f32.mrf.mxu0
  %v2365 = vadd.f32 %v2286, %v2364
  %v2366 = vpop.f32.mrf.mxu0
  %2367 = vmatprep.mubr.f32.mxu0 0.0
  %2368 = vmatmul.mubr.f32.gmra.mxu0 %v1984
  %v2369 = vpop.f32.mrf.mxu0
  %v2370 = vadd.f32 %v2286, %v2369
  %v2371 = vpop.f32.mrf.mxu0
  %2372 = vmatprep.mubr.f32.mxu0 0.0
  %2373 = vmatmul.mubr.f32.gmra.mxu0 %v1987
  %v2374 = vpop.f32.mrf.mxu0
  %v2375 = vadd.f32 %v2286, %v2374
  %v2376 = vpop.f32.mrf.mxu0
  %2377 = vmatprep.mubr.f32.mxu0 0.0
  %2378 = vmatmul.mubr.f32.gmra.mxu0 %v1990
  %v2379 = vpop.f32.mrf.mxu0
  %v2380 = vadd.f32 %v2286, %v2379
  %v2381 = vpop.f32.mrf.mxu0
  %2382 = vmatprep.mubr.f32.mxu0 0.0
  %2383 = vmatmul.mubr.f32.gmra.mxu0 %v1993
  %v2384 = vpop.f32.mrf.mxu0
  %v2385 = vadd.f32 %v2286, %v2384
  %v2386 = vpop.f32.mrf.mxu0
  %2387 = vmatprep.mubr.f32.mxu0 0.0
  %2388 = vmatmul.mubr.f32.gmra.mxu0 %v1996
  %v2389 = vpop.f32.mrf.mxu0
  %v2390 = vadd.f32 %v2286, %v2389
  %v2391 = vpop.f32.mrf.mxu0
  %2392 = vmatprep.mubr.f32.mxu0 0.0
  %2393 = vmatmul.mubr.f32.gmra.mxu0 %v1999
  %v2394 = vpop.f32.mrf.mxu0
  %v2395 = vadd.f32 %v2286, %v2394
  %v2396 = vpop.f32.mrf.mxu0
  %2397 = vmatprep.mubr.f32.mxu0 0.0
  %2398 = vmatmul.mubr.f32.gmra.mxu0 %v2002
  %v2399 = vpop.f32.mrf.mxu0
  %v2400 = vadd.f32 %v2286, %v2399
  %v2401 = vpop.f32.mrf.mxu0
  %2402 = vmatprep.mubr.f32.mxu0 0.0
  %2403 = vmatmul.mubr.f32.gmra.mxu0 %v2005
  %v2404 = vpop.f32.mrf.mxu0
  %v2405 = vadd.f32 %v2286, %v2404
  %v2406 = vpop.f32.mrf.mxu0
  %2407 = vmatprep.mubr.f32.mxu0 0.0
  %2408 = vmatmul.mubr.f32.gmra.mxu0 %v2008
  %v2409 = vpop.f32.mrf.mxu0
  %v2410 = vadd.f32 %v2286, %v2409
  %v2411 = vpop.f32.mrf.mxu0
  %2412 = vmatprep.mubr.f32.mxu0 0.0
  %2413 = vmatmul.mubr.f32.gmra.mxu0 %v2011
  %v2414 = vpop.f32.mrf.mxu0
  %v2415 = vadd.f32 %v2286, %v2414
  %v2416 = vpop.f32.mrf.mxu0
  %2417 = vmatprep.mubr.f32.mxu0 0.0
  %2418 = vmatmul.mubr.f32.gmra.mxu0 %v2014
  %v2419 = vpop.f32.mrf.mxu0
  %v2420 = vadd.f32 %v2286, %v2419
  %v2421 = vpop.f32.mrf.mxu0
  %2422 = vmatprep.mubr.f32.mxu0 0.0
  %2423 = vmatmul.mubr.f32.gmra.mxu0 %v2017
  %v2424 = vpop.f32.mrf.mxu0
  %v2425 = vadd.f32 %v2286, %v2424
  %v2426 = vpop.f32.mrf.mxu0
  %2427 = vmatprep.mubr.f32.mxu0 0.0
  %2428 = vmatmul.mubr.f32.gmra.mxu0 %v2020
  %v2429 = vpop.f32.mrf.mxu0
  %v2430 = vadd.f32 %v2286, %v2429
  %v2431 = vpop.f32.mrf.mxu0
  %2432 = vdwg.mxu0
  %vm2433 = vcmask 64512
  %v2434 = vsel %vm2433, %v2355, -inf
  %2435 = vmax.xlane.f32.xlu0 %v2434
  %v2436 = vpop.xlane.xlu0 %2435
  %v2437 = vsel %vm2433, %v2360, -inf
  %2438 = vmax.xlane.f32.xlu0 %v2437
  %v2439 = vpop.xlane.xlu0 %2438
  %v2440 = vsel %vm2433, %v2365, -inf
  %2441 = vmax.xlane.f32.xlu0 %v2440
  %v2442 = vpop.xlane.xlu0 %2441
  %v2443 = vsel %vm2433, %v2370, -inf
  %2444 = vmax.xlane.f32.xlu0 %v2443
  %v2445 = vpop.xlane.xlu0 %2444
  %v2446 = vsel %vm2433, %v2375, -inf
  %2447 = vmax.xlane.f32.xlu0 %v2446
  %v2448 = vpop.xlane.xlu0 %2447
  %v2449 = vsel %vm2433, %v2380, -inf
  %2450 = vmax.xlane.f32.xlu0 %v2449
  %v2451 = vpop.xlane.xlu0 %2450
  %v2452 = vsel %vm2433, %v2385, -inf
  %2453 = vmax.xlane.f32.xlu0 %v2452
  %v2454 = vpop.xlane.xlu0 %2453
  %v2455 = vsel %vm2433, %v2390, -inf
  %2456 = vmax.xlane.f32.xlu0 %v2455
  %v2457 = vpop.xlane.xlu0 %2456
  %v2458 = vsel %vm2433, %v2395, -inf
  %2459 = vmax.xlane.f32.xlu0 %v2458
  %v2460 = vpop.xlane.xlu0 %2459
  %v2461 = vsel %vm2433, %v2400, -inf
  %2462 = vmax.xlane.f32.xlu0 %v2461
  %v2463 = vpop.xlane.xlu0 %2462
  %v2464 = vsel %vm2433, %v2405, -inf
  %2465 = vmax.xlane.f32.xlu0 %v2464
  %v2466 = vpop.xlane.xlu0 %2465
  %v2467 = vsel %vm2433, %v2410, -inf
  %2468 = vmax.xlane.f32.xlu0 %v2467
  %v2469 = vpop.xlane.xlu0 %2468
  %v2470 = vsel %vm2433, %v2415, -inf
  %2471 = vmax.xlane.f32.xlu0 %v2470
  %v2472 = vpop.xlane.xlu0 %2471
  %v2473 = vsel %vm2433, %v2420, -inf
  %2474 = vmax.xlane.f32.xlu0 %v2473
  %v2475 = vpop.xlane.xlu0 %2474
  %v2476 = vsel %vm2433, %v2425, -inf
  %2477 = vmax.xlane.f32.xlu0 %v2476
  %v2478 = vpop.xlane.xlu0 %2477
  %v2479 = vsel %vm2433, %v2430, -inf
  %2480 = vmax.xlane.f32.xlu0 %v2479
  %v2481 = vpop.xlane.xlu0 %2480
  %v2482 = vsel %vm2433, %v2355, inf
  %2483 = vmin.xlane.f32.xlu0 %v2482
  %v2484 = vpop.xlane.xlu0 %2483
  %v2485 = vsel %vm2433, %v2360, inf
  %2486 = vmin.xlane.f32.xlu0 %v2485
  %v2487 = vpop.xlane.xlu0 %2486
  %v2488 = vsel %vm2433, %v2365, inf
  %2489 = vmin.xlane.f32.xlu0 %v2488
  %v2490 = vpop.xlane.xlu0 %2489
  %v2491 = vsel %vm2433, %v2370, inf
  %2492 = vmin.xlane.f32.xlu0 %v2491
  %v2493 = vpop.xlane.xlu0 %2492
  %v2494 = vsel %vm2433, %v2375, inf
  %2495 = vmin.xlane.f32.xlu0 %v2494
  %v2496 = vpop.xlane.xlu0 %2495
  %v2497 = vsel %vm2433, %v2380, inf
  %2498 = vmin.xlane.f32.xlu0 %v2497
  %v2499 = vpop.xlane.xlu0 %2498
  %v2500 = vsel %vm2433, %v2385, inf
  %2501 = vmin.xlane.f32.xlu0 %v2500
  %v2502 = vpop.xlane.xlu0 %2501
  %v2503 = vsel %vm2433, %v2390, inf
  %2504 = vmin.xlane.f32.xlu0 %v2503
  %v2505 = vpop.xlane.xlu0 %2504
  %v2506 = vsel %vm2433, %v2395, inf
  %2507 = vmin.xlane.f32.xlu0 %v2506
  %v2508 = vpop.xlane.xlu0 %2507
  %v2509 = vsel %vm2433, %v2400, inf
  %2510 = vmin.xlane.f32.xlu0 %v2509
  %v2511 = vpop.xlane.xlu0 %2510
  %v2512 = vsel %vm2433, %v2405, inf
  %2513 = vmin.xlane.f32.xlu0 %v2512
  %v2514 = vpop.xlane.xlu0 %2513
  %v2515 = vsel %vm2433, %v2410, inf
  %2516 = vmin.xlane.f32.xlu0 %v2515
  %v2517 = vpop.xlane.xlu0 %2516
  %v2518 = vsel %vm2433, %v2415, inf
  %2519 = vmin.xlane.f32.xlu0 %v2518
  %v2520 = vpop.xlane.xlu0 %2519
  %v2521 = vsel %vm2433, %v2420, inf
  %2522 = vmin.xlane.f32.xlu0 %v2521
  %v2523 = vpop.xlane.xlu0 %2522
  %v2524 = vsel %vm2433, %v2425, inf
  %2525 = vmin.xlane.f32.xlu0 %v2524
  %v2526 = vpop.xlane.xlu0 %2525
  %v2527 = vsel %vm2433, %v2430, inf
  %2528 = vmin.xlane.f32.xlu0 %v2527
  %v2529 = vpop.xlane.xlu0 %2528
  %v2530 = vsub.f32 %v2436, %v2484
  %v2531 = vsub.f32 %v2439, %v2487
  %v2532 = vsub.f32 %v2442, %v2490
  %v2533 = vsub.f32 %v2445, %v2493
  %v2534 = vsub.f32 %v2448, %v2496
  %v2535 = vsub.f32 %v2451, %v2499
  %v2536 = vsub.f32 %v2454, %v2502
  %v2537 = vsub.f32 %v2457, %v2505
  %v2538 = vsub.f32 %v2460, %v2508
  %v2539 = vsub.f32 %v2463, %v2511
  %v2540 = vsub.f32 %v2466, %v2514
  %v2541 = vsub.f32 %v2469, %v2517
  %v2542 = vsub.f32 %v2472, %v2520
  %v2543 = vsub.f32 %v2475, %v2523
  %v2544 = vsub.f32 %v2478, %v2526
  %v2545 = vsub.f32 %v2481, %v2529
  %v2546 = vsub.f32 %v2355, %v2484
  %v2547 = vsub.f32 %v2360, %v2487
  %v2548 = vsub.f32 %v2365, %v2490
  %v2549 = vsub.f32 %v2370, %v2493
  %v2550 = vsub.f32 %v2375, %v2496
  %v2551 = vsub.f32 %v2380, %v2499
  %v2552 = vsub.f32 %v2385, %v2502
  %v2553 = vsub.f32 %v2390, %v2505
  %v2554 = vsub.f32 %v2395, %v2508
  %v2555 = vsub.f32 %v2400, %v2511
  %v2556 = vsub.f32 %v2405, %v2514
  %v2557 = vsub.f32 %v2410, %v2517
  %v2558 = vsub.f32 %v2415, %v2520
  %v2559 = vsub.f32 %v2420, %v2523
  %v2560 = vsub.f32 %v2425, %v2526
  %v2561 = vsub.f32 %v2430, %v2529
  %vm2562 = vcmp.gt.f32.partialorder %v2530, 0.0
  %vm2563 = vcmp.gt.f32.partialorder %v2531, 0.0
  %vm2564 = vcmp.gt.f32.partialorder %v2532, 0.0
  %vm2565 = vcmp.gt.f32.partialorder %v2533, 0.0
  %vm2566 = vcmp.gt.f32.partialorder %v2534, 0.0
  %vm2567 = vcmp.gt.f32.partialorder %v2535, 0.0
  %vm2568 = vcmp.gt.f32.partialorder %v2536, 0.0
  %vm2569 = vcmp.gt.f32.partialorder %v2537, 0.0
  %vm2570 = vcmp.gt.f32.partialorder %v2538, 0.0
  %vm2571 = vcmp.gt.f32.partialorder %v2539, 0.0
  %vm2572 = vcmp.gt.f32.partialorder %v2540, 0.0
  %vm2573 = vcmp.gt.f32.partialorder %v2541, 0.0
  %vm2574 = vcmp.gt.f32.partialorder %v2542, 0.0
  %vm2575 = vcmp.gt.f32.partialorder %v2543, 0.0
  %vm2576 = vcmp.gt.f32.partialorder %v2544, 0.0
  %vm2577 = vcmp.gt.f32.partialorder %v2545, 0.0
  %v2578 = vsel %vm2562, %v2530, 1.0
  %v2579 = vsel %vm2563, %v2531, 1.0
  %v2580 = vsel %vm2564, %v2532, 1.0
  %v2581 = vsel %vm2565, %v2533, 1.0
  %v2582 = vsel %vm2566, %v2534, 1.0
  %v2583 = vsel %vm2567, %v2535, 1.0
  %v2584 = vsel %vm2568, %v2536, 1.0
  %v2585 = vsel %vm2569, %v2537, 1.0
  %v2586 = vsel %vm2570, %v2538, 1.0
  %v2587 = vsel %vm2571, %v2539, 1.0
  %v2588 = vsel %vm2572, %v2540, 1.0
  %v2589 = vsel %vm2573, %v2541, 1.0
  %v2590 = vsel %vm2574, %v2542, 1.0
  %v2591 = vsel %vm2575, %v2543, 1.0
  %v2592 = vsel %vm2576, %v2544, 1.0
  %v2593 = vsel %vm2577, %v2545, 1.0
  %v2594 = vrcp.pop %v2578
  %v2595 = vmul.f32 %v2546, %v2594
  %v2596 = vrcp.pop %v2579
  %v2597 = vmul.f32 %v2547, %v2596
  %v2598 = vrcp.pop %v2580
  %v2599 = vmul.f32 %v2548, %v2598
  %v2600 = vrcp.pop %v2581
  %v2601 = vmul.f32 %v2549, %v2600
  %v2602 = vrcp.pop %v2582
  %v2603 = vmul.f32 %v2550, %v2602
  %v2604 = vrcp.pop %v2583
  %v2605 = vmul.f32 %v2551, %v2604
  %v2606 = vrcp.pop %v2584
  %v2607 = vmul.f32 %v2552, %v2606
  %v2608 = vrcp.pop %v2585
  %v2609 = vmul.f32 %v2553, %v2608
  %v2610 = vrcp.pop %v2586
  %v2611 = vmul.f32 %v2554, %v2610
  %v2612 = vrcp.pop %v2587
  %v2613 = vmul.f32 %v2555, %v2612
  %v2614 = vrcp.pop %v2588
  %v2615 = vmul.f32 %v2556, %v2614
  %v2616 = vrcp.pop %v2589
  %v2617 = vmul.f32 %v2557, %v2616
  %v2618 = vrcp.pop %v2590
  %v2619 = vmul.f32 %v2558, %v2618
  %v2620 = vrcp.pop %v2591
  %v2621 = vmul.f32 %v2559, %v2620
  %v2622 = vrcp.pop %v2592
  %v2623 = vmul.f32 %v2560, %v2622
  %v2624 = vrcp.pop %v2593
  %v2625 = vmul.f32 %v2561, %v2624
  %v2626 = vmul.f32 %v2595, %v2595
  %v2627 = vmul.f32 %v2597, %v2597
  %v2628 = vmul.f32 %v2599, %v2599
  %v2629 = vmul.f32 %v2601, %v2601
  %v2630 = vmul.f32 %v2603, %v2603
  %v2631 = vmul.f32 %v2605, %v2605
  %v2632 = vmul.f32 %v2607, %v2607
  %v2633 = vmul.f32 %v2609, %v2609
  %v2634 = vmul.f32 %v2611, %v2611
  %v2635 = vmul.f32 %v2613, %v2613
  %v2636 = vmul.f32 %v2615, %v2615
  %v2637 = vmul.f32 %v2617, %v2617
  %v2638 = vmul.f32 %v2619, %v2619
  %v2639 = vmul.f32 %v2621, %v2621
  %v2640 = vmul.f32 %v2623, %v2623
  %v2641 = vmul.f32 %v2625, %v2625
  %v2642 = vsel %vm2433, %v2626, 0.0
  %2643 = vadd.xlane.f32.xlu0 %v2642
  %v2644 = vpop.xlane.xlu0 %2643
  %v2645 = vsel %vm2433, %v2627, 0.0
  %2646 = vadd.xlane.f32.xlu0 %v2645
  %v2647 = vpop.xlane.xlu0 %2646
  %v2648 = vsel %vm2433, %v2628, 0.0
  %2649 = vadd.xlane.f32.xlu0 %v2648
  %v2650 = vpop.xlane.xlu0 %2649
  %v2651 = vsel %vm2433, %v2629, 0.0
  %2652 = vadd.xlane.f32.xlu0 %v2651
  %v2653 = vpop.xlane.xlu0 %2652
  %v2654 = vsel %vm2433, %v2630, 0.0
  %2655 = vadd.xlane.f32.xlu0 %v2654
  %v2656 = vpop.xlane.xlu0 %2655
  %v2657 = vsel %vm2433, %v2631, 0.0
  %2658 = vadd.xlane.f32.xlu0 %v2657
  %v2659 = vpop.xlane.xlu0 %2658
  %v2660 = vsel %vm2433, %v2632, 0.0
  %2661 = vadd.xlane.f32.xlu0 %v2660
  %v2662 = vpop.xlane.xlu0 %2661
  %v2663 = vsel %vm2433, %v2633, 0.0
  %2664 = vadd.xlane.f32.xlu0 %v2663
  %v2665 = vpop.xlane.xlu0 %2664
  %v2666 = vsel %vm2433, %v2634, 0.0
  %2667 = vadd.xlane.f32.xlu0 %v2666
  %v2668 = vpop.xlane.xlu0 %2667
  %v2669 = vsel %vm2433, %v2635, 0.0
  %2670 = vadd.xlane.f32.xlu0 %v2669
  %v2671 = vpop.xlane.xlu0 %2670
  %v2672 = vsel %vm2433, %v2636, 0.0
  %2673 = vadd.xlane.f32.xlu0 %v2672
  %v2674 = vpop.xlane.xlu0 %2673
  %v2675 = vsel %vm2433, %v2637, 0.0
  %2676 = vadd.xlane.f32.xlu0 %v2675
  %v2677 = vpop.xlane.xlu0 %2676
  %v2678 = vsel %vm2433, %v2638, 0.0
  %2679 = vadd.xlane.f32.xlu0 %v2678
  %v2680 = vpop.xlane.xlu0 %2679
  %v2681 = vsel %vm2433, %v2639, 0.0
  %2682 = vadd.xlane.f32.xlu0 %v2681
  %v2683 = vpop.xlane.xlu0 %2682
  %v2684 = vsel %vm2433, %v2640, 0.0
  %2685 = vadd.xlane.f32.xlu0 %v2684
  %v2686 = vpop.xlane.xlu0 %2685
  %v2687 = vsel %vm2433, %v2641, 0.0
  %2688 = vadd.xlane.f32.xlu0 %v2687
  %v2689 = vpop.xlane.xlu0 %2688
  %v2690 = vmax.f32 %v2644, 1e-24
  %v2691 = vmax.f32 %v2647, 1e-24
  %v2692 = vmax.f32 %v2650, 1e-24
  %v2693 = vmax.f32 %v2653, 1e-24
  %v2694 = vmax.f32 %v2656, 1e-24
  %v2695 = vmax.f32 %v2659, 1e-24
  %v2696 = vmax.f32 %v2662, 1e-24
  %v2697 = vmax.f32 %v2665, 1e-24
  %v2698 = vmax.f32 %v2668, 1e-24
  %v2699 = vmax.f32 %v2671, 1e-24
  %v2700 = vmax.f32 %v2674, 1e-24
  %v2701 = vmax.f32 %v2677, 1e-24
  %v2702 = vmax.f32 %v2680, 1e-24
  %v2703 = vmax.f32 %v2683, 1e-24
  %v2704 = vmax.f32 %v2686, 1e-24
  %v2705 = vmax.f32 %v2689, 1e-24
  %v2706 = vrsqrt.pop %v2690
  %v2707 = vrsqrt.pop %v2691
  %v2708 = vrsqrt.pop %v2692
  %v2709 = vrsqrt.pop %v2693
  %v2710 = vrsqrt.pop %v2694
  %v2711 = vrsqrt.pop %v2695
  %v2712 = vrsqrt.pop %v2696
  %v2713 = vrsqrt.pop %v2697
  %v2714 = vrsqrt.pop %v2698
  %v2715 = vrsqrt.pop %v2699
  %v2716 = vrsqrt.pop %v2700
  %v2717 = vrsqrt.pop %v2701
  %v2718 = vrsqrt.pop %v2702
  %v2719 = vrsqrt.pop %v2703
  %v2720 = vrsqrt.pop %v2704
  %v2721 = vrsqrt.pop %v2705
  %v2722 = vmul.f32 %v2595, %v2706
  %v2723 = vmul.f32 %v2597, %v2707
  %v2724 = vmul.f32 %v2599, %v2708
  %v2725 = vmul.f32 %v2601, %v2709
  %v2726 = vmul.f32 %v2603, %v2710
  %v2727 = vmul.f32 %v2605, %v2711
  %v2728 = vmul.f32 %v2607, %v2712
  %v2729 = vmul.f32 %v2609, %v2713
  %v2730 = vmul.f32 %v2611, %v2714
  %v2731 = vmul.f32 %v2613, %v2715
  %v2732 = vmul.f32 %v2615, %v2716
  %v2733 = vmul.f32 %v2617, %v2717
  %v2734 = vmul.f32 %v2619, %v2718
  %v2735 = vmul.f32 %v2621, %v2719
  %v2736 = vmul.f32 %v2623, %v2720
  %v2737 = vmul.f32 %v2625, %v2721
  %v2738 = vld [vmem:[%s11] sm:$0xf]
  %v2740 = vsel %vm2433, %v2722, 0
  %v2743 = vsel %vm2433, %v2723, 0
  %v2746 = vsel %vm2433, %v2724, 0
  %v2749 = vsel %vm2433, %v2725, 0
  %v2752 = vsel %vm2433, %v2726, 0
  %v2755 = vsel %vm2433, %v2727, 0
  %v2758 = vsel %vm2433, %v2728, 0
  %v2761 = vsel %vm2433, %v2729, 0
  %v2764 = vsel %vm2433, %v2730, 0
  %v2767 = vsel %vm2433, %v2731, 0
  %v2770 = vsel %vm2433, %v2732, 0
  %v2773 = vsel %vm2433, %v2733, 0
  %v2776 = vsel %vm2433, %v2734, 0
  %v2779 = vsel %vm2433, %v2735, 0
  %v2782 = vsel %vm2433, %v2736, 0
  %v2785 = vsel %vm2433, %v2737, 0
  %v2788 = vsel %vm2433, %v2738, 0
  %2790 = vmatprep.subr.mxu0 0.0
  %2791 = vmatpush1.xpose.msra.mxu0 0.0
  %2792 = vmatprep.subr.mxu0 0.0
  %2793 = vmatpush1.xpose.msra.mxu0 0.0
  %2794 = vmatprep.subr.mxu0 0.0
  %2795 = vmatpush1.xpose.msra.mxu0 0.0
  %2796 = vmatprep.subr.mxu0 0.0
  %2797 = vmatpush1.xpose.msra.mxu0 0.0
  %2798 = vmatprep.subr.mxu0 0.0
  %2799 = vmatpush1.xpose.msra.mxu0 0.0
  %2800 = vmatprep.subr.mxu0 0.0
  %2801 = vmatpush1.xpose.msra.mxu0 0.0
  %2802 = vmatprep.subr.mxu0 0.0
  %2803 = vmatpush1.xpose.msra.mxu0 0.0
  %2804 = vmatprep.subr.mxu0 0.0
  %2805 = vmatpush1.xpose.msra.mxu0 0.0
  %2806 = vmatprep.subr.mxu0 0.0
  %2807 = vmatpush1.xpose.msra.mxu0 0.0
  %2808 = vmatprep.subr.mxu0 0.0
  %2809 = vmatpush1.xpose.msra.mxu0 0.0
  %2810 = vmatprep.subr.mxu0 0.0
  %2811 = vmatpush1.xpose.msra.mxu0 0.0
  %2812 = vmatprep.subr.mxu0 0.0
  %2813 = vmatpush1.xpose.msra.mxu0 0.0
  %2814 = vmatprep.subr.mxu0 0.0
  %2815 = vmatpush1.xpose.msra.mxu0 0.0
  %2816 = vmatprep.subr.mxu0 0.0
  %2817 = vmatpush1.xpose.msra.mxu0 0.0
  %2818 = vmatprep.subr.mxu0 0.0
  %2819 = vmatpush1.xpose.msra.mxu0 0.0
  %2820 = vmatprep.subr.mxu0 0.0
  %2821 = vmatpush1.xpose.msra.mxu0 %v2788
  %2822 = vmatprep.subr.mxu0 0.0
  %2823 = vmatpush2.xpose.msra.mxu0 0.0
  %2824 = vmatprep.subr.mxu0 0.0
  %2825 = vmatpush2.xpose.msra.mxu0 0.0
  %2826 = vmatprep.subr.mxu0 0.0
  %2827 = vmatpush2.xpose.msra.mxu0 0.0
  %2828 = vmatprep.subr.mxu0 0.0
  %2829 = vmatpush2.xpose.msra.mxu0 0.0
  %2830 = vmatprep.subr.mxu0 0.0
  %2831 = vmatpush2.xpose.msra.mxu0 0.0
  %2832 = vmatprep.subr.mxu0 0.0
  %2833 = vmatpush2.xpose.msra.mxu0 0.0
  %2834 = vmatprep.subr.mxu0 0.0
  %2835 = vmatpush2.xpose.msra.mxu0 0.0
  %2836 = vmatprep.subr.mxu0 0.0
  %2837 = vmatpush2.xpose.msra.mxu0 0.0
  %2838 = vmatprep.subr.mxu0 0.0
  %2839 = vmatpush2.xpose.msra.mxu0 0.0
  %2840 = vmatprep.subr.mxu0 0.0
  %2841 = vmatpush2.xpose.msra.mxu0 0.0
  %2842 = vmatprep.subr.mxu0 0.0
  %2843 = vmatpush2.xpose.msra.mxu0 0.0
  %2844 = vmatprep.subr.mxu0 0.0
  %2845 = vmatpush2.xpose.msra.mxu0 0.0
  %2846 = vmatprep.subr.mxu0 0.0
  %2847 = vmatpush2.xpose.msra.mxu0 0.0
  %2848 = vmatprep.subr.mxu0 0.0
  %2849 = vmatpush2.xpose.msra.mxu0 0.0
  %2850 = vmatprep.subr.mxu0 0.0
  %2851 = vmatpush2.xpose.msra.mxu0 0.0
  %2852 = vmatprep.subr.mxu0 0.0
  %2853 = vmatpush2.xpose.msra.mxu0 0.0
  %2854 = vmatprep.mubr.f32.mxu0 0.0
  %2855 = vmatmul.mubr.f32.gmra.mxu0 %v2740
  %v2856 = vpop.f32.mrf.mxu0
  %v2857 = vadd.f32 0.0, %v2856
  %v2858 = vpop.f32.mrf.mxu0
  %2859 = vmatprep.mubr.f32.mxu0 0.0
  %2860 = vmatmul.mubr.f32.gmra.mxu0 %v2743
  %v2861 = vpop.f32.mrf.mxu0
  %v2862 = vadd.f32 0.0, %v2861
  %v2863 = vpop.f32.mrf.mxu0
  %2864 = vmatprep.mubr.f32.mxu0 0.0
  %2865 = vmatmul.mubr.f32.gmra.mxu0 %v2746
  %v2866 = vpop.f32.mrf.mxu0
  %v2867 = vadd.f32 0.0, %v2866
  %v2868 = vpop.f32.mrf.mxu0
  %2869 = vmatprep.mubr.f32.mxu0 0.0
  %2870 = vmatmul.mubr.f32.gmra.mxu0 %v2749
  %v2871 = vpop.f32.mrf.mxu0
  %v2872 = vadd.f32 0.0, %v2871
  %v2873 = vpop.f32.mrf.mxu0
  %2874 = vmatprep.mubr.f32.mxu0 0.0
  %2875 = vmatmul.mubr.f32.gmra.mxu0 %v2752
  %v2876 = vpop.f32.mrf.mxu0
  %v2877 = vadd.f32 0.0, %v2876
  %v2878 = vpop.f32.mrf.mxu0
  %2879 = vmatprep.mubr.f32.mxu0 0.0
  %2880 = vmatmul.mubr.f32.gmra.mxu0 %v2755
  %v2881 = vpop.f32.mrf.mxu0
  %v2882 = vadd.f32 0.0, %v2881
  %v2883 = vpop.f32.mrf.mxu0
  %2884 = vmatprep.mubr.f32.mxu0 0.0
  %2885 = vmatmul.mubr.f32.gmra.mxu0 %v2758
  %v2886 = vpop.f32.mrf.mxu0
  %v2887 = vadd.f32 0.0, %v2886
  %v2888 = vpop.f32.mrf.mxu0
  %2889 = vmatprep.mubr.f32.mxu0 0.0
  %2890 = vmatmul.mubr.f32.gmra.mxu0 %v2761
  %v2891 = vpop.f32.mrf.mxu0
  %v2892 = vadd.f32 0.0, %v2891
  %v2893 = vpop.f32.mrf.mxu0
  %2894 = vmatprep.mubr.f32.mxu0 0.0
  %2895 = vmatmul.mubr.f32.gmra.mxu0 %v2764
  %v2896 = vpop.f32.mrf.mxu0
  %v2897 = vadd.f32 0.0, %v2896
  %v2898 = vpop.f32.mrf.mxu0
  %2899 = vmatprep.mubr.f32.mxu0 0.0
  %2900 = vmatmul.mubr.f32.gmra.mxu0 %v2767
  %v2901 = vpop.f32.mrf.mxu0
  %v2902 = vadd.f32 0.0, %v2901
  %v2903 = vpop.f32.mrf.mxu0
  %2904 = vmatprep.mubr.f32.mxu0 0.0
  %2905 = vmatmul.mubr.f32.gmra.mxu0 %v2770
  %v2906 = vpop.f32.mrf.mxu0
  %v2907 = vadd.f32 0.0, %v2906
  %v2908 = vpop.f32.mrf.mxu0
  %2909 = vmatprep.mubr.f32.mxu0 0.0
  %2910 = vmatmul.mubr.f32.gmra.mxu0 %v2773
  %v2911 = vpop.f32.mrf.mxu0
  %v2912 = vadd.f32 0.0, %v2911
  %v2913 = vpop.f32.mrf.mxu0
  %2914 = vmatprep.mubr.f32.mxu0 0.0
  %2915 = vmatmul.mubr.f32.gmra.mxu0 %v2776
  %v2916 = vpop.f32.mrf.mxu0
  %v2917 = vadd.f32 0.0, %v2916
  %v2918 = vpop.f32.mrf.mxu0
  %2919 = vmatprep.mubr.f32.mxu0 0.0
  %2920 = vmatmul.mubr.f32.gmra.mxu0 %v2779
  %v2921 = vpop.f32.mrf.mxu0
  %v2922 = vadd.f32 0.0, %v2921
  %v2923 = vpop.f32.mrf.mxu0
  %2924 = vmatprep.mubr.f32.mxu0 0.0
  %2925 = vmatmul.mubr.f32.gmra.mxu0 %v2782
  %v2926 = vpop.f32.mrf.mxu0
  %v2927 = vadd.f32 0.0, %v2926
  %v2928 = vpop.f32.mrf.mxu0
  %2929 = vmatprep.mubr.f32.mxu0 0.0
  %2930 = vmatmul.mubr.f32.gmra.mxu0 %v2785
  %v2931 = vpop.f32.mrf.mxu0
  %v2932 = vadd.f32 0.0, %v2931
  %v2933 = vpop.f32.mrf.mxu0
  %2934 = vdwg.mxu0
  %v2935 = vmul.f32 %v2722, %v2722
  %v2936 = vmul.f32 %v2723, %v2723
  %v2937 = vmul.f32 %v2724, %v2724
  %v2938 = vmul.f32 %v2725, %v2725
  %v2939 = vmul.f32 %v2726, %v2726
  %v2940 = vmul.f32 %v2727, %v2727
  %v2941 = vmul.f32 %v2728, %v2728
  %v2942 = vmul.f32 %v2729, %v2729
  %v2943 = vmul.f32 %v2730, %v2730
  %v2944 = vmul.f32 %v2731, %v2731
  %v2945 = vmul.f32 %v2732, %v2732
  %v2946 = vmul.f32 %v2733, %v2733
  %v2947 = vmul.f32 %v2734, %v2734
  %v2948 = vmul.f32 %v2735, %v2735
  %v2949 = vmul.f32 %v2736, %v2736
  %v2950 = vmul.f32 %v2737, %v2737
  %v2951 = vsel %vm2433, %v2935, 0.0
  %2952 = vadd.xlane.f32.xlu0 %v2951
  %v2953 = vpop.xlane.xlu0 %2952
  %v2954 = vsel %vm2433, %v2936, 0.0
  %2955 = vadd.xlane.f32.xlu0 %v2954
  %v2956 = vpop.xlane.xlu0 %2955
  %v2957 = vsel %vm2433, %v2937, 0.0
  %2958 = vadd.xlane.f32.xlu0 %v2957
  %v2959 = vpop.xlane.xlu0 %2958
  %v2960 = vsel %vm2433, %v2938, 0.0
  %2961 = vadd.xlane.f32.xlu0 %v2960
  %v2962 = vpop.xlane.xlu0 %2961
  %v2963 = vsel %vm2433, %v2939, 0.0
  %2964 = vadd.xlane.f32.xlu0 %v2963
  %v2965 = vpop.xlane.xlu0 %2964
  %v2966 = vsel %vm2433, %v2940, 0.0
  %2967 = vadd.xlane.f32.xlu0 %v2966
  %v2968 = vpop.xlane.xlu0 %2967
  %v2969 = vsel %vm2433, %v2941, 0.0
  %2970 = vadd.xlane.f32.xlu0 %v2969
  %v2971 = vpop.xlane.xlu0 %2970
  %v2972 = vsel %vm2433, %v2942, 0.0
  %2973 = vadd.xlane.f32.xlu0 %v2972
  %v2974 = vpop.xlane.xlu0 %2973
  %v2975 = vsel %vm2433, %v2943, 0.0
  %2976 = vadd.xlane.f32.xlu0 %v2975
  %v2977 = vpop.xlane.xlu0 %2976
  %v2978 = vsel %vm2433, %v2944, 0.0
  %2979 = vadd.xlane.f32.xlu0 %v2978
  %v2980 = vpop.xlane.xlu0 %2979
  %v2981 = vsel %vm2433, %v2945, 0.0
  %2982 = vadd.xlane.f32.xlu0 %v2981
  %v2983 = vpop.xlane.xlu0 %2982
  %v2984 = vsel %vm2433, %v2946, 0.0
  %2985 = vadd.xlane.f32.xlu0 %v2984
  %v2986 = vpop.xlane.xlu0 %2985
  %v2987 = vsel %vm2433, %v2947, 0.0
  %2988 = vadd.xlane.f32.xlu0 %v2987
  %v2989 = vpop.xlane.xlu0 %2988
  %v2990 = vsel %vm2433, %v2948, 0.0
  %2991 = vadd.xlane.f32.xlu0 %v2990
  %v2992 = vpop.xlane.xlu0 %2991
  %v2993 = vsel %vm2433, %v2949, 0.0
  %2994 = vadd.xlane.f32.xlu0 %v2993
  %v2995 = vpop.xlane.xlu0 %2994
  %v2996 = vsel %vm2433, %v2950, 0.0
  %2997 = vadd.xlane.f32.xlu0 %v2996
  %v2998 = vpop.xlane.xlu0 %2997
  %v2999 = vmul.f32 %v2857, 2.0
  %v3000 = vmul.f32 %v2862, 2.0
  %v3001 = vmul.f32 %v2867, 2.0
  %v3002 = vmul.f32 %v2872, 2.0
  %v3003 = vmul.f32 %v2877, 2.0
  %v3004 = vmul.f32 %v2882, 2.0
  %v3005 = vmul.f32 %v2887, 2.0
  %v3006 = vmul.f32 %v2892, 2.0
  %v3007 = vmul.f32 %v2897, 2.0
  %v3008 = vmul.f32 %v2902, 2.0
  %v3009 = vmul.f32 %v2907, 2.0
  %v3010 = vmul.f32 %v2912, 2.0
  %v3011 = vmul.f32 %v2917, 2.0
  %v3012 = vmul.f32 %v2922, 2.0
  %v3013 = vmul.f32 %v2927, 2.0
  %v3014 = vmul.f32 %v2932, 2.0
  %v3015 = vsub.f32 %v2953, %v2999
  %v3016 = vsub.f32 %v2956, %v3000
  %v3017 = vsub.f32 %v2959, %v3001
  %v3018 = vsub.f32 %v2962, %v3002
  %v3019 = vsub.f32 %v2965, %v3003
  %v3020 = vsub.f32 %v2968, %v3004
  %v3021 = vsub.f32 %v2971, %v3005
  %v3022 = vsub.f32 %v2974, %v3006
  %v3023 = vsub.f32 %v2977, %v3007
  %v3024 = vsub.f32 %v2980, %v3008
  %v3025 = vsub.f32 %v2983, %v3009
  %v3026 = vsub.f32 %v2986, %v3010
  %v3027 = vsub.f32 %v2989, %v3011
  %v3028 = vsub.f32 %v2992, %v3012
  %v3029 = vsub.f32 %v2995, %v3013
  %v3030 = vsub.f32 %v2998, %v3014
  %v3031 = vld [vmem:[%s12] sm:$0x1]
  %v3033 = vlaneseq
  %v3034 = vshrl.u32 %v3033, 7
  %v3035 = vsub.s32 0, %v3034
  %v3036 = vrot.slane %v3031, %v3035
  %v3038 = vadd.f32 %v3015, %v3036
  %v3039 = vadd.f32 %v3016, %v3036
  %v3040 = vadd.f32 %v3017, %v3036
  %v3041 = vadd.f32 %v3018, %v3036
  %v3042 = vadd.f32 %v3019, %v3036
  %v3043 = vadd.f32 %v3020, %v3036
  %v3044 = vadd.f32 %v3021, %v3036
  %v3045 = vadd.f32 %v3022, %v3036
  %v3046 = vadd.f32 %v3023, %v3036
  %v3047 = vadd.f32 %v3024, %v3036
  %v3048 = vadd.f32 %v3025, %v3036
  %v3049 = vadd.f32 %v3026, %v3036
  %v3050 = vadd.f32 %v3027, %v3036
  %v3051 = vadd.f32 %v3028, %v3036
  %v3052 = vadd.f32 %v3029, %v3036
  %v3053 = vadd.f32 %v3030, %v3036
  %v3054 = vmax.f32 %v3038, 0.0
  %v3055 = vmax.f32 %v3039, 0.0
  %v3056 = vmax.f32 %v3040, 0.0
  %v3057 = vmax.f32 %v3041, 0.0
  %v3058 = vmax.f32 %v3042, 0.0
  %v3059 = vmax.f32 %v3043, 0.0
  %v3060 = vmax.f32 %v3044, 0.0
  %v3061 = vmax.f32 %v3045, 0.0
  %v3062 = vmax.f32 %v3046, 0.0
  %v3063 = vmax.f32 %v3047, 0.0
  %v3064 = vmax.f32 %v3048, 0.0
  %v3065 = vmax.f32 %v3049, 0.0
  %v3066 = vmax.f32 %v3050, 0.0
  %v3067 = vmax.f32 %v3051, 0.0
  %v3068 = vmax.f32 %v3052, 0.0
  %v3069 = vmax.f32 %v3053, 0.0
  %v3070 = vadd.f32 %v3054, 1.0
  %v3071 = vadd.f32 %v3055, 1.0
  %v3072 = vadd.f32 %v3056, 1.0
  %v3073 = vadd.f32 %v3057, 1.0
  %v3074 = vadd.f32 %v3058, 1.0
  %v3075 = vadd.f32 %v3059, 1.0
  %v3076 = vadd.f32 %v3060, 1.0
  %v3077 = vadd.f32 %v3061, 1.0
  %v3078 = vadd.f32 %v3062, 1.0
  %v3079 = vadd.f32 %v3063, 1.0
  %v3080 = vadd.f32 %v3064, 1.0
  %v3081 = vadd.f32 %v3065, 1.0
  %v3082 = vadd.f32 %v3066, 1.0
  %v3083 = vadd.f32 %v3067, 1.0
  %v3084 = vadd.f32 %v3068, 1.0
  %v3085 = vadd.f32 %v3069, 1.0
  %v3086 = vrcp.pop %v3070
  %v3087 = vmul.f32 1.0, %v3086
  %v3088 = vrcp.pop %v3071
  %v3089 = vmul.f32 1.0, %v3088
  %v3090 = vrcp.pop %v3072
  %v3091 = vmul.f32 1.0, %v3090
  %v3092 = vrcp.pop %v3073
  %v3093 = vmul.f32 1.0, %v3092
  %v3094 = vrcp.pop %v3074
  %v3095 = vmul.f32 1.0, %v3094
  %v3096 = vrcp.pop %v3075
  %v3097 = vmul.f32 1.0, %v3096
  %v3098 = vrcp.pop %v3076
  %v3099 = vmul.f32 1.0, %v3098
  %v3100 = vrcp.pop %v3077
  %v3101 = vmul.f32 1.0, %v3100
  %v3102 = vrcp.pop %v3078
  %v3103 = vmul.f32 1.0, %v3102
  %v3104 = vrcp.pop %v3079
  %v3105 = vmul.f32 1.0, %v3104
  %v3106 = vrcp.pop %v3080
  %v3107 = vmul.f32 1.0, %v3106
  %v3108 = vrcp.pop %v3081
  %v3109 = vmul.f32 1.0, %v3108
  %v3110 = vrcp.pop %v3082
  %v3111 = vmul.f32 1.0, %v3110
  %v3112 = vrcp.pop %v3083
  %v3113 = vmul.f32 1.0, %v3112
  %v3114 = vrcp.pop %v3084
  %v3115 = vmul.f32 1.0, %v3114
  %v3116 = vrcp.pop %v3085
  %v3117 = vmul.f32 1.0, %v3116
  %vm3118 = vcmask 31744
  %v3119 = vsel %vm3118, %v3087, 0.0
  %3120 = vadd.xlane.f32.xlu0 %v3119
  %v3121 = vpop.xlane.xlu0 %3120
  %v3122 = vsel %vm3118, %v3089, 0.0
  %3123 = vadd.xlane.f32.xlu0 %v3122
  %v3124 = vpop.xlane.xlu0 %3123
  %v3125 = vsel %vm3118, %v3091, 0.0
  %3126 = vadd.xlane.f32.xlu0 %v3125
  %v3127 = vpop.xlane.xlu0 %3126
  %v3128 = vsel %vm3118, %v3093, 0.0
  %3129 = vadd.xlane.f32.xlu0 %v3128
  %v3130 = vpop.xlane.xlu0 %3129
  %v3131 = vsel %vm3118, %v3095, 0.0
  %3132 = vadd.xlane.f32.xlu0 %v3131
  %v3133 = vpop.xlane.xlu0 %3132
  %v3134 = vsel %vm3118, %v3097, 0.0
  %3135 = vadd.xlane.f32.xlu0 %v3134
  %v3136 = vpop.xlane.xlu0 %3135
  %v3137 = vsel %vm3118, %v3099, 0.0
  %3138 = vadd.xlane.f32.xlu0 %v3137
  %v3139 = vpop.xlane.xlu0 %3138
  %v3140 = vsel %vm3118, %v3101, 0.0
  %3141 = vadd.xlane.f32.xlu0 %v3140
  %v3142 = vpop.xlane.xlu0 %3141
  %v3143 = vsel %vm3118, %v3103, 0.0
  %3144 = vadd.xlane.f32.xlu0 %v3143
  %v3145 = vpop.xlane.xlu0 %3144
  %v3146 = vsel %vm3118, %v3105, 0.0
  %3147 = vadd.xlane.f32.xlu0 %v3146
  %v3148 = vpop.xlane.xlu0 %3147
  %v3149 = vsel %vm3118, %v3107, 0.0
  %3150 = vadd.xlane.f32.xlu0 %v3149
  %v3151 = vpop.xlane.xlu0 %3150
  %v3152 = vsel %vm3118, %v3109, 0.0
  %3153 = vadd.xlane.f32.xlu0 %v3152
  %v3154 = vpop.xlane.xlu0 %3153
  %v3155 = vsel %vm3118, %v3111, 0.0
  %3156 = vadd.xlane.f32.xlu0 %v3155
  %v3157 = vpop.xlane.xlu0 %3156
  %v3158 = vsel %vm3118, %v3113, 0.0
  %3159 = vadd.xlane.f32.xlu0 %v3158
  %v3160 = vpop.xlane.xlu0 %3159
  %v3161 = vsel %vm3118, %v3115, 0.0
  %3162 = vadd.xlane.f32.xlu0 %v3161
  %v3163 = vpop.xlane.xlu0 %3162
  %v3164 = vsel %vm3118, %v3117, 0.0
  %3165 = vadd.xlane.f32.xlu0 %v3164
  %v3166 = vpop.xlane.xlu0 %3165
  %v3167 = vrcp.pop %v3121
  %v3168 = vmul.f32 %v3087, %v3167
  %v3169 = vrcp.pop %v3124
  %v3170 = vmul.f32 %v3089, %v3169
  %v3171 = vrcp.pop %v3127
  %v3172 = vmul.f32 %v3091, %v3171
  %v3173 = vrcp.pop %v3130
  %v3174 = vmul.f32 %v3093, %v3173
  %v3175 = vrcp.pop %v3133
  %v3176 = vmul.f32 %v3095, %v3175
  %v3177 = vrcp.pop %v3136
  %v3178 = vmul.f32 %v3097, %v3177
  %v3179 = vrcp.pop %v3139
  %v3180 = vmul.f32 %v3099, %v3179
  %v3181 = vrcp.pop %v3142
  %v3182 = vmul.f32 %v3101, %v3181
  %v3183 = vrcp.pop %v3145
  %v3184 = vmul.f32 %v3103, %v3183
  %v3185 = vrcp.pop %v3148
  %v3186 = vmul.f32 %v3105, %v3185
  %v3187 = vrcp.pop %v3151
  %v3188 = vmul.f32 %v3107, %v3187
  %v3189 = vrcp.pop %v3154
  %v3190 = vmul.f32 %v3109, %v3189
  %v3191 = vrcp.pop %v3157
  %v3192 = vmul.f32 %v3111, %v3191
  %v3193 = vrcp.pop %v3160
  %v3194 = vmul.f32 %v3113, %v3193
  %v3195 = vrcp.pop %v3163
  %v3196 = vmul.f32 %v3115, %v3195
  %v3197 = vrcp.pop %v3166
  %v3198 = vmul.f32 %v3117, %v3197
  %3199 = vst [vmem:[%s14] sm:$0xff] 0.0
  %3200 = vst [vmem:[%s14 + $0x8] sm:$0xff] 0.0
  %3201 = vst [vmem:[%s14 + $0x10] sm:$0xff] 0.0
  %3202 = vst [vmem:[%s14 + $0x18] sm:$0xff] 0.0
  %3203 = vst [vmem:[%s14 + $0x20] sm:$0xff] 0.0
  %3204 = vst [vmem:[%s14 + $0x28] sm:$0xff] 0.0
  %3205 = vst [vmem:[%s14 + $0x30] sm:$0xff] 0.0
  %3206 = vst [vmem:[%s14 + $0x38] sm:$0xff] 0.0
  %3207 = vst [vmem:[%s14 + $0x40] sm:$0xff] 0.0
  %3208 = vst [vmem:[%s14 + $0x48] sm:$0xff] 0.0
  %3209 = vst [vmem:[%s14 + $0x50] sm:$0xff] 0.0
  %3210 = vst [vmem:[%s14 + $0x58] sm:$0xff] 0.0
  %3211 = vst [vmem:[%s14 + $0x60] sm:$0xff] 0.0
  %3212 = vst [vmem:[%s14 + $0x68] sm:$0xff] 0.0
  %3213 = vst [vmem:[%s14 + $0x70] sm:$0xff] 0.0
  %3214 = vst [vmem:[%s14 + $0x78] sm:$0xff] 0.0
  %3215 = vst [vmem:[%s14 + $0x80] sm:$0xff] 0.0
  %3216 = vst [vmem:[%s14 + $0x88] sm:$0xff] 0.0
  %3217 = vst [vmem:[%s14 + $0x90] sm:$0xff] 0.0
  %3218 = vst [vmem:[%s14 + $0x98] sm:$0xff] 0.0
  %3219 = vst [vmem:[%s14 + $0xa0] sm:$0xff] 0.0
  %3220 = vst [vmem:[%s14 + $0xa8] sm:$0xff] 0.0
  %3221 = vst [vmem:[%s14 + $0xb0] sm:$0xff] 0.0
  %3222 = vst [vmem:[%s14 + $0xb8] sm:$0xff] 0.0
  %3223 = vst [vmem:[%s14 + $0xc0] sm:$0xff] 0.0
  %3224 = vst [vmem:[%s14 + $0xc8] sm:$0xff] 0.0
  %3225 = vst [vmem:[%s14 + $0xd0] sm:$0xff] 0.0
  %3226 = vst [vmem:[%s14 + $0xd8] sm:$0xff] 0.0
  %3227 = vst [vmem:[%s14 + $0xe0] sm:$0xff] 0.0
  %3228 = vst [vmem:[%s14 + $0xe8] sm:$0xff] 0.0
  %3229 = vst [vmem:[%s14 + $0xf0] sm:$0xff] 0.0
  %3230 = vst [vmem:[%s14 + $0xf8] sm:$0xff] 0.0
  %3231 = vst [vmem:[%s14 + $0x100] sm:$0xff] 0.0
  %3232 = vst [vmem:[%s14 + $0x108] sm:$0xff] 0.0
  %3233 = vst [vmem:[%s14 + $0x110] sm:$0xff] 0.0
  %3234 = vst [vmem:[%s14 + $0x118] sm:$0xff] 0.0
  %3235 = vst [vmem:[%s14 + $0x120] sm:$0xff] 0.0
  %3236 = vst [vmem:[%s14 + $0x128] sm:$0xff] 0.0
  %3237 = vst [vmem:[%s14 + $0x130] sm:$0xff] 0.0
  %3238 = vst [vmem:[%s14 + $0x138] sm:$0xff] 0.0
  %3239 = vst [vmem:[%s14 + $0x140] sm:$0xff] 0.0
  %3240 = vst [vmem:[%s14 + $0x148] sm:$0xff] 0.0
  %3241 = vst [vmem:[%s14 + $0x150] sm:$0xff] 0.0
  %3242 = vst [vmem:[%s14 + $0x158] sm:$0xff] 0.0
  %3243 = vst [vmem:[%s14 + $0x160] sm:$0xff] 0.0
  %3244 = vst [vmem:[%s14 + $0x168] sm:$0xff] 0.0
  %3245 = vst [vmem:[%s14 + $0x170] sm:$0xff] 0.0
  %3246 = vst [vmem:[%s14 + $0x178] sm:$0xff] 0.0
  %3247 = vst [vmem:[%s14 + $0x180] sm:$0xff] 0.0
  %3248 = vst [vmem:[%s14 + $0x188] sm:$0xff] 0.0
  %3249 = vst [vmem:[%s14 + $0x190] sm:$0xff] 0.0
  %3250 = vst [vmem:[%s14 + $0x198] sm:$0xff] 0.0
  %3251 = vst [vmem:[%s14 + $0x1a0] sm:$0xff] 0.0
  %3252 = vst [vmem:[%s14 + $0x1a8] sm:$0xff] 0.0
  %3253 = vst [vmem:[%s14 + $0x1b0] sm:$0xff] 0.0
  %3254 = vst [vmem:[%s14 + $0x1b8] sm:$0xff] 0.0
  %3255 = vst [vmem:[%s14 + $0x1c0] sm:$0xff] 0.0
  %3256 = vst [vmem:[%s14 + $0x1c8] sm:$0xff] 0.0
  %3257 = vst [vmem:[%s14 + $0x1d0] sm:$0xff] 0.0
  %3258 = vst [vmem:[%s14 + $0x1d8] sm:$0xff] 0.0
  %3259 = vst [vmem:[%s14 + $0x1e0] sm:$0xff] 0.0
  %3260 = vst [vmem:[%s14 + $0x1e8] sm:$0xff] 0.0
  %3261 = vst [vmem:[%s14 + $0x1f0] sm:$0xff] 0.0
  %3262 = vst [vmem:[%s14 + $0x1f8] sm:$0xff] 0.0
  %3263 = vst.msk [vmem:[%s14] sm:$0xff] %vm1206, %v1958
  %3264 = vst.msk [vmem:[%s14 + $0x20] sm:$0xff] %vm1206, %v1959
  %3265 = vst.msk [vmem:[%s14 + $0x40] sm:$0xff] %vm1206, %v1960
  %3266 = vst.msk [vmem:[%s14 + $0x60] sm:$0xff] %vm1206, %v1961
  %3267 = vst.msk [vmem:[%s14 + $0x80] sm:$0xff] %vm1206, %v1962
  %3268 = vst.msk [vmem:[%s14 + $0xa0] sm:$0xff] %vm1206, %v1963
  %3269 = vst.msk [vmem:[%s14 + $0xc0] sm:$0xff] %vm1206, %v1964
  %3270 = vst.msk [vmem:[%s14 + $0xe0] sm:$0xff] %vm1206, %v1965
  %3271 = vst.msk [vmem:[%s14 + $0x100] sm:$0xff] %vm1206, %v1966
  %3272 = vst.msk [vmem:[%s14 + $0x120] sm:$0xff] %vm1206, %v1967
  %3273 = vst.msk [vmem:[%s14 + $0x140] sm:$0xff] %vm1206, %v1968
  %3274 = vst.msk [vmem:[%s14 + $0x160] sm:$0xff] %vm1206, %v1969
  %3275 = vst.msk [vmem:[%s14 + $0x180] sm:$0xff] %vm1206, %v1970
  %3276 = vst.msk [vmem:[%s14 + $0x1a0] sm:$0xff] %vm1206, %v1971
  %3277 = vst.msk [vmem:[%s14 + $0x1c0] sm:$0xff] %vm1206, %v1972
  %3278 = vst.msk [vmem:[%s14 + $0x1e0] sm:$0xff] %vm1206, %v1973
  %3279 = vst.msk [vmem:[%s14 + $0x8] sm:$0xff] %vm2433, %v2355
  %3280 = vst.msk [vmem:[%s14 + $0x28] sm:$0xff] %vm2433, %v2360
  %3281 = vst.msk [vmem:[%s14 + $0x48] sm:$0xff] %vm2433, %v2365
  %3282 = vst.msk [vmem:[%s14 + $0x68] sm:$0xff] %vm2433, %v2370
  %3283 = vst.msk [vmem:[%s14 + $0x88] sm:$0xff] %vm2433, %v2375
  %3284 = vst.msk [vmem:[%s14 + $0xa8] sm:$0xff] %vm2433, %v2380
  %3285 = vst.msk [vmem:[%s14 + $0xc8] sm:$0xff] %vm2433, %v2385
  %3286 = vst.msk [vmem:[%s14 + $0xe8] sm:$0xff] %vm2433, %v2390
  %3287 = vst.msk [vmem:[%s14 + $0x108] sm:$0xff] %vm2433, %v2395
  %3288 = vst.msk [vmem:[%s14 + $0x128] sm:$0xff] %vm2433, %v2400
  %3289 = vst.msk [vmem:[%s14 + $0x148] sm:$0xff] %vm2433, %v2405
  %3290 = vst.msk [vmem:[%s14 + $0x168] sm:$0xff] %vm2433, %v2410
  %3291 = vst.msk [vmem:[%s14 + $0x188] sm:$0xff] %vm2433, %v2415
  %3292 = vst.msk [vmem:[%s14 + $0x1a8] sm:$0xff] %vm2433, %v2420
  %3293 = vst.msk [vmem:[%s14 + $0x1c8] sm:$0xff] %vm2433, %v2425
  %3294 = vst.msk [vmem:[%s14 + $0x1e8] sm:$0xff] %vm2433, %v2430
  %3295 = vst.msk [vmem:[%s14 + $0x10] sm:$0xff] %vm2433, %v2722
  %3296 = vst.msk [vmem:[%s14 + $0x30] sm:$0xff] %vm2433, %v2723
  %3297 = vst.msk [vmem:[%s14 + $0x50] sm:$0xff] %vm2433, %v2724
  %3298 = vst.msk [vmem:[%s14 + $0x70] sm:$0xff] %vm2433, %v2725
  %3299 = vst.msk [vmem:[%s14 + $0x90] sm:$0xff] %vm2433, %v2726
  %3300 = vst.msk [vmem:[%s14 + $0xb0] sm:$0xff] %vm2433, %v2727
  %3301 = vst.msk [vmem:[%s14 + $0xd0] sm:$0xff] %vm2433, %v2728
  %3302 = vst.msk [vmem:[%s14 + $0xf0] sm:$0xff] %vm2433, %v2729
  %3303 = vst.msk [vmem:[%s14 + $0x110] sm:$0xff] %vm2433, %v2730
  %3304 = vst.msk [vmem:[%s14 + $0x130] sm:$0xff] %vm2433, %v2731
  %3305 = vst.msk [vmem:[%s14 + $0x150] sm:$0xff] %vm2433, %v2732
  %3306 = vst.msk [vmem:[%s14 + $0x170] sm:$0xff] %vm2433, %v2733
  %3307 = vst.msk [vmem:[%s14 + $0x190] sm:$0xff] %vm2433, %v2734
  %3308 = vst.msk [vmem:[%s14 + $0x1b0] sm:$0xff] %vm2433, %v2735
  %3309 = vst.msk [vmem:[%s14 + $0x1d0] sm:$0xff] %vm2433, %v2736
  %3310 = vst.msk [vmem:[%s14 + $0x1f0] sm:$0xff] %vm2433, %v2737
  %3311 = vst.msk [vmem:[%s14 + $0x18] sm:$0xff] %vm3118, %v3168
  %3312 = vst.msk [vmem:[%s14 + $0x38] sm:$0xff] %vm3118, %v3170
  %3313 = vst.msk [vmem:[%s14 + $0x58] sm:$0xff] %vm3118, %v3172
  %3314 = vst.msk [vmem:[%s14 + $0x78] sm:$0xff] %vm3118, %v3174
  %3315 = vst.msk [vmem:[%s14 + $0x98] sm:$0xff] %vm3118, %v3176
  %3316 = vst.msk [vmem:[%s14 + $0xb8] sm:$0xff] %vm3118, %v3178
  %3317 = vst.msk [vmem:[%s14 + $0xd8] sm:$0xff] %vm3118, %v3180
  %3318 = vst.msk [vmem:[%s14 + $0xf8] sm:$0xff] %vm3118, %v3182
  %3319 = vst.msk [vmem:[%s14 + $0x118] sm:$0xff] %vm3118, %v3184
  %3320 = vst.msk [vmem:[%s14 + $0x138] sm:$0xff] %vm3118, %v3186
  %3321 = vst.msk [vmem:[%s14 + $0x158] sm:$0xff] %vm3118, %v3188
  %3322 = vst.msk [vmem:[%s14 + $0x178] sm:$0xff] %vm3118, %v3190
  %3323 = vst.msk [vmem:[%s14 + $0x198] sm:$0xff] %vm3118, %v3192
  %3324 = vst.msk [vmem:[%s14 + $0x1b8] sm:$0xff] %vm3118, %v3194
  %3325 = vst.msk [vmem:[%s14 + $0x1d8] sm:$0xff] %vm3118, %v3196
  %3326 = vst.msk [vmem:[%s14 + $0x1f8] sm:$0xff] %vm3118, %v3198
  // Predicated region
  $region54: #{stagam_forward.1} parent=0 // pred_check
    _
  $region55: #{stagam_forward.1} parent=0 // pred_check_branch
    %3328 = sbr.rel (0) target = $region57
  $region56: #{stagam_forward.1} parent=0 // pred_region
    _
  $region57: #{stagam_forward.1} parent=0 // pred_fallthru
    _
  // Predicated region
  $region58: #{stagam_forward.1} parent=0 // pred_check
    _
  $region59: #{stagam_forward.1} parent=0 // pred_check_branch
    %3330 = sbr.rel (0) target = $region61
  $region60: #{stagam_forward.1} parent=0 // pred_region
    _
  $region61: #{stagam_forward.1} parent=0 // pred_fallthru
    _
  // Predicated region
  $region62: #{stagam_forward.1} parent=0 // pred_check
    _
  $region63: #{stagam_forward.1} parent=0 // pred_check_branch
    %3332 = sbr.rel (0) target = $region65
  $region64: #{stagam_forward.1} parent=0 // pred_region
    _
  $region65: #{stagam_forward.1} parent=0 // pred_fallthru
    _
  // Predicated region
  $region66: #{stagam_forward.1} parent=0 // pred_check
    _
  $region67: #{stagam_forward.1} parent=0 // pred_check_branch
    %3334 = sbr.rel (0) target = $region69
  $region68: #{stagam_forward.1} parent=0 // pred_region
    _
  $region69: #{stagam_forward.1} parent=0 // pred_fallthru
    _

</llo_original>
